<compile_context>
chip_gen: v5e
topology: v5e:2x2
jax: 0.10.0
libtpu: 0.0.40
codegen_flags: <defaults>
</compile_context>

<pallas_src>
import functools
import math

import jax
import jax.numpy as jnp
from jax.experimental import pallas as pl
from jax.experimental.pallas import tpu as pltpu


# ----------------------------------------------------------------------------
# Fused kernel: all LSTM layers + FC + softmax(time) in one call.
# ----------------------------------------------------------------------------
def _fused_lstm_classifier_kernel(num_layers, T, x_ref, *refs):
    n = num_layers
    wfc_ref = refs[3 * n + 0]      # (H, O)
    bfc_ref = refs[3 * n + 1]      # (1, O)
    out_ref = refs[3 * n + 2]      # (T, B, O)
    xg_sc = refs[3 * n + 3]        # (4, T, B, H)  hoisted input projections
    hseq_sc = refs[3 * n + 4]      # (T, B, H)     current layer's output seq

    _, B, D0 = x_ref.shape
    H = hseq_sc.shape[-1]

    for l in range(n):             # num_layers is static -> plain Python loop
        wih_ref = refs[3 * l + 0]  # (4, D_in, H)  per-gate W_ih^T
        whh_ref = refs[3 * l + 1]  # (4, H, H)     per-gate W_hh^T
        b_ref = refs[3 * l + 2]    # (4, 1, H)     per-gate (b_ih + b_hh)

        # --- hoisted input projection for ALL timesteps (off the serial path)
        if l == 0:
            xin = x_ref[...].reshape(T * B, D0)        # (T*B, D_in)
        else:
            xin = hseq_sc[...].reshape(T * B, H)       # previous layer output
        for g in range(4):
            xg = jnp.dot(xin, wih_ref[g],
                         preferred_element_type=jnp.float32) + b_ref[g]
            xg_sc[g] = xg.reshape(T, B, H)

        # --- recurrent weights loaded once, outside the unrolled time loop
        whh_g = [whh_ref[g] for g in range(4)]

        def step(t, carry):
            h, c = carry
            # The four recurrent matmuls are mutually independent -> they
            # pipeline back-to-back through the MXU; only h_new -> next step
            # is serial.
            i_g = jax.nn.sigmoid(
                xg_sc[0, t] + jnp.dot(h, whh_g[0],
                                      preferred_element_type=jnp.float32))
            f_g = jax.nn.sigmoid(
                xg_sc[1, t] + jnp.dot(h, whh_g[1],
                                      preferred_element_type=jnp.float32))
            g_g = jnp.tanh(
                xg_sc[2, t] + jnp.dot(h, whh_g[2],
                                      preferred_element_type=jnp.float32))
            o_g = jax.nn.sigmoid(
                xg_sc[3, t] + jnp.dot(h, whh_g[3],
                                      preferred_element_type=jnp.float32))
            c_new = f_g * c + i_g * g_g
            h_new = o_g * jnp.tanh(c_new)
            hseq_sc[t] = h_new                          # VMEM-resident output
            return h_new, c_new

        h0 = jnp.zeros((B, H), jnp.float32)
        c0 = jnp.zeros((B, H), jnp.float32)
        jax.lax.fori_loop(0, T, step, (h0, c0), unroll=True)

    # --- Linear over every timestep + softmax over the TIME axis (torch dim=1)
    hall = hseq_sc[...].reshape(T * B, H)
    logits = jnp.dot(hall, wfc_ref[...],
                     preferred_element_type=jnp.float32) + bfc_ref[...]
    logits = logits.reshape(T, B, -1)                   # (T, B, O)
    m = jnp.max(logits, axis=0, keepdims=True)          # reduce over time
    e = jnp.exp(logits - m)
    inv_denom = 1.0 / jnp.sum(e, axis=0, keepdims=True)
    out_ref[...] = (e * inv_denom).astype(out_ref.dtype)


# ----------------------------------------------------------------------------
# Wrapper: weight prep (per-gate split, transposed) + single pallas_call.
# The whole thing is jitted so layout transposes + kernel launch fuse into one
# executable / one host dispatch.
# ----------------------------------------------------------------------------
@jax.jit
def lstm_classifier_forward(x, lstm_params, w_fc, b_fc):
    B, T, D = x.shape
    H = lstm_params[0][1].shape[1]
    O = w_fc.shape[0]
    n = len(lstm_params)

    # Time-major input so the per-timestep index is a leading-axis index.
    x_t = jnp.transpose(x, (1, 0, 2))                    # (T, B, D)

    inputs = [x_t]
    for (w_ih, w_hh, b_ih, b_hh) in lstm_params:
        d_in = w_ih.shape[1]
        wih_s = jnp.transpose(w_ih.reshape(4, H, d_in), (0, 2, 1))  # (4,d_in,H)
        whh_s = jnp.transpose(w_hh.reshape(4, H, H), (0, 2, 1))     # (4,H,H)
        b_s = (b_ih + b_hh).reshape(4, 1, H)                         # (4,1,H)
        inputs += [wih_s, whh_s, b_s]
    inputs += [jnp.transpose(w_fc), b_fc.reshape(1, O)]  # (H,O), (1,O)

    kernel = functools.partial(_fused_lstm_classifier_kernel, n, T)

    out_tbo = pl.pallas_call(
        kernel,
        out_shape=jax.ShapeDtypeStruct((T, B, O), x.dtype),
        scratch_shapes=[
            pltpu.VMEM((4, T, B, H), jnp.float32),   # hoisted x-projections
            pltpu.VMEM((T, B, H), jnp.float32),      # layer output sequence
        ],
    )(*inputs)

    return jnp.transpose(out_tbo, (1, 0, 2))             # (B, T, O)


# ----------------------------------------------------------------------------
# Pure-JAX reference (same math as PyTorch nn.LSTM / nn.Linear / softmax)
# ----------------------------------------------------------------------------
def lstm_classifier_ref(x, lstm_params, w_fc, b_fc):
    B, T, _ = x.shape
    layer_in = x
    for (w_ih, w_hh, b_ih, b_hh) in lstm_params:
        H = w_hh.shape[1]
        h = jnp.zeros((B, H), jnp.float32)
        c = jnp.zeros((B, H), jnp.float32)
        outs = []
        for t in range(T):
            gates = layer_in[:, t, :] @ w_ih.T + h @ w_hh.T + b_ih + b_hh
            i_g = jax.nn.sigmoid(gates[:, 0 * H:1 * H])
            f_g = jax.nn.sigmoid(gates[:, 1 * H:2 * H])
            g_g = jnp.tanh(gates[:, 2 * H:3 * H])
            o_g = jax.nn.sigmoid(gates[:, 3 * H:4 * H])
            c = f_g * c + i_g * g_g
            h = o_g * jnp.tanh(c)
            outs.append(h)
        layer_in = jnp.stack(outs, axis=1)
    logits = layer_in @ w_fc.T + b_fc
    return jax.nn.softmax(logits, axis=1)     # torch.softmax(output, dim=1)


# ----------------------------------------------------------------------------
# Deterministic parameter construction (PyTorch-shaped, synthetic values)
# ----------------------------------------------------------------------------
def make_params(key, input_dim, hidden_dim, num_layers, output_dim):
    k = 1.0 / math.sqrt(hidden_dim)
    lstm_params = []
    for layer in range(num_layers):
        d_in = input_dim if layer == 0 else hidden_dim
        key, k1, k2, k3, k4 = jax.random.split(key, 5)
        w_ih = jax.random.uniform(k1, (4 * hidden_dim, d_in), jnp.float32, -k, k)
        w_hh = jax.random.uniform(k2, (4 * hidden_dim, hidden_dim), jnp.float32, -k, k)
        b_ih = jax.random.uniform(k3, (4 * hidden_dim,), jnp.float32, -k, k)
        b_hh = jax.random.uniform(k4, (4 * hidden_dim,), jnp.float32, -k, k)
        lstm_params.append((w_ih, w_hh, b_ih, b_hh))
    key, k5, k6 = jax.random.split(key, 3)
    w_fc = jax.random.uniform(k5, (output_dim, hidden_dim), jnp.float32, -k, k)
    b_fc = jax.random.uniform(k6, (output_dim,), jnp.float32, -k, k)
    return lstm_params, w_fc, b_fc


if __name__ == "__main__":
    B, T = 2, 8
    input_dim, hidden_dim, num_layers, output_dim = 16, 32, 2, 4

    key = jax.random.PRNGKey(0)
    key, xkey = jax.random.split(key)
    x = jax.random.normal(xkey, (B, T, input_dim), jnp.float32)

    lstm_params, w_fc, b_fc = make_params(
        key, input_dim, hidden_dim, num_layers, output_dim)

    out = lstm_classifier_forward(x, lstm_params, w_fc, b_fc)
    out = jax.block_until_ready(out)

    ref = lstm_classifier_ref(x, lstm_params, w_fc, b_fc)
    assert out.shape == (B, T, output_dim)
    assert jnp.allclose(out, ref, rtol=1e-3, atol=1e-3), "mismatch vs reference"

    print("KERNEL_OK")
</pallas_src>

<mosaic_0001>
module attributes {stable_mosaic.version = 11 : i64} {
  func.func @_fused_lstm_classifier_kernel(%arg0: memref<8x2x16xf32, #tpu.memory_space<vmem>>, %arg1: memref<4x16x32xf32, #tpu.memory_space<vmem>>, %arg2: memref<4x32x32xf32, #tpu.memory_space<vmem>>, %arg3: memref<4x1x32xf32, #tpu.memory_space<vmem>>, %arg4: memref<4x32x32xf32, #tpu.memory_space<vmem>>, %arg5: memref<4x32x32xf32, #tpu.memory_space<vmem>>, %arg6: memref<4x1x32xf32, #tpu.memory_space<vmem>>, %arg7: memref<32x4xf32, #tpu.memory_space<vmem>>, %arg8: memref<1x4xf32, #tpu.memory_space<vmem>>, %arg9: memref<8x2x4xf32, #tpu.memory_space<vmem>>, %arg10: memref<4x8x2x32xf32, #tpu.memory_space<vmem>>, %arg11: memref<8x2x32xf32, #tpu.memory_space<vmem>>) attributes {dimension_semantics = [], scalar_prefetch = 0 : i64, scratch_operands = 2 : i64, tpu.core_type = #tpu.core_type<tc>} {
    %c0 = arith.constant 0 : index
    %c0_0 = arith.constant 0 : index
    %c0_1 = arith.constant 0 : index
    %0 = vector.load %arg0[%c0, %c0_0, %c0_1] : memref<8x2x16xf32, #tpu.memory_space<vmem>>, vector<8x2x16xf32>
    %1 = vector.shape_cast %0 : vector<8x2x16xf32> to vector<16x16xf32>
    %c0_2 = arith.constant 0 : index
    %c0_3 = arith.constant 0 : index
    %c0_4 = arith.constant 0 : index
    %2 = vector.load %arg1[%c0_2, %c0_3, %c0_4] : memref<4x16x32xf32, #tpu.memory_space<vmem>>, vector<1x16x32xf32>
    %3 = vector.shape_cast %2 : vector<1x16x32xf32> to vector<16x32xf32>
    %cst = arith.constant dense<0.000000e+00> : vector<16x32xf32>
    %4 = tpu.matmul %1, %3, %cst {dimension_numbers = #tpu.dot_dimension_numbers<[1], [0], [0], [1], [0, 0, 1, 1], [], []>} : vector<16x16xf32>, vector<16x32xf32>, vector<16x32xf32> -> vector<16x32xf32>
    %c0_5 = arith.constant 0 : index
    %c0_6 = arith.constant 0 : index
    %c0_7 = arith.constant 0 : index
    %5 = vector.load %arg3[%c0_5, %c0_6, %c0_7] : memref<4x1x32xf32, #tpu.memory_space<vmem>>, vector<1x1x32xf32>
    %6 = vector.shape_cast %5 : vector<1x1x32xf32> to vector<1x32xf32>
    %7 = vector.broadcast %6 : vector<1x32xf32> to vector<16x32xf32>
    %8 = arith.addf %4, %7 : vector<16x32xf32>
    %9 = vector.shape_cast %8 : vector<16x32xf32> to vector<8x2x32xf32>
    %c0_8 = arith.constant 0 : index
    %c0_9 = arith.constant 0 : index
    %c0_10 = arith.constant 0 : index
    %c0_11 = arith.constant 0 : index
    %10 = vector.load %arg10[%c0_8, %c0_9, %c0_10, %c0_11] : memref<4x8x2x32xf32, #tpu.memory_space<vmem>>, vector<1x8x2x32xf32>
    %11 = vector.shape_cast %10 : vector<1x8x2x32xf32> to vector<8x2x32xf32>
    %12 = vector.shape_cast %9 : vector<8x2x32xf32> to vector<1x8x2x32xf32>
    tpu.vector_store %arg10[%c0_8, %c0_9, %c0_10, %c0_11], %12 {strides = array<i32>} : memref<4x8x2x32xf32, #tpu.memory_space<vmem>>, vector<1x8x2x32xf32>,
    %c1 = arith.constant 1 : index
    %c0_12 = arith.constant 0 : index
    %c0_13 = arith.constant 0 : index
    %13 = vector.load %arg1[%c1, %c0_12, %c0_13] : memref<4x16x32xf32, #tpu.memory_space<vmem>>, vector<1x16x32xf32>
    %14 = vector.shape_cast %13 : vector<1x16x32xf32> to vector<16x32xf32>
    %cst_14 = arith.constant dense<0.000000e+00> : vector<16x32xf32>
    %15 = tpu.matmul %1, %14, %cst_14 {dimension_numbers = #tpu.dot_dimension_numbers<[1], [0], [0], [1], [0, 0, 1, 1], [], []>} : vector<16x16xf32>, vector<16x32xf32>, vector<16x32xf32> -> vector<16x32xf32>
    %c1_15 = arith.constant 1 : index
    %c0_16 = arith.constant 0 : index
    %c0_17 = arith.constant 0 : index
    %16 = vector.load %arg3[%c1_15, %c0_16, %c0_17] : memref<4x1x32xf32, #tpu.memory_space<vmem>>, vector<1x1x32xf32>
    %17 = vector.shape_cast %16 : vector<1x1x32xf32> to vector<1x32xf32>
    %18 = vector.broadcast %17 : vector<1x32xf32> to vector<16x32xf32>
    %19 = arith.addf %15, %18 : vector<16x32xf32>
    %20 = vector.shape_cast %19 : vector<16x32xf32> to vector<8x2x32xf32>
    %c1_18 = arith.constant 1 : index
    %c0_19 = arith.constant 0 : index
    %c0_20 = arith.constant 0 : index
    %c0_21 = arith.constant 0 : index
    %21 = vector.load %arg10[%c1_18, %c0_19, %c0_20, %c0_21] : memref<4x8x2x32xf32, #tpu.memory_space<vmem>>, vector<1x8x2x32xf32>
    %22 = vector.shape_cast %21 : vector<1x8x2x32xf32> to vector<8x2x32xf32>
    %23 = vector.shape_cast %20 : vector<8x2x32xf32> to vector<1x8x2x32xf32>
    tpu.vector_store %arg10[%c1_18, %c0_19, %c0_20, %c0_21], %23 {strides = array<i32>} : memref<4x8x2x32xf32, #tpu.memory_space<vmem>>, vector<1x8x2x32xf32>,
    %c2 = arith.constant 2 : index
    %c0_22 = arith.constant 0 : index
    %c0_23 = arith.constant 0 : index
    %24 = vector.load %arg1[%c2, %c0_22, %c0_23] : memref<4x16x32xf32, #tpu.memory_space<vmem>>, vector<1x16x32xf32>
    %25 = vector.shape_cast %24 : vector<1x16x32xf32> to vector<16x32xf32>
    %cst_24 = arith.constant dense<0.000000e+00> : vector<16x32xf32>
    %26 = tpu.matmul %1, %25, %cst_24 {dimension_numbers = #tpu.dot_dimension_numbers<[1], [0], [0], [1], [0, 0, 1, 1], [], []>} : vector<16x16xf32>, vector<16x32xf32>, vector<16x32xf32> -> vector<16x32xf32>
    %c2_25 = arith.constant 2 : index
    %c0_26 = arith.constant 0 : index
    %c0_27 = arith.constant 0 : index
    %27 = vector.load %arg3[%c2_25, %c0_26, %c0_27] : memref<4x1x32xf32, #tpu.memory_space<vmem>>, vector<1x1x32xf32>
    %28 = vector.shape_cast %27 : vector<1x1x32xf32> to vector<1x32xf32>
    %29 = vector.broadcast %28 : vector<1x32xf32> to vector<16x32xf32>
    %30 = arith.addf %26, %29 : vector<16x32xf32>
    %31 = vector.shape_cast %30 : vector<16x32xf32> to vector<8x2x32xf32>
    %c2_28 = arith.constant 2 : index
    %c0_29 = arith.constant 0 : index
    %c0_30 = arith.constant 0 : index
    %c0_31 = arith.constant 0 : index
    %32 = vector.load %arg10[%c2_28, %c0_29, %c0_30, %c0_31] : memref<4x8x2x32xf32, #tpu.memory_space<vmem>>, vector<1x8x2x32xf32>
    %33 = vector.shape_cast %32 : vector<1x8x2x32xf32> to vector<8x2x32xf32>
    %34 = vector.shape_cast %31 : vector<8x2x32xf32> to vector<1x8x2x32xf32>
    tpu.vector_store %arg10[%c2_28, %c0_29, %c0_30, %c0_31], %34 {strides = array<i32>} : memref<4x8x2x32xf32, #tpu.memory_space<vmem>>, vector<1x8x2x32xf32>,
    %c3 = arith.constant 3 : index
    %c0_32 = arith.constant 0 : index
    %c0_33 = arith.constant 0 : index
    %35 = vector.load %arg1[%c3, %c0_32, %c0_33] : memref<4x16x32xf32, #tpu.memory_space<vmem>>, vector<1x16x32xf32>
    %36 = vector.shape_cast %35 : vector<1x16x32xf32> to vector<16x32xf32>
    %cst_34 = arith.constant dense<0.000000e+00> : vector<16x32xf32>
    %37 = tpu.matmul %1, %36, %cst_34 {dimension_numbers = #tpu.dot_dimension_numbers<[1], [0], [0], [1], [0, 0, 1, 1], [], []>} : vector<16x16xf32>, vector<16x32xf32>, vector<16x32xf32> -> vector<16x32xf32>
    %c3_35 = arith.constant 3 : index
    %c0_36 = arith.constant 0 : index
    %c0_37 = arith.constant 0 : index
    %38 = vector.load %arg3[%c3_35, %c0_36, %c0_37] : memref<4x1x32xf32, #tpu.memory_space<vmem>>, vector<1x1x32xf32>
    %39 = vector.shape_cast %38 : vector<1x1x32xf32> to vector<1x32xf32>
    %40 = vector.broadcast %39 : vector<1x32xf32> to vector<16x32xf32>
    %41 = arith.addf %37, %40 : vector<16x32xf32>
    %42 = vector.shape_cast %41 : vector<16x32xf32> to vector<8x2x32xf32>
    %c3_38 = arith.constant 3 : index
    %c0_39 = arith.constant 0 : index
    %c0_40 = arith.constant 0 : index
    %c0_41 = arith.constant 0 : index
    %43 = vector.load %arg10[%c3_38, %c0_39, %c0_40, %c0_41] : memref<4x8x2x32xf32, #tpu.memory_space<vmem>>, vector<1x8x2x32xf32>
    %44 = vector.shape_cast %43 : vector<1x8x2x32xf32> to vector<8x2x32xf32>
    %45 = vector.shape_cast %42 : vector<8x2x32xf32> to vector<1x8x2x32xf32>
    tpu.vector_store %arg10[%c3_38, %c0_39, %c0_40, %c0_41], %45 {strides = array<i32>} : memref<4x8x2x32xf32, #tpu.memory_space<vmem>>, vector<1x8x2x32xf32>,
    %c0_42 = arith.constant 0 : index
    %c0_43 = arith.constant 0 : index
    %c0_44 = arith.constant 0 : index
    %46 = vector.load %arg2[%c0_42, %c0_43, %c0_44] : memref<4x32x32xf32, #tpu.memory_space<vmem>>, vector<1x32x32xf32>
    %47 = vector.shape_cast %46 : vector<1x32x32xf32> to vector<32x32xf32>
    %c1_45 = arith.constant 1 : index
    %c0_46 = arith.constant 0 : index
    %c0_47 = arith.constant 0 : index
    %48 = vector.load %arg2[%c1_45, %c0_46, %c0_47] : memref<4x32x32xf32, #tpu.memory_space<vmem>>, vector<1x32x32xf32>
    %49 = vector.shape_cast %48 : vector<1x32x32xf32> to vector<32x32xf32>
    %c2_48 = arith.constant 2 : index
    %c0_49 = arith.constant 0 : index
    %c0_50 = arith.constant 0 : index
    %50 = vector.load %arg2[%c2_48, %c0_49, %c0_50] : memref<4x32x32xf32, #tpu.memory_space<vmem>>, vector<1x32x32xf32>
    %51 = vector.shape_cast %50 : vector<1x32x32xf32> to vector<32x32xf32>
    %c3_51 = arith.constant 3 : index
    %c0_52 = arith.constant 0 : index
    %c0_53 = arith.constant 0 : index
    %52 = vector.load %arg2[%c3_51, %c0_52, %c0_53] : memref<4x32x32xf32, #tpu.memory_space<vmem>>, vector<1x32x32xf32>
    %53 = vector.shape_cast %52 : vector<1x32x32xf32> to vector<32x32xf32>
    %cst_54 = arith.constant 0.000000e+00 : f32
    %54 = vector.broadcast %cst_54 : f32 to vector<2x32xf32>
    %cst_55 = arith.constant 0.000000e+00 : f32
    %55 = vector.broadcast %cst_55 : f32 to vector<2x32xf32>
    %c0_i32 = arith.constant 0 : i32
    %c0_56 = arith.constant 0 : index
    %56 = arith.index_cast %c0_i32 : i32 to index
    %c0_57 = arith.constant 0 : index
    %c0_58 = arith.constant 0 : index
    %57 = vector.load %arg10[%c0_56, %56, %c0_57, %c0_58] : memref<4x8x2x32xf32, #tpu.memory_space<vmem>>, vector<1x1x2x32xf32>
    %58 = vector.shape_cast %57 : vector<1x1x2x32xf32> to vector<2x32xf32>
    %cst_59 = arith.constant dense<0.000000e+00> : vector<2x32xf32>
    %59 = tpu.matmul %54, %47, %cst_59 {dimension_numbers = #tpu.dot_dimension_numbers<[1], [0], [0], [1], [0, 0, 1, 1], [], []>} : vector<2x32xf32>, vector<32x32xf32>, vector<2x32xf32> -> vector<2x32xf32>
    %60 = arith.addf %58, %59 : vector<2x32xf32>
    %61 = arith.negf %60 : vector<2x32xf32>
    %62 = math.exp %61 : vector<2x32xf32>
    %cst_60 = arith.constant 1.000000e+00 : f32
    %63 = vector.broadcast %cst_60 : f32 to vector<2x32xf32>
    %64 = arith.addf %63, %62 : vector<2x32xf32>
    %65 = arith.divf %63, %64 : vector<2x32xf32>
    %c1_61 = arith.constant 1 : index
    %66 = arith.index_cast %c0_i32 : i32 to index
    %c0_62 = arith.constant 0 : index
    %c0_63 = arith.constant 0 : index
    %67 = vector.load %arg10[%c1_61, %66, %c0_62, %c0_63] : memref<4x8x2x32xf32, #tpu.memory_space<vmem>>, vector<1x1x2x32xf32>
    %68 = vector.shape_cast %67 : vector<1x1x2x32xf32> to vector<2x32xf32>
    %cst_64 = arith.constant dense<0.000000e+00> : vector<2x32xf32>
    %69 = tpu.matmul %54, %49, %cst_64 {dimension_numbers = #tpu.dot_dimension_numbers<[1], [0], [0], [1], [0, 0, 1, 1], [], []>} : vector<2x32xf32>, vector<32x32xf32>, vector<2x32xf32> -> vector<2x32xf32>
    %70 = arith.addf %68, %69 : vector<2x32xf32>
    %71 = arith.negf %70 : vector<2x32xf32>
    %72 = math.exp %71 : vector<2x32xf32>
    %cst_65 = arith.constant 1.000000e+00 : f32
    %73 = vector.broadcast %cst_65 : f32 to vector<2x32xf32>
    %74 = arith.addf %73, %72 : vector<2x32xf32>
    %75 = arith.divf %73, %74 : vector<2x32xf32>
    %c2_66 = arith.constant 2 : index
    %76 = arith.index_cast %c0_i32 : i32 to index
    %c0_67 = arith.constant 0 : index
    %c0_68 = arith.constant 0 : index
    %77 = vector.load %arg10[%c2_66, %76, %c0_67, %c0_68] : memref<4x8x2x32xf32, #tpu.memory_space<vmem>>, vector<1x1x2x32xf32>
    %78 = vector.shape_cast %77 : vector<1x1x2x32xf32> to vector<2x32xf32>
    %cst_69 = arith.constant dense<0.000000e+00> : vector<2x32xf32>
    %79 = tpu.matmul %54, %51, %cst_69 {dimension_numbers = #tpu.dot_dimension_numbers<[1], [0], [0], [1], [0, 0, 1, 1], [], []>} : vector<2x32xf32>, vector<32x32xf32>, vector<2x32xf32> -> vector<2x32xf32>
    %80 = arith.addf %78, %79 : vector<2x32xf32>
    %81 = math.tanh %80 : vector<2x32xf32>
    %c3_70 = arith.constant 3 : index
    %82 = arith.index_cast %c0_i32 : i32 to index
    %c0_71 = arith.constant 0 : index
    %c0_72 = arith.constant 0 : index
    %83 = vector.load %arg10[%c3_70, %82, %c0_71, %c0_72] : memref<4x8x2x32xf32, #tpu.memory_space<vmem>>, vector<1x1x2x32xf32>
    %84 = vector.shape_cast %83 : vector<1x1x2x32xf32> to vector<2x32xf32>
    %cst_73 = arith.constant dense<0.000000e+00> : vector<2x32xf32>
    %85 = tpu.matmul %54, %53, %cst_73 {dimension_numbers = #tpu.dot_dimension_numbers<[1], [0], [0], [1], [0, 0, 1, 1], [], []>} : vector<2x32xf32>, vector<32x32xf32>, vector<2x32xf32> -> vector<2x32xf32>
    %86 = arith.addf %84, %85 : vector<2x32xf32>
    %87 = arith.negf %86 : vector<2x32xf32>
    %88 = math.exp %87 : vector<2x32xf32>
    %cst_74 = arith.constant 1.000000e+00 : f32
    %89 = vector.broadcast %cst_74 : f32 to vector<2x32xf32>
    %90 = arith.addf %89, %88 : vector<2x32xf32>
    %91 = arith.divf %89, %90 : vector<2x32xf32>
    %92 = arith.mulf %75, %55 : vector<2x32xf32>
    %93 = arith.mulf %65, %81 : vector<2x32xf32>
    %94 = arith.addf %92, %93 : vector<2x32xf32>
    %95 = math.tanh %94 : vector<2x32xf32>
    %96 = arith.mulf %91, %95 : vector<2x32xf32>
    %97 = arith.index_cast %c0_i32 : i32 to index
    %c0_75 = arith.constant 0 : index
    %c0_76 = arith.constant 0 : index
    %98 = vector.load %arg11[%97, %c0_75, %c0_76] : memref<8x2x32xf32, #tpu.memory_space<vmem>>, vector<1x2x32xf32>
    %99 = vector.shape_cast %98 : vector<1x2x32xf32> to vector<2x32xf32>
    %100 = vector.shape_cast %96 : vector<2x32xf32> to vector<1x2x32xf32>
    tpu.vector_store %arg11[%97, %c0_75, %c0_76], %100 {strides = array<i32>} : memref<8x2x32xf32, #tpu.memory_space<vmem>>, vector<1x2x32xf32>,
    %c1_i32 = arith.constant 1 : i32
    %c0_77 = arith.constant 0 : index
    %101 = arith.index_cast %c1_i32 : i32 to index
    %c0_78 = arith.constant 0 : index
    %c0_79 = arith.constant 0 : index
    %102 = vector.load %arg10[%c0_77, %101, %c0_78, %c0_79] : memref<4x8x2x32xf32, #tpu.memory_space<vmem>>, vector<1x1x2x32xf32>
    %103 = vector.shape_cast %102 : vector<1x1x2x32xf32> to vector<2x32xf32>
    %cst_80 = arith.constant dense<0.000000e+00> : vector<2x32xf32>
    %104 = tpu.matmul %96, %47, %cst_80 {dimension_numbers = #tpu.dot_dimension_numbers<[1], [0], [0], [1], [0, 0, 1, 1], [], []>} : vector<2x32xf32>, vector<32x32xf32>, vector<2x32xf32> -> vector<2x32xf32>
    %105 = arith.addf %103, %104 : vector<2x32xf32>
    %106 = arith.negf %105 : vector<2x32xf32>
    %107 = math.exp %106 : vector<2x32xf32>
    %cst_81 = arith.constant 1.000000e+00 : f32
    %108 = vector.broadcast %cst_81 : f32 to vector<2x32xf32>
    %109 = arith.addf %108, %107 : vector<2x32xf32>
    %110 = arith.divf %108, %109 : vector<2x32xf32>
    %c1_82 = arith.constant 1 : index
    %111 = arith.index_cast %c1_i32 : i32 to index
    %c0_83 = arith.constant 0 : index
    %c0_84 = arith.constant 0 : index
    %112 = vector.load %arg10[%c1_82, %111, %c0_83, %c0_84] : memref<4x8x2x32xf32, #tpu.memory_space<vmem>>, vector<1x1x2x32xf32>
    %113 = vector.shape_cast %112 : vector<1x1x2x32xf32> to vector<2x32xf32>
    %cst_85 = arith.constant dense<0.000000e+00> : vector<2x32xf32>
    %114 = tpu.matmul %96, %49, %cst_85 {dimension_numbers = #tpu.dot_dimension_numbers<[1], [0], [0], [1], [0, 0, 1, 1], [], []>} : vector<2x32xf32>, vector<32x32xf32>, vector<2x32xf32> -> vector<2x32xf32>
    %115 = arith.addf %113, %114 : vector<2x32xf32>
    %116 = arith.negf %115 : vector<2x32xf32>
    %117 = math.exp %116 : vector<2x32xf32>
    %cst_86 = arith.constant 1.000000e+00 : f32
    %118 = vector.broadcast %cst_86 : f32 to vector<2x32xf32>
    %119 = arith.addf %118, %117 : vector<2x32xf32>
    %120 = arith.divf %118, %119 : vector<2x32xf32>
    %c2_87 = arith.constant 2 : index
    %121 = arith.index_cast %c1_i32 : i32 to index
    %c0_88 = arith.constant 0 : index
    %c0_89 = arith.constant 0 : index
    %122 = vector.load %arg10[%c2_87, %121, %c0_88, %c0_89] : memref<4x8x2x32xf32, #tpu.memory_space<vmem>>, vector<1x1x2x32xf32>
    %123 = vector.shape_cast %122 : vector<1x1x2x32xf32> to vector<2x32xf32>
    %cst_90 = arith.constant dense<0.000000e+00> : vector<2x32xf32>
    %124 = tpu.matmul %96, %51, %cst_90 {dimension_numbers = #tpu.dot_dimension_numbers<[1], [0], [0], [1], [0, 0, 1, 1], [], []>} : vector<2x32xf32>, vector<32x32xf32>, vector<2x32xf32> -> vector<2x32xf32>
    %125 = arith.addf %123, %124 : vector<2x32xf32>
    %126 = math.tanh %125 : vector<2x32xf32>
    %c3_91 = arith.constant 3 : index
    %127 = arith.index_cast %c1_i32 : i32 to index
    %c0_92 = arith.constant 0 : index
    %c0_93 = arith.constant 0 : index
    %128 = vector.load %arg10[%c3_91, %127, %c0_92, %c0_93] : memref<4x8x2x32xf32, #tpu.memory_space<vmem>>, vector<1x1x2x32xf32>
    %129 = vector.shape_cast %128 : vector<1x1x2x32xf32> to vector<2x32xf32>
    %cst_94 = arith.constant dense<0.000000e+00> : vector<2x32xf32>
    %130 = tpu.matmul %96, %53, %cst_94 {dimension_numbers = #tpu.dot_dimension_numbers<[1], [0], [0], [1], [0, 0, 1, 1], [], []>} : vector<2x32xf32>, vector<32x32xf32>, vector<2x32xf32> -> vector<2x32xf32>
    %131 = arith.addf %129, %130 : vector<2x32xf32>
    %132 = arith.negf %131 : vector<2x32xf32>
    %133 = math.exp %132 : vector<2x32xf32>
    %cst_95 = arith.constant 1.000000e+00 : f32
    %134 = vector.broadcast %cst_95 : f32 to vector<2x32xf32>
    %135 = arith.addf %134, %133 : vector<2x32xf32>
    %136 = arith.divf %134, %135 : vector<2x32xf32>
    %137 = arith.mulf %120, %94 : vector<2x32xf32>
    %138 = arith.mulf %110, %126 : vector<2x32xf32>
    %139 = arith.addf %137, %138 : vector<2x32xf32>
    %140 = math.tanh %139 : vector<2x32xf32>
    %141 = arith.mulf %136, %140 : vector<2x32xf32>
    %142 = arith.index_cast %c1_i32 : i32 to index
    %c0_96 = arith.constant 0 : index
    %c0_97 = arith.constant 0 : index
    %143 = vector.load %arg11[%142, %c0_96, %c0_97] : memref<8x2x32xf32, #tpu.memory_space<vmem>>, vector<1x2x32xf32>
    %144 = vector.shape_cast %143 : vector<1x2x32xf32> to vector<2x32xf32>
    %145 = vector.shape_cast %141 : vector<2x32xf32> to vector<1x2x32xf32>
    tpu.vector_store %arg11[%142, %c0_96, %c0_97], %145 {strides = array<i32>} : memref<8x2x32xf32, #tpu.memory_space<vmem>>, vector<1x2x32xf32>,
    %c2_i32 = arith.constant 2 : i32
    %c0_98 = arith.constant 0 : index
    %146 = arith.index_cast %c2_i32 : i32 to index
    %c0_99 = arith.constant 0 : index
    %c0_100 = arith.constant 0 : index
    %147 = vector.load %arg10[%c0_98, %146, %c0_99, %c0_100] : memref<4x8x2x32xf32, #tpu.memory_space<vmem>>, vector<1x1x2x32xf32>
    %148 = vector.shape_cast %147 : vector<1x1x2x32xf32> to vector<2x32xf32>
    %cst_101 = arith.constant dense<0.000000e+00> : vector<2x32xf32>
    %149 = tpu.matmul %141, %47, %cst_101 {dimension_numbers = #tpu.dot_dimension_numbers<[1], [0], [0], [1], [0, 0, 1, 1], [], []>} : vector<2x32xf32>, vector<32x32xf32>, vector<2x32xf32> -> vector<2x32xf32>
    %150 = arith.addf %148, %149 : vector<2x32xf32>
    %151 = arith.negf %150 : vector<2x32xf32>
    %152 = math.exp %151 : vector<2x32xf32>
    %cst_102 = arith.constant 1.000000e+00 : f32
    %153 = vector.broadcast %cst_102 : f32 to vector<2x32xf32>
    %154 = arith.addf %153, %152 : vector<2x32xf32>
    %155 = arith.divf %153, %154 : vector<2x32xf32>
    %c1_103 = arith.constant 1 : index
    %156 = arith.index_cast %c2_i32 : i32 to index
    %c0_104 = arith.constant 0 : index
    %c0_105 = arith.constant 0 : index
    %157 = vector.load %arg10[%c1_103, %156, %c0_104, %c0_105] : memref<4x8x2x32xf32, #tpu.memory_space<vmem>>, vector<1x1x2x32xf32>
    %158 = vector.shape_cast %157 : vector<1x1x2x32xf32> to vector<2x32xf32>
    %cst_106 = arith.constant dense<0.000000e+00> : vector<2x32xf32>
    %159 = tpu.matmul %141, %49, %cst_106 {dimension_numbers = #tpu.dot_dimension_numbers<[1], [0], [0], [1], [0, 0, 1, 1], [], []>} : vector<2x32xf32>, vector<32x32xf32>, vector<2x32xf32> -> vector<2x32xf32>
    %160 = arith.addf %158, %159 : vector<2x32xf32>
    %161 = arith.negf %160 : vector<2x32xf32>
    %162 = math.exp %161 : vector<2x32xf32>
    %cst_107 = arith.constant 1.000000e+00 : f32
    %163 = vector.broadcast %cst_107 : f32 to vector<2x32xf32>
    %164 = arith.addf %163, %162 : vector<2x32xf32>
    %165 = arith.divf %163, %164 : vector<2x32xf32>
    %c2_108 = arith.constant 2 : index
    %166 = arith.index_cast %c2_i32 : i32 to index
    %c0_109 = arith.constant 0 : index
    %c0_110 = arith.constant 0 : index
    %167 = vector.load %arg10[%c2_108, %166, %c0_109, %c0_110] : memref<4x8x2x32xf32, #tpu.memory_space<vmem>>, vector<1x1x2x32xf32>
    %168 = vector.shape_cast %167 : vector<1x1x2x32xf32> to vector<2x32xf32>
    %cst_111 = arith.constant dense<0.000000e+00> : vector<2x32xf32>
    %169 = tpu.matmul %141, %51, %cst_111 {dimension_numbers = #tpu.dot_dimension_numbers<[1], [0], [0], [1], [0, 0, 1, 1], [], []>} : vector<2x32xf32>, vector<32x32xf32>, vector<2x32xf32> -> vector<2x32xf32>
    %170 = arith.addf %168, %169 : vector<2x32xf32>
    %171 = math.tanh %170 : vector<2x32xf32>
    %c3_112 = arith.constant 3 : index
    %172 = arith.index_cast %c2_i32 : i32 to index
    %c0_113 = arith.constant 0 : index
    %c0_114 = arith.constant 0 : index
    %173 = vector.load %arg10[%c3_112, %172, %c0_113, %c0_114] : memref<4x8x2x32xf32, #tpu.memory_space<vmem>>, vector<1x1x2x32xf32>
    %174 = vector.shape_cast %173 : vector<1x1x2x32xf32> to vector<2x32xf32>
    %cst_115 = arith.constant dense<0.000000e+00> : vector<2x32xf32>
    %175 = tpu.matmul %141, %53, %cst_115 {dimension_numbers = #tpu.dot_dimension_numbers<[1], [0], [0], [1], [0, 0, 1, 1], [], []>} : vector<2x32xf32>, vector<32x32xf32>, vector<2x32xf32> -> vector<2x32xf32>
    %176 = arith.addf %174, %175 : vector<2x32xf32>
    %177 = arith.negf %176 : vector<2x32xf32>
    %178 = math.exp %177 : vector<2x32xf32>
    %cst_116 = arith.constant 1.000000e+00 : f32
    %179 = vector.broadcast %cst_116 : f32 to vector<2x32xf32>
    %180 = arith.addf %179, %178 : vector<2x32xf32>
    %181 = arith.divf %179, %180 : vector<2x32xf32>
    %182 = arith.mulf %165, %139 : vector<2x32xf32>
    %183 = arith.mulf %155, %171 : vector<2x32xf32>
    %184 = arith.addf %182, %183 : vector<2x32xf32>
    %185 = math.tanh %184 : vector<2x32xf32>
    %186 = arith.mulf %181, %185 : vector<2x32xf32>
    %187 = arith.index_cast %c2_i32 : i32 to index
    %c0_117 = arith.constant 0 : index
    %c0_118 = arith.constant 0 : index
    %188 = vector.load %arg11[%187, %c0_117, %c0_118] : memref<8x2x32xf32, #tpu.memory_space<vmem>>, vector<1x2x32xf32>
    %189 = vector.shape_cast %188 : vector<1x2x32xf32> to vector<2x32xf32>
    %190 = vector.shape_cast %186 : vector<2x32xf32> to vector<1x2x32xf32>
    tpu.vector_store %arg11[%187, %c0_117, %c0_118], %190 {strides = array<i32>} : memref<8x2x32xf32, #tpu.memory_space<vmem>>, vector<1x2x32xf32>,
    %c3_i32 = arith.constant 3 : i32
    %c0_119 = arith.constant 0 : index
    %191 = arith.index_cast %c3_i32 : i32 to index
    %c0_120 = arith.constant 0 : index
    %c0_121 = arith.constant 0 : index
    %192 = vector.load %arg10[%c0_119, %191, %c0_120, %c0_121] : memref<4x8x2x32xf32, #tpu.memory_space<vmem>>, vector<1x1x2x32xf32>
    %193 = vector.shape_cast %192 : vector<1x1x2x32xf32> to vector<2x32xf32>
    %cst_122 = arith.constant dense<0.000000e+00> : vector<2x32xf32>
    %194 = tpu.matmul %186, %47, %cst_122 {dimension_numbers = #tpu.dot_dimension_numbers<[1], [0], [0], [1], [0, 0, 1, 1], [], []>} : vector<2x32xf32>, vector<32x32xf32>, vector<2x32xf32> -> vector<2x32xf32>
    %195 = arith.addf %193, %194 : vector<2x32xf32>
    %196 = arith.negf %195 : vector<2x32xf32>
    %197 = math.exp %196 : vector<2x32xf32>
    %cst_123 = arith.constant 1.000000e+00 : f32
    %198 = vector.broadcast %cst_123 : f32 to vector<2x32xf32>
    %199 = arith.addf %198, %197 : vector<2x32xf32>
    %200 = arith.divf %198, %199 : vector<2x32xf32>
    %c1_124 = arith.constant 1 : index
    %201 = arith.index_cast %c3_i32 : i32 to index
    %c0_125 = arith.constant 0 : index
    %c0_126 = arith.constant 0 : index
    %202 = vector.load %arg10[%c1_124, %201, %c0_125, %c0_126] : memref<4x8x2x32xf32, #tpu.memory_space<vmem>>, vector<1x1x2x32xf32>
    %203 = vector.shape_cast %202 : vector<1x1x2x32xf32> to vector<2x32xf32>
    %cst_127 = arith.constant dense<0.000000e+00> : vector<2x32xf32>
    %204 = tpu.matmul %186, %49, %cst_127 {dimension_numbers = #tpu.dot_dimension_numbers<[1], [0], [0], [1], [0, 0, 1, 1], [], []>} : vector<2x32xf32>, vector<32x32xf32>, vector<2x32xf32> -> vector<2x32xf32>
    %205 = arith.addf %203, %204 : vector<2x32xf32>
    %206 = arith.negf %205 : vector<2x32xf32>
    %207 = math.exp %206 : vector<2x32xf32>
    %cst_128 = arith.constant 1.000000e+00 : f32
    %208 = vector.broadcast %cst_128 : f32 to vector<2x32xf32>
    %209 = arith.addf %208, %207 : vector<2x32xf32>
    %210 = arith.divf %208, %209 : vector<2x32xf32>
    %c2_129 = arith.constant 2 : index
    %211 = arith.index_cast %c3_i32 : i32 to index
    %c0_130 = arith.constant 0 : index
    %c0_131 = arith.constant 0 : index
    %212 = vector.load %arg10[%c2_129, %211, %c0_130, %c0_131] : memref<4x8x2x32xf32, #tpu.memory_space<vmem>>, vector<1x1x2x32xf32>
    %213 = vector.shape_cast %212 : vector<1x1x2x32xf32> to vector<2x32xf32>
    %cst_132 = arith.constant dense<0.000000e+00> : vector<2x32xf32>
    %214 = tpu.matmul %186, %51, %cst_132 {dimension_numbers = #tpu.dot_dimension_numbers<[1], [0], [0], [1], [0, 0, 1, 1], [], []>} : vector<2x32xf32>, vector<32x32xf32>, vector<2x32xf32> -> vector<2x32xf32>
    %215 = arith.addf %213, %214 : vector<2x32xf32>
    %216 = math.tanh %215 : vector<2x32xf32>
    %c3_133 = arith.constant 3 : index
    %217 = arith.index_cast %c3_i32 : i32 to index
    %c0_134 = arith.constant 0 : index
    %c0_135 = arith.constant 0 : index
    %218 = vector.load %arg10[%c3_133, %217, %c0_134, %c0_135] : memref<4x8x2x32xf32, #tpu.memory_space<vmem>>, vector<1x1x2x32xf32>
    %219 = vector.shape_cast %218 : vector<1x1x2x32xf32> to vector<2x32xf32>
    %cst_136 = arith.constant dense<0.000000e+00> : vector<2x32xf32>
    %220 = tpu.matmul %186, %53, %cst_136 {dimension_numbers = #tpu.dot_dimension_numbers<[1], [0], [0], [1], [0, 0, 1, 1], [], []>} : vector<2x32xf32>, vector<32x32xf32>, vector<2x32xf32> -> vector<2x32xf32>
    %221 = arith.addf %219, %220 : vector<2x32xf32>
    %222 = arith.negf %221 : vector<2x32xf32>
    %223 = math.exp %222 : vector<2x32xf32>
    %cst_137 = arith.constant 1.000000e+00 : f32
    %224 = vector.broadcast %cst_137 : f32 to vector<2x32xf32>
    %225 = arith.addf %224, %223 : vector<2x32xf32>
    %226 = arith.divf %224, %225 : vector<2x32xf32>
    %227 = arith.mulf %210, %184 : vector<2x32xf32>
    %228 = arith.mulf %200, %216 : vector<2x32xf32>
    %229 = arith.addf %227, %228 : vector<2x32xf32>
    %230 = math.tanh %229 : vector<2x32xf32>
    %231 = arith.mulf %226, %230 : vector<2x32xf32>
    %232 = arith.index_cast %c3_i32 : i32 to index
    %c0_138 = arith.constant 0 : index
    %c0_139 = arith.constant 0 : index
    %233 = vector.load %arg11[%232, %c0_138, %c0_139] : memref<8x2x32xf32, #tpu.memory_space<vmem>>, vector<1x2x32xf32>
    %234 = vector.shape_cast %233 : vector<1x2x32xf32> to vector<2x32xf32>
    %235 = vector.shape_cast %231 : vector<2x32xf32> to vector<1x2x32xf32>
    tpu.vector_store %arg11[%232, %c0_138, %c0_139], %235 {strides = array<i32>} : memref<8x2x32xf32, #tpu.memory_space<vmem>>, vector<1x2x32xf32>,
    %c4_i32 = arith.constant 4 : i32
    %c0_140 = arith.constant 0 : index
    %236 = arith.index_cast %c4_i32 : i32 to index
    %c0_141 = arith.constant 0 : index
    %c0_142 = arith.constant 0 : index
    %237 = vector.load %arg10[%c0_140, %236, %c0_141, %c0_142] : memref<4x8x2x32xf32, #tpu.memory_space<vmem>>, vector<1x1x2x32xf32>
    %238 = vector.shape_cast %237 : vector<1x1x2x32xf32> to vector<2x32xf32>
    %cst_143 = arith.constant dense<0.000000e+00> : vector<2x32xf32>
    %239 = tpu.matmul %231, %47, %cst_143 {dimension_numbers = #tpu.dot_dimension_numbers<[1], [0], [0], [1], [0, 0, 1, 1], [], []>} : vector<2x32xf32>, vector<32x32xf32>, vector<2x32xf32> -> vector<2x32xf32>
    %240 = arith.addf %238, %239 : vector<2x32xf32>
    %241 = arith.negf %240 : vector<2x32xf32>
    %242 = math.exp %241 : vector<2x32xf32>
    %cst_144 = arith.constant 1.000000e+00 : f32
    %243 = vector.broadcast %cst_144 : f32 to vector<2x32xf32>
    %244 = arith.addf %243, %242 : vector<2x32xf32>
    %245 = arith.divf %243, %244 : vector<2x32xf32>
    %c1_145 = arith.constant 1 : index
    %246 = arith.index_cast %c4_i32 : i32 to index
    %c0_146 = arith.constant 0 : index
    %c0_147 = arith.constant 0 : index
    %247 = vector.load %arg10[%c1_145, %246, %c0_146, %c0_147] : memref<4x8x2x32xf32, #tpu.memory_space<vmem>>, vector<1x1x2x32xf32>
    %248 = vector.shape_cast %247 : vector<1x1x2x32xf32> to vector<2x32xf32>
    %cst_148 = arith.constant dense<0.000000e+00> : vector<2x32xf32>
    %249 = tpu.matmul %231, %49, %cst_148 {dimension_numbers = #tpu.dot_dimension_numbers<[1], [0], [0], [1], [0, 0, 1, 1], [], []>} : vector<2x32xf32>, vector<32x32xf32>, vector<2x32xf32> -> vector<2x32xf32>
    %250 = arith.addf %248, %249 : vector<2x32xf32>
    %251 = arith.negf %250 : vector<2x32xf32>
    %252 = math.exp %251 : vector<2x32xf32>
    %cst_149 = arith.constant 1.000000e+00 : f32
    %253 = vector.broadcast %cst_149 : f32 to vector<2x32xf32>
    %254 = arith.addf %253, %252 : vector<2x32xf32>
    %255 = arith.divf %253, %254 : vector<2x32xf32>
    %c2_150 = arith.constant 2 : index
    %256 = arith.index_cast %c4_i32 : i32 to index
    %c0_151 = arith.constant 0 : index
    %c0_152 = arith.constant 0 : index
    %257 = vector.load %arg10[%c2_150, %256, %c0_151, %c0_152] : memref<4x8x2x32xf32, #tpu.memory_space<vmem>>, vector<1x1x2x32xf32>
    %258 = vector.shape_cast %257 : vector<1x1x2x32xf32> to vector<2x32xf32>
    %cst_153 = arith.constant dense<0.000000e+00> : vector<2x32xf32>
    %259 = tpu.matmul %231, %51, %cst_153 {dimension_numbers = #tpu.dot_dimension_numbers<[1], [0], [0], [1], [0, 0, 1, 1], [], []>} : vector<2x32xf32>, vector<32x32xf32>, vector<2x32xf32> -> vector<2x32xf32>
    %260 = arith.addf %258, %259 : vector<2x32xf32>
    %261 = math.tanh %260 : vector<2x32xf32>
    %c3_154 = arith.constant 3 : index
    %262 = arith.index_cast %c4_i32 : i32 to index
    %c0_155 = arith.constant 0 : index
    %c0_156 = arith.constant 0 : index
    %263 = vector.load %arg10[%c3_154, %262, %c0_155, %c0_156] : memref<4x8x2x32xf32, #tpu.memory_space<vmem>>, vector<1x1x2x32xf32>
    %264 = vector.shape_cast %263 : vector<1x1x2x32xf32> to vector<2x32xf32>
    %cst_157 = arith.constant dense<0.000000e+00> : vector<2x32xf32>
    %265 = tpu.matmul %231, %53, %cst_157 {dimension_numbers = #tpu.dot_dimension_numbers<[1], [0], [0], [1], [0, 0, 1, 1], [], []>} : vector<2x32xf32>, vector<32x32xf32>, vector<2x32xf32> -> vector<2x32xf32>
    %266 = arith.addf %264, %265 : vector<2x32xf32>
    %267 = arith.negf %266 : vector<2x32xf32>
    %268 = math.exp %267 : vector<2x32xf32>
    %cst_158 = arith.constant 1.000000e+00 : f32
    %269 = vector.broadcast %cst_158 : f32 to vector<2x32xf32>
    %270 = arith.addf %269, %268 : vector<2x32xf32>
    %271 = arith.divf %269, %270 : vector<2x32xf32>
    %272 = arith.mulf %255, %229 : vector<2x32xf32>
    %273 = arith.mulf %245, %261 : vector<2x32xf32>
    %274 = arith.addf %272, %273 : vector<2x32xf32>
    %275 = math.tanh %274 : vector<2x32xf32>
    %276 = arith.mulf %271, %275 : vector<2x32xf32>
    %277 = arith.index_cast %c4_i32 : i32 to index
    %c0_159 = arith.constant 0 : index
    %c0_160 = arith.constant 0 : index
    %278 = vector.load %arg11[%277, %c0_159, %c0_160] : memref<8x2x32xf32, #tpu.memory_space<vmem>>, vector<1x2x32xf32>
    %279 = vector.shape_cast %278 : vector<1x2x32xf32> to vector<2x32xf32>
    %280 = vector.shape_cast %276 : vector<2x32xf32> to vector<1x2x32xf32>
    tpu.vector_store %arg11[%277, %c0_159, %c0_160], %280 {strides = array<i32>} : memref<8x2x32xf32, #tpu.memory_space<vmem>>, vector<1x2x32xf32>,
    %c5_i32 = arith.constant 5 : i32
    %c0_161 = arith.constant 0 : index
    %281 = arith.index_cast %c5_i32 : i32 to index
    %c0_162 = arith.constant 0 : index
    %c0_163 = arith.constant 0 : index
    %282 = vector.load %arg10[%c0_161, %281, %c0_162, %c0_163] : memref<4x8x2x32xf32, #tpu.memory_space<vmem>>, vector<1x1x2x32xf32>
    %283 = vector.shape_cast %282 : vector<1x1x2x32xf32> to vector<2x32xf32>
    %cst_164 = arith.constant dense<0.000000e+00> : vector<2x32xf32>
    %284 = tpu.matmul %276, %47, %cst_164 {dimension_numbers = #tpu.dot_dimension_numbers<[1], [0], [0], [1], [0, 0, 1, 1], [], []>} : vector<2x32xf32>, vector<32x32xf32>, vector<2x32xf32> -> vector<2x32xf32>
    %285 = arith.addf %283, %284 : vector<2x32xf32>
    %286 = arith.negf %285 : vector<2x32xf32>
    %287 = math.exp %286 : vector<2x32xf32>
    %cst_165 = arith.constant 1.000000e+00 : f32
    %288 = vector.broadcast %cst_165 : f32 to vector<2x32xf32>
    %289 = arith.addf %288, %287 : vector<2x32xf32>
    %290 = arith.divf %288, %289 : vector<2x32xf32>
    %c1_166 = arith.constant 1 : index
    %291 = arith.index_cast %c5_i32 : i32 to index
    %c0_167 = arith.constant 0 : index
    %c0_168 = arith.constant 0 : index
    %292 = vector.load %arg10[%c1_166, %291, %c0_167, %c0_168] : memref<4x8x2x32xf32, #tpu.memory_space<vmem>>, vector<1x1x2x32xf32>
    %293 = vector.shape_cast %292 : vector<1x1x2x32xf32> to vector<2x32xf32>
    %cst_169 = arith.constant dense<0.000000e+00> : vector<2x32xf32>
    %294 = tpu.matmul %276, %49, %cst_169 {dimension_numbers = #tpu.dot_dimension_numbers<[1], [0], [0], [1], [0, 0, 1, 1], [], []>} : vector<2x32xf32>, vector<32x32xf32>, vector<2x32xf32> -> vector<2x32xf32>
    %295 = arith.addf %293, %294 : vector<2x32xf32>
    %296 = arith.negf %295 : vector<2x32xf32>
    %297 = math.exp %296 : vector<2x32xf32>
    %cst_170 = arith.constant 1.000000e+00 : f32
    %298 = vector.broadcast %cst_170 : f32 to vector<2x32xf32>
    %299 = arith.addf %298, %297 : vector<2x32xf32>
    %300 = arith.divf %298, %299 : vector<2x32xf32>
    %c2_171 = arith.constant 2 : index
    %301 = arith.index_cast %c5_i32 : i32 to index
    %c0_172 = arith.constant 0 : index
    %c0_173 = arith.constant 0 : index
    %302 = vector.load %arg10[%c2_171, %301, %c0_172, %c0_173] : memref<4x8x2x32xf32, #tpu.memory_space<vmem>>, vector<1x1x2x32xf32>
    %303 = vector.shape_cast %302 : vector<1x1x2x32xf32> to vector<2x32xf32>
    %cst_174 = arith.constant dense<0.000000e+00> : vector<2x32xf32>
    %304 = tpu.matmul %276, %51, %cst_174 {dimension_numbers = #tpu.dot_dimension_numbers<[1], [0], [0], [1], [0, 0, 1, 1], [], []>} : vector<2x32xf32>, vector<32x32xf32>, vector<2x32xf32> -> vector<2x32xf32>
    %305 = arith.addf %303, %304 : vector<2x32xf32>
    %306 = math.tanh %305 : vector<2x32xf32>
    %c3_175 = arith.constant 3 : index
    %307 = arith.index_cast %c5_i32 : i32 to index
    %c0_176 = arith.constant 0 : index
    %c0_177 = arith.constant 0 : index
    %308 = vector.load %arg10[%c3_175, %307, %c0_176, %c0_177] : memref<4x8x2x32xf32, #tpu.memory_space<vmem>>, vector<1x1x2x32xf32>
    %309 = vector.shape_cast %308 : vector<1x1x2x32xf32> to vector<2x32xf32>
    %cst_178 = arith.constant dense<0.000000e+00> : vector<2x32xf32>
    %310 = tpu.matmul %276, %53, %cst_178 {dimension_numbers = #tpu.dot_dimension_numbers<[1], [0], [0], [1], [0, 0, 1, 1], [], []>} : vector<2x32xf32>, vector<32x32xf32>, vector<2x32xf32> -> vector<2x32xf32>
    %311 = arith.addf %309, %310 : vector<2x32xf32>
    %312 = arith.negf %311 : vector<2x32xf32>
    %313 = math.exp %312 : vector<2x32xf32>
    %cst_179 = arith.constant 1.000000e+00 : f32
    %314 = vector.broadcast %cst_179 : f32 to vector<2x32xf32>
    %315 = arith.addf %314, %313 : vector<2x32xf32>
    %316 = arith.divf %314, %315 : vector<2x32xf32>
    %317 = arith.mulf %300, %274 : vector<2x32xf32>
    %318 = arith.mulf %290, %306 : vector<2x32xf32>
    %319 = arith.addf %317, %318 : vector<2x32xf32>
    %320 = math.tanh %319 : vector<2x32xf32>
    %321 = arith.mulf %316, %320 : vector<2x32xf32>
    %322 = arith.index_cast %c5_i32 : i32 to index
    %c0_180 = arith.constant 0 : index
    %c0_181 = arith.constant 0 : index
    %323 = vector.load %arg11[%322, %c0_180, %c0_181] : memref<8x2x32xf32, #tpu.memory_space<vmem>>, vector<1x2x32xf32>
    %324 = vector.shape_cast %323 : vector<1x2x32xf32> to vector<2x32xf32>
    %325 = vector.shape_cast %321 : vector<2x32xf32> to vector<1x2x32xf32>
    tpu.vector_store %arg11[%322, %c0_180, %c0_181], %325 {strides = array<i32>} : memref<8x2x32xf32, #tpu.memory_space<vmem>>, vector<1x2x32xf32>,
    %c6_i32 = arith.constant 6 : i32
    %c0_182 = arith.constant 0 : index
    %326 = arith.index_cast %c6_i32 : i32 to index
    %c0_183 = arith.constant 0 : index
    %c0_184 = arith.constant 0 : index
    %327 = vector.load %arg10[%c0_182, %326, %c0_183, %c0_184] : memref<4x8x2x32xf32, #tpu.memory_space<vmem>>, vector<1x1x2x32xf32>
    %328 = vector.shape_cast %327 : vector<1x1x2x32xf32> to vector<2x32xf32>
    %cst_185 = arith.constant dense<0.000000e+00> : vector<2x32xf32>
    %329 = tpu.matmul %321, %47, %cst_185 {dimension_numbers = #tpu.dot_dimension_numbers<[1], [0], [0], [1], [0, 0, 1, 1], [], []>} : vector<2x32xf32>, vector<32x32xf32>, vector<2x32xf32> -> vector<2x32xf32>
    %330 = arith.addf %328, %329 : vector<2x32xf32>
    %331 = arith.negf %330 : vector<2x32xf32>
    %332 = math.exp %331 : vector<2x32xf32>
    %cst_186 = arith.constant 1.000000e+00 : f32
    %333 = vector.broadcast %cst_186 : f32 to vector<2x32xf32>
    %334 = arith.addf %333, %332 : vector<2x32xf32>
    %335 = arith.divf %333, %334 : vector<2x32xf32>
    %c1_187 = arith.constant 1 : index
    %336 = arith.index_cast %c6_i32 : i32 to index
    %c0_188 = arith.constant 0 : index
    %c0_189 = arith.constant 0 : index
    %337 = vector.load %arg10[%c1_187, %336, %c0_188, %c0_189] : memref<4x8x2x32xf32, #tpu.memory_space<vmem>>, vector<1x1x2x32xf32>
    %338 = vector.shape_cast %337 : vector<1x1x2x32xf32> to vector<2x32xf32>
    %cst_190 = arith.constant dense<0.000000e+00> : vector<2x32xf32>
    %339 = tpu.matmul %321, %49, %cst_190 {dimension_numbers = #tpu.dot_dimension_numbers<[1], [0], [0], [1], [0, 0, 1, 1], [], []>} : vector<2x32xf32>, vector<32x32xf32>, vector<2x32xf32> -> vector<2x32xf32>
    %340 = arith.addf %338, %339 : vector<2x32xf32>
    %341 = arith.negf %340 : vector<2x32xf32>
    %342 = math.exp %341 : vector<2x32xf32>
    %cst_191 = arith.constant 1.000000e+00 : f32
    %343 = vector.broadcast %cst_191 : f32 to vector<2x32xf32>
    %344 = arith.addf %343, %342 : vector<2x32xf32>
    %345 = arith.divf %343, %344 : vector<2x32xf32>
    %c2_192 = arith.constant 2 : index
    %346 = arith.index_cast %c6_i32 : i32 to index
    %c0_193 = arith.constant 0 : index
    %c0_194 = arith.constant 0 : index
    %347 = vector.load %arg10[%c2_192, %346, %c0_193, %c0_194] : memref<4x8x2x32xf32, #tpu.memory_space<vmem>>, vector<1x1x2x32xf32>
    %348 = vector.shape_cast %347 : vector<1x1x2x32xf32> to vector<2x32xf32>
    %cst_195 = arith.constant dense<0.000000e+00> : vector<2x32xf32>
    %349 = tpu.matmul %321, %51, %cst_195 {dimension_numbers = #tpu.dot_dimension_numbers<[1], [0], [0], [1], [0, 0, 1, 1], [], []>} : vector<2x32xf32>, vector<32x32xf32>, vector<2x32xf32> -> vector<2x32xf32>
    %350 = arith.addf %348, %349 : vector<2x32xf32>
    %351 = math.tanh %350 : vector<2x32xf32>
    %c3_196 = arith.constant 3 : index
    %352 = arith.index_cast %c6_i32 : i32 to index
    %c0_197 = arith.constant 0 : index
    %c0_198 = arith.constant 0 : index
    %353 = vector.load %arg10[%c3_196, %352, %c0_197, %c0_198] : memref<4x8x2x32xf32, #tpu.memory_space<vmem>>, vector<1x1x2x32xf32>
    %354 = vector.shape_cast %353 : vector<1x1x2x32xf32> to vector<2x32xf32>
    %cst_199 = arith.constant dense<0.000000e+00> : vector<2x32xf32>
    %355 = tpu.matmul %321, %53, %cst_199 {dimension_numbers = #tpu.dot_dimension_numbers<[1], [0], [0], [1], [0, 0, 1, 1], [], []>} : vector<2x32xf32>, vector<32x32xf32>, vector<2x32xf32> -> vector<2x32xf32>
    %356 = arith.addf %354, %355 : vector<2x32xf32>
    %357 = arith.negf %356 : vector<2x32xf32>
    %358 = math.exp %357 : vector<2x32xf32>
    %cst_200 = arith.constant 1.000000e+00 : f32
    %359 = vector.broadcast %cst_200 : f32 to vector<2x32xf32>
    %360 = arith.addf %359, %358 : vector<2x32xf32>
    %361 = arith.divf %359, %360 : vector<2x32xf32>
    %362 = arith.mulf %345, %319 : vector<2x32xf32>
    %363 = arith.mulf %335, %351 : vector<2x32xf32>
    %364 = arith.addf %362, %363 : vector<2x32xf32>
    %365 = math.tanh %364 : vector<2x32xf32>
    %366 = arith.mulf %361, %365 : vector<2x32xf32>
    %367 = arith.index_cast %c6_i32 : i32 to index
    %c0_201 = arith.constant 0 : index
    %c0_202 = arith.constant 0 : index
    %368 = vector.load %arg11[%367, %c0_201, %c0_202] : memref<8x2x32xf32, #tpu.memory_space<vmem>>, vector<1x2x32xf32>
    %369 = vector.shape_cast %368 : vector<1x2x32xf32> to vector<2x32xf32>
    %370 = vector.shape_cast %366 : vector<2x32xf32> to vector<1x2x32xf32>
    tpu.vector_store %arg11[%367, %c0_201, %c0_202], %370 {strides = array<i32>} : memref<8x2x32xf32, #tpu.memory_space<vmem>>, vector<1x2x32xf32>,
    %c7_i32 = arith.constant 7 : i32
    %c0_203 = arith.constant 0 : index
    %371 = arith.index_cast %c7_i32 : i32 to index
    %c0_204 = arith.constant 0 : index
    %c0_205 = arith.constant 0 : index
    %372 = vector.load %arg10[%c0_203, %371, %c0_204, %c0_205] : memref<4x8x2x32xf32, #tpu.memory_space<vmem>>, vector<1x1x2x32xf32>
    %373 = vector.shape_cast %372 : vector<1x1x2x32xf32> to vector<2x32xf32>
    %cst_206 = arith.constant dense<0.000000e+00> : vector<2x32xf32>
    %374 = tpu.matmul %366, %47, %cst_206 {dimension_numbers = #tpu.dot_dimension_numbers<[1], [0], [0], [1], [0, 0, 1, 1], [], []>} : vector<2x32xf32>, vector<32x32xf32>, vector<2x32xf32> -> vector<2x32xf32>
    %375 = arith.addf %373, %374 : vector<2x32xf32>
    %376 = arith.negf %375 : vector<2x32xf32>
    %377 = math.exp %376 : vector<2x32xf32>
    %cst_207 = arith.constant 1.000000e+00 : f32
    %378 = vector.broadcast %cst_207 : f32 to vector<2x32xf32>
    %379 = arith.addf %378, %377 : vector<2x32xf32>
    %380 = arith.divf %378, %379 : vector<2x32xf32>
    %c1_208 = arith.constant 1 : index
    %381 = arith.index_cast %c7_i32 : i32 to index
    %c0_209 = arith.constant 0 : index
    %c0_210 = arith.constant 0 : index
    %382 = vector.load %arg10[%c1_208, %381, %c0_209, %c0_210] : memref<4x8x2x32xf32, #tpu.memory_space<vmem>>, vector<1x1x2x32xf32>
    %383 = vector.shape_cast %382 : vector<1x1x2x32xf32> to vector<2x32xf32>
    %cst_211 = arith.constant dense<0.000000e+00> : vector<2x32xf32>
    %384 = tpu.matmul %366, %49, %cst_211 {dimension_numbers = #tpu.dot_dimension_numbers<[1], [0], [0], [1], [0, 0, 1, 1], [], []>} : vector<2x32xf32>, vector<32x32xf32>, vector<2x32xf32> -> vector<2x32xf32>
    %385 = arith.addf %383, %384 : vector<2x32xf32>
    %386 = arith.negf %385 : vector<2x32xf32>
    %387 = math.exp %386 : vector<2x32xf32>
    %cst_212 = arith.constant 1.000000e+00 : f32
    %388 = vector.broadcast %cst_212 : f32 to vector<2x32xf32>
    %389 = arith.addf %388, %387 : vector<2x32xf32>
    %390 = arith.divf %388, %389 : vector<2x32xf32>
    %c2_213 = arith.constant 2 : index
    %391 = arith.index_cast %c7_i32 : i32 to index
    %c0_214 = arith.constant 0 : index
    %c0_215 = arith.constant 0 : index
    %392 = vector.load %arg10[%c2_213, %391, %c0_214, %c0_215] : memref<4x8x2x32xf32, #tpu.memory_space<vmem>>, vector<1x1x2x32xf32>
    %393 = vector.shape_cast %392 : vector<1x1x2x32xf32> to vector<2x32xf32>
    %cst_216 = arith.constant dense<0.000000e+00> : vector<2x32xf32>
    %394 = tpu.matmul %366, %51, %cst_216 {dimension_numbers = #tpu.dot_dimension_numbers<[1], [0], [0], [1], [0, 0, 1, 1], [], []>} : vector<2x32xf32>, vector<32x32xf32>, vector<2x32xf32> -> vector<2x32xf32>
    %395 = arith.addf %393, %394 : vector<2x32xf32>
    %396 = math.tanh %395 : vector<2x32xf32>
    %c3_217 = arith.constant 3 : index
    %397 = arith.index_cast %c7_i32 : i32 to index
    %c0_218 = arith.constant 0 : index
    %c0_219 = arith.constant 0 : index
    %398 = vector.load %arg10[%c3_217, %397, %c0_218, %c0_219] : memref<4x8x2x32xf32, #tpu.memory_space<vmem>>, vector<1x1x2x32xf32>
    %399 = vector.shape_cast %398 : vector<1x1x2x32xf32> to vector<2x32xf32>
    %cst_220 = arith.constant dense<0.000000e+00> : vector<2x32xf32>
    %400 = tpu.matmul %366, %53, %cst_220 {dimension_numbers = #tpu.dot_dimension_numbers<[1], [0], [0], [1], [0, 0, 1, 1], [], []>} : vector<2x32xf32>, vector<32x32xf32>, vector<2x32xf32> -> vector<2x32xf32>
    %401 = arith.addf %399, %400 : vector<2x32xf32>
    %402 = arith.negf %401 : vector<2x32xf32>
    %403 = math.exp %402 : vector<2x32xf32>
    %cst_221 = arith.constant 1.000000e+00 : f32
    %404 = vector.broadcast %cst_221 : f32 to vector<2x32xf32>
    %405 = arith.addf %404, %403 : vector<2x32xf32>
    %406 = arith.divf %404, %405 : vector<2x32xf32>
    %407 = arith.mulf %390, %364 : vector<2x32xf32>
    %408 = arith.mulf %380, %396 : vector<2x32xf32>
    %409 = arith.addf %407, %408 : vector<2x32xf32>
    %410 = math.tanh %409 : vector<2x32xf32>
    %411 = arith.mulf %406, %410 : vector<2x32xf32>
    %412 = arith.index_cast %c7_i32 : i32 to index
    %c0_222 = arith.constant 0 : index
    %c0_223 = arith.constant 0 : index
    %413 = vector.load %arg11[%412, %c0_222, %c0_223] : memref<8x2x32xf32, #tpu.memory_space<vmem>>, vector<1x2x32xf32>
    %414 = vector.shape_cast %413 : vector<1x2x32xf32> to vector<2x32xf32>
    %415 = vector.shape_cast %411 : vector<2x32xf32> to vector<1x2x32xf32>
    tpu.vector_store %arg11[%412, %c0_222, %c0_223], %415 {strides = array<i32>} : memref<8x2x32xf32, #tpu.memory_space<vmem>>, vector<1x2x32xf32>,
    %c8_i32 = arith.constant 8 : i32
    %c0_224 = arith.constant 0 : index
    %c0_225 = arith.constant 0 : index
    %c0_226 = arith.constant 0 : index
    %416 = vector.load %arg11[%c0_224, %c0_225, %c0_226] : memref<8x2x32xf32, #tpu.memory_space<vmem>>, vector<8x2x32xf32>
    %417 = vector.shape_cast %416 : vector<8x2x32xf32> to vector<16x32xf32>
    %c0_227 = arith.constant 0 : index
    %c0_228 = arith.constant 0 : index
    %c0_229 = arith.constant 0 : index
    %418 = vector.load %arg4[%c0_227, %c0_228, %c0_229] : memref<4x32x32xf32, #tpu.memory_space<vmem>>, vector<1x32x32xf32>
    %419 = vector.shape_cast %418 : vector<1x32x32xf32> to vector<32x32xf32>
    %cst_230 = arith.constant dense<0.000000e+00> : vector<16x32xf32>
    %420 = tpu.matmul %417, %419, %cst_230 {dimension_numbers = #tpu.dot_dimension_numbers<[1], [0], [0], [1], [0, 0, 1, 1], [], []>} : vector<16x32xf32>, vector<32x32xf32>, vector<16x32xf32> -> vector<16x32xf32>
    %c0_231 = arith.constant 0 : index
    %c0_232 = arith.constant 0 : index
    %c0_233 = arith.constant 0 : index
    %421 = vector.load %arg6[%c0_231, %c0_232, %c0_233] : memref<4x1x32xf32, #tpu.memory_space<vmem>>, vector<1x1x32xf32>
    %422 = vector.shape_cast %421 : vector<1x1x32xf32> to vector<1x32xf32>
    %423 = vector.broadcast %422 : vector<1x32xf32> to vector<16x32xf32>
    %424 = arith.addf %420, %423 : vector<16x32xf32>
    %425 = vector.shape_cast %424 : vector<16x32xf32> to vector<8x2x32xf32>
    %c0_234 = arith.constant 0 : index
    %c0_235 = arith.constant 0 : index
    %c0_236 = arith.constant 0 : index
    %c0_237 = arith.constant 0 : index
    %426 = vector.load %arg10[%c0_234, %c0_235, %c0_236, %c0_237] : memref<4x8x2x32xf32, #tpu.memory_space<vmem>>, vector<1x8x2x32xf32>
    %427 = vector.shape_cast %426 : vector<1x8x2x32xf32> to vector<8x2x32xf32>
    %428 = vector.shape_cast %425 : vector<8x2x32xf32> to vector<1x8x2x32xf32>
    tpu.vector_store %arg10[%c0_234, %c0_235, %c0_236, %c0_237], %428 {strides = array<i32>} : memref<4x8x2x32xf32, #tpu.memory_space<vmem>>, vector<1x8x2x32xf32>,
    %c1_238 = arith.constant 1 : index
    %c0_239 = arith.constant 0 : index
    %c0_240 = arith.constant 0 : index
    %429 = vector.load %arg4[%c1_238, %c0_239, %c0_240] : memref<4x32x32xf32, #tpu.memory_space<vmem>>, vector<1x32x32xf32>
    %430 = vector.shape_cast %429 : vector<1x32x32xf32> to vector<32x32xf32>
    %cst_241 = arith.constant dense<0.000000e+00> : vector<16x32xf32>
    %431 = tpu.matmul %417, %430, %cst_241 {dimension_numbers = #tpu.dot_dimension_numbers<[1], [0], [0], [1], [0, 0, 1, 1], [], []>} : vector<16x32xf32>, vector<32x32xf32>, vector<16x32xf32> -> vector<16x32xf32>
    %c1_242 = arith.constant 1 : index
    %c0_243 = arith.constant 0 : index
    %c0_244 = arith.constant 0 : index
    %432 = vector.load %arg6[%c1_242, %c0_243, %c0_244] : memref<4x1x32xf32, #tpu.memory_space<vmem>>, vector<1x1x32xf32>
    %433 = vector.shape_cast %432 : vector<1x1x32xf32> to vector<1x32xf32>
    %434 = vector.broadcast %433 : vector<1x32xf32> to vector<16x32xf32>
    %435 = arith.addf %431, %434 : vector<16x32xf32>
    %436 = vector.shape_cast %435 : vector<16x32xf32> to vector<8x2x32xf32>
    %c1_245 = arith.constant 1 : index
    %c0_246 = arith.constant 0 : index
    %c0_247 = arith.constant 0 : index
    %c0_248 = arith.constant 0 : index
    %437 = vector.load %arg10[%c1_245, %c0_246, %c0_247, %c0_248] : memref<4x8x2x32xf32, #tpu.memory_space<vmem>>, vector<1x8x2x32xf32>
    %438 = vector.shape_cast %437 : vector<1x8x2x32xf32> to vector<8x2x32xf32>
    %439 = vector.shape_cast %436 : vector<8x2x32xf32> to vector<1x8x2x32xf32>
    tpu.vector_store %arg10[%c1_245, %c0_246, %c0_247, %c0_248], %439 {strides = array<i32>} : memref<4x8x2x32xf32, #tpu.memory_space<vmem>>, vector<1x8x2x32xf32>,
    %c2_249 = arith.constant 2 : index
    %c0_250 = arith.constant 0 : index
    %c0_251 = arith.constant 0 : index
    %440 = vector.load %arg4[%c2_249, %c0_250, %c0_251] : memref<4x32x32xf32, #tpu.memory_space<vmem>>, vector<1x32x32xf32>
    %441 = vector.shape_cast %440 : vector<1x32x32xf32> to vector<32x32xf32>
    %cst_252 = arith.constant dense<0.000000e+00> : vector<16x32xf32>
    %442 = tpu.matmul %417, %441, %cst_252 {dimension_numbers = #tpu.dot_dimension_numbers<[1], [0], [0], [1], [0, 0, 1, 1], [], []>} : vector<16x32xf32>, vector<32x32xf32>, vector<16x32xf32> -> vector<16x32xf32>
    %c2_253 = arith.constant 2 : index
    %c0_254 = arith.constant 0 : index
    %c0_255 = arith.constant 0 : index
    %443 = vector.load %arg6[%c2_253, %c0_254, %c0_255] : memref<4x1x32xf32, #tpu.memory_space<vmem>>, vector<1x1x32xf32>
    %444 = vector.shape_cast %443 : vector<1x1x32xf32> to vector<1x32xf32>
    %445 = vector.broadcast %444 : vector<1x32xf32> to vector<16x32xf32>
    %446 = arith.addf %442, %445 : vector<16x32xf32>
    %447 = vector.shape_cast %446 : vector<16x32xf32> to vector<8x2x32xf32>
    %c2_256 = arith.constant 2 : index
    %c0_257 = arith.constant 0 : index
    %c0_258 = arith.constant 0 : index
    %c0_259 = arith.constant 0 : index
    %448 = vector.load %arg10[%c2_256, %c0_257, %c0_258, %c0_259] : memref<4x8x2x32xf32, #tpu.memory_space<vmem>>, vector<1x8x2x32xf32>
    %449 = vector.shape_cast %448 : vector<1x8x2x32xf32> to vector<8x2x32xf32>
    %450 = vector.shape_cast %447 : vector<8x2x32xf32> to vector<1x8x2x32xf32>
    tpu.vector_store %arg10[%c2_256, %c0_257, %c0_258, %c0_259], %450 {strides = array<i32>} : memref<4x8x2x32xf32, #tpu.memory_space<vmem>>, vector<1x8x2x32xf32>,
    %c3_260 = arith.constant 3 : index
    %c0_261 = arith.constant 0 : index
    %c0_262 = arith.constant 0 : index
    %451 = vector.load %arg4[%c3_260, %c0_261, %c0_262] : memref<4x32x32xf32, #tpu.memory_space<vmem>>, vector<1x32x32xf32>
    %452 = vector.shape_cast %451 : vector<1x32x32xf32> to vector<32x32xf32>
    %cst_263 = arith.constant dense<0.000000e+00> : vector<16x32xf32>
    %453 = tpu.matmul %417, %452, %cst_263 {dimension_numbers = #tpu.dot_dimension_numbers<[1], [0], [0], [1], [0, 0, 1, 1], [], []>} : vector<16x32xf32>, vector<32x32xf32>, vector<16x32xf32> -> vector<16x32xf32>
    %c3_264 = arith.constant 3 : index
    %c0_265 = arith.constant 0 : index
    %c0_266 = arith.constant 0 : index
    %454 = vector.load %arg6[%c3_264, %c0_265, %c0_266] : memref<4x1x32xf32, #tpu.memory_space<vmem>>, vector<1x1x32xf32>
    %455 = vector.shape_cast %454 : vector<1x1x32xf32> to vector<1x32xf32>
    %456 = vector.broadcast %455 : vector<1x32xf32> to vector<16x32xf32>
    %457 = arith.addf %453, %456 : vector<16x32xf32>
    %458 = vector.shape_cast %457 : vector<16x32xf32> to vector<8x2x32xf32>
    %c3_267 = arith.constant 3 : index
    %c0_268 = arith.constant 0 : index
    %c0_269 = arith.constant 0 : index
    %c0_270 = arith.constant 0 : index
    %459 = vector.load %arg10[%c3_267, %c0_268, %c0_269, %c0_270] : memref<4x8x2x32xf32, #tpu.memory_space<vmem>>, vector<1x8x2x32xf32>
    %460 = vector.shape_cast %459 : vector<1x8x2x32xf32> to vector<8x2x32xf32>
    %461 = vector.shape_cast %458 : vector<8x2x32xf32> to vector<1x8x2x32xf32>
    tpu.vector_store %arg10[%c3_267, %c0_268, %c0_269, %c0_270], %461 {strides = array<i32>} : memref<4x8x2x32xf32, #tpu.memory_space<vmem>>, vector<1x8x2x32xf32>,
    %c0_271 = arith.constant 0 : index
    %c0_272 = arith.constant 0 : index
    %c0_273 = arith.constant 0 : index
    %462 = vector.load %arg5[%c0_271, %c0_272, %c0_273] : memref<4x32x32xf32, #tpu.memory_space<vmem>>, vector<1x32x32xf32>
    %463 = vector.shape_cast %462 : vector<1x32x32xf32> to vector<32x32xf32>
    %c1_274 = arith.constant 1 : index
    %c0_275 = arith.constant 0 : index
    %c0_276 = arith.constant 0 : index
    %464 = vector.load %arg5[%c1_274, %c0_275, %c0_276] : memref<4x32x32xf32, #tpu.memory_space<vmem>>, vector<1x32x32xf32>
    %465 = vector.shape_cast %464 : vector<1x32x32xf32> to vector<32x32xf32>
    %c2_277 = arith.constant 2 : index
    %c0_278 = arith.constant 0 : index
    %c0_279 = arith.constant 0 : index
    %466 = vector.load %arg5[%c2_277, %c0_278, %c0_279] : memref<4x32x32xf32, #tpu.memory_space<vmem>>, vector<1x32x32xf32>
    %467 = vector.shape_cast %466 : vector<1x32x32xf32> to vector<32x32xf32>
    %c3_280 = arith.constant 3 : index
    %c0_281 = arith.constant 0 : index
    %c0_282 = arith.constant 0 : index
    %468 = vector.load %arg5[%c3_280, %c0_281, %c0_282] : memref<4x32x32xf32, #tpu.memory_space<vmem>>, vector<1x32x32xf32>
    %469 = vector.shape_cast %468 : vector<1x32x32xf32> to vector<32x32xf32>
    %cst_283 = arith.constant 0.000000e+00 : f32
    %470 = vector.broadcast %cst_283 : f32 to vector<2x32xf32>
    %cst_284 = arith.constant 0.000000e+00 : f32
    %471 = vector.broadcast %cst_284 : f32 to vector<2x32xf32>
    %c0_i32_285 = arith.constant 0 : i32
    %c0_286 = arith.constant 0 : index
    %472 = arith.index_cast %c0_i32_285 : i32 to index
    %c0_287 = arith.constant 0 : index
    %c0_288 = arith.constant 0 : index
    %473 = vector.load %arg10[%c0_286, %472, %c0_287, %c0_288] : memref<4x8x2x32xf32, #tpu.memory_space<vmem>>, vector<1x1x2x32xf32>
    %474 = vector.shape_cast %473 : vector<1x1x2x32xf32> to vector<2x32xf32>
    %cst_289 = arith.constant dense<0.000000e+00> : vector<2x32xf32>
    %475 = tpu.matmul %470, %463, %cst_289 {dimension_numbers = #tpu.dot_dimension_numbers<[1], [0], [0], [1], [0, 0, 1, 1], [], []>} : vector<2x32xf32>, vector<32x32xf32>, vector<2x32xf32> -> vector<2x32xf32>
    %476 = arith.addf %474, %475 : vector<2x32xf32>
    %477 = arith.negf %476 : vector<2x32xf32>
    %478 = math.exp %477 : vector<2x32xf32>
    %cst_290 = arith.constant 1.000000e+00 : f32
    %479 = vector.broadcast %cst_290 : f32 to vector<2x32xf32>
    %480 = arith.addf %479, %478 : vector<2x32xf32>
    %481 = arith.divf %479, %480 : vector<2x32xf32>
    %c1_291 = arith.constant 1 : index
    %482 = arith.index_cast %c0_i32_285 : i32 to index
    %c0_292 = arith.constant 0 : index
    %c0_293 = arith.constant 0 : index
    %483 = vector.load %arg10[%c1_291, %482, %c0_292, %c0_293] : memref<4x8x2x32xf32, #tpu.memory_space<vmem>>, vector<1x1x2x32xf32>
    %484 = vector.shape_cast %483 : vector<1x1x2x32xf32> to vector<2x32xf32>
    %cst_294 = arith.constant dense<0.000000e+00> : vector<2x32xf32>
    %485 = tpu.matmul %470, %465, %cst_294 {dimension_numbers = #tpu.dot_dimension_numbers<[1], [0], [0], [1], [0, 0, 1, 1], [], []>} : vector<2x32xf32>, vector<32x32xf32>, vector<2x32xf32> -> vector<2x32xf32>
    %486 = arith.addf %484, %485 : vector<2x32xf32>
    %487 = arith.negf %486 : vector<2x32xf32>
    %488 = math.exp %487 : vector<2x32xf32>
    %cst_295 = arith.constant 1.000000e+00 : f32
    %489 = vector.broadcast %cst_295 : f32 to vector<2x32xf32>
    %490 = arith.addf %489, %488 : vector<2x32xf32>
    %491 = arith.divf %489, %490 : vector<2x32xf32>
    %c2_296 = arith.constant 2 : index
    %492 = arith.index_cast %c0_i32_285 : i32 to index
    %c0_297 = arith.constant 0 : index
    %c0_298 = arith.constant 0 : index
    %493 = vector.load %arg10[%c2_296, %492, %c0_297, %c0_298] : memref<4x8x2x32xf32, #tpu.memory_space<vmem>>, vector<1x1x2x32xf32>
    %494 = vector.shape_cast %493 : vector<1x1x2x32xf32> to vector<2x32xf32>
    %cst_299 = arith.constant dense<0.000000e+00> : vector<2x32xf32>
    %495 = tpu.matmul %470, %467, %cst_299 {dimension_numbers = #tpu.dot_dimension_numbers<[1], [0], [0], [1], [0, 0, 1, 1], [], []>} : vector<2x32xf32>, vector<32x32xf32>, vector<2x32xf32> -> vector<2x32xf32>
    %496 = arith.addf %494, %495 : vector<2x32xf32>
    %497 = math.tanh %496 : vector<2x32xf32>
    %c3_300 = arith.constant 3 : index
    %498 = arith.index_cast %c0_i32_285 : i32 to index
    %c0_301 = arith.constant 0 : index
    %c0_302 = arith.constant 0 : index
    %499 = vector.load %arg10[%c3_300, %498, %c0_301, %c0_302] : memref<4x8x2x32xf32, #tpu.memory_space<vmem>>, vector<1x1x2x32xf32>
    %500 = vector.shape_cast %499 : vector<1x1x2x32xf32> to vector<2x32xf32>
    %cst_303 = arith.constant dense<0.000000e+00> : vector<2x32xf32>
    %501 = tpu.matmul %470, %469, %cst_303 {dimension_numbers = #tpu.dot_dimension_numbers<[1], [0], [0], [1], [0, 0, 1, 1], [], []>} : vector<2x32xf32>, vector<32x32xf32>, vector<2x32xf32> -> vector<2x32xf32>
    %502 = arith.addf %500, %501 : vector<2x32xf32>
    %503 = arith.negf %502 : vector<2x32xf32>
    %504 = math.exp %503 : vector<2x32xf32>
    %cst_304 = arith.constant 1.000000e+00 : f32
    %505 = vector.broadcast %cst_304 : f32 to vector<2x32xf32>
    %506 = arith.addf %505, %504 : vector<2x32xf32>
    %507 = arith.divf %505, %506 : vector<2x32xf32>
    %508 = arith.mulf %491, %471 : vector<2x32xf32>
    %509 = arith.mulf %481, %497 : vector<2x32xf32>
    %510 = arith.addf %508, %509 : vector<2x32xf32>
    %511 = math.tanh %510 : vector<2x32xf32>
    %512 = arith.mulf %507, %511 : vector<2x32xf32>
    %513 = arith.index_cast %c0_i32_285 : i32 to index
    %c0_305 = arith.constant 0 : index
    %c0_306 = arith.constant 0 : index
    %514 = vector.load %arg11[%513, %c0_305, %c0_306] : memref<8x2x32xf32, #tpu.memory_space<vmem>>, vector<1x2x32xf32>
    %515 = vector.shape_cast %514 : vector<1x2x32xf32> to vector<2x32xf32>
    %516 = vector.shape_cast %512 : vector<2x32xf32> to vector<1x2x32xf32>
    tpu.vector_store %arg11[%513, %c0_305, %c0_306], %516 {strides = array<i32>} : memref<8x2x32xf32, #tpu.memory_space<vmem>>, vector<1x2x32xf32>,
    %c1_i32_307 = arith.constant 1 : i32
    %c0_308 = arith.constant 0 : index
    %517 = arith.index_cast %c1_i32_307 : i32 to index
    %c0_309 = arith.constant 0 : index
    %c0_310 = arith.constant 0 : index
    %518 = vector.load %arg10[%c0_308, %517, %c0_309, %c0_310] : memref<4x8x2x32xf32, #tpu.memory_space<vmem>>, vector<1x1x2x32xf32>
    %519 = vector.shape_cast %518 : vector<1x1x2x32xf32> to vector<2x32xf32>
    %cst_311 = arith.constant dense<0.000000e+00> : vector<2x32xf32>
    %520 = tpu.matmul %512, %463, %cst_311 {dimension_numbers = #tpu.dot_dimension_numbers<[1], [0], [0], [1], [0, 0, 1, 1], [], []>} : vector<2x32xf32>, vector<32x32xf32>, vector<2x32xf32> -> vector<2x32xf32>
    %521 = arith.addf %519, %520 : vector<2x32xf32>
    %522 = arith.negf %521 : vector<2x32xf32>
    %523 = math.exp %522 : vector<2x32xf32>
    %cst_312 = arith.constant 1.000000e+00 : f32
    %524 = vector.broadcast %cst_312 : f32 to vector<2x32xf32>
    %525 = arith.addf %524, %523 : vector<2x32xf32>
    %526 = arith.divf %524, %525 : vector<2x32xf32>
    %c1_313 = arith.constant 1 : index
    %527 = arith.index_cast %c1_i32_307 : i32 to index
    %c0_314 = arith.constant 0 : index
    %c0_315 = arith.constant 0 : index
    %528 = vector.load %arg10[%c1_313, %527, %c0_314, %c0_315] : memref<4x8x2x32xf32, #tpu.memory_space<vmem>>, vector<1x1x2x32xf32>
    %529 = vector.shape_cast %528 : vector<1x1x2x32xf32> to vector<2x32xf32>
    %cst_316 = arith.constant dense<0.000000e+00> : vector<2x32xf32>
    %530 = tpu.matmul %512, %465, %cst_316 {dimension_numbers = #tpu.dot_dimension_numbers<[1], [0], [0], [1], [0, 0, 1, 1], [], []>} : vector<2x32xf32>, vector<32x32xf32>, vector<2x32xf32> -> vector<2x32xf32>
    %531 = arith.addf %529, %530 : vector<2x32xf32>
    %532 = arith.negf %531 : vector<2x32xf32>
    %533 = math.exp %532 : vector<2x32xf32>
    %cst_317 = arith.constant 1.000000e+00 : f32
    %534 = vector.broadcast %cst_317 : f32 to vector<2x32xf32>
    %535 = arith.addf %534, %533 : vector<2x32xf32>
    %536 = arith.divf %534, %535 : vector<2x32xf32>
    %c2_318 = arith.constant 2 : index
    %537 = arith.index_cast %c1_i32_307 : i32 to index
    %c0_319 = arith.constant 0 : index
    %c0_320 = arith.constant 0 : index
    %538 = vector.load %arg10[%c2_318, %537, %c0_319, %c0_320] : memref<4x8x2x32xf32, #tpu.memory_space<vmem>>, vector<1x1x2x32xf32>
    %539 = vector.shape_cast %538 : vector<1x1x2x32xf32> to vector<2x32xf32>
    %cst_321 = arith.constant dense<0.000000e+00> : vector<2x32xf32>
    %540 = tpu.matmul %512, %467, %cst_321 {dimension_numbers = #tpu.dot_dimension_numbers<[1], [0], [0], [1], [0, 0, 1, 1], [], []>} : vector<2x32xf32>, vector<32x32xf32>, vector<2x32xf32> -> vector<2x32xf32>
    %541 = arith.addf %539, %540 : vector<2x32xf32>
    %542 = math.tanh %541 : vector<2x32xf32>
    %c3_322 = arith.constant 3 : index
    %543 = arith.index_cast %c1_i32_307 : i32 to index
    %c0_323 = arith.constant 0 : index
    %c0_324 = arith.constant 0 : index
    %544 = vector.load %arg10[%c3_322, %543, %c0_323, %c0_324] : memref<4x8x2x32xf32, #tpu.memory_space<vmem>>, vector<1x1x2x32xf32>
    %545 = vector.shape_cast %544 : vector<1x1x2x32xf32> to vector<2x32xf32>
    %cst_325 = arith.constant dense<0.000000e+00> : vector<2x32xf32>
    %546 = tpu.matmul %512, %469, %cst_325 {dimension_numbers = #tpu.dot_dimension_numbers<[1], [0], [0], [1], [0, 0, 1, 1], [], []>} : vector<2x32xf32>, vector<32x32xf32>, vector<2x32xf32> -> vector<2x32xf32>
    %547 = arith.addf %545, %546 : vector<2x32xf32>
    %548 = arith.negf %547 : vector<2x32xf32>
    %549 = math.exp %548 : vector<2x32xf32>
    %cst_326 = arith.constant 1.000000e+00 : f32
    %550 = vector.broadcast %cst_326 : f32 to vector<2x32xf32>
    %551 = arith.addf %550, %549 : vector<2x32xf32>
    %552 = arith.divf %550, %551 : vector<2x32xf32>
    %553 = arith.mulf %536, %510 : vector<2x32xf32>
    %554 = arith.mulf %526, %542 : vector<2x32xf32>
    %555 = arith.addf %553, %554 : vector<2x32xf32>
    %556 = math.tanh %555 : vector<2x32xf32>
    %557 = arith.mulf %552, %556 : vector<2x32xf32>
    %558 = arith.index_cast %c1_i32_307 : i32 to index
    %c0_327 = arith.constant 0 : index
    %c0_328 = arith.constant 0 : index
    %559 = vector.load %arg11[%558, %c0_327, %c0_328] : memref<8x2x32xf32, #tpu.memory_space<vmem>>, vector<1x2x32xf32>
    %560 = vector.shape_cast %559 : vector<1x2x32xf32> to vector<2x32xf32>
    %561 = vector.shape_cast %557 : vector<2x32xf32> to vector<1x2x32xf32>
    tpu.vector_store %arg11[%558, %c0_327, %c0_328], %561 {strides = array<i32>} : memref<8x2x32xf32, #tpu.memory_space<vmem>>, vector<1x2x32xf32>,
    %c2_i32_329 = arith.constant 2 : i32
    %c0_330 = arith.constant 0 : index
    %562 = arith.index_cast %c2_i32_329 : i32 to index
    %c0_331 = arith.constant 0 : index
    %c0_332 = arith.constant 0 : index
    %563 = vector.load %arg10[%c0_330, %562, %c0_331, %c0_332] : memref<4x8x2x32xf32, #tpu.memory_space<vmem>>, vector<1x1x2x32xf32>
    %564 = vector.shape_cast %563 : vector<1x1x2x32xf32> to vector<2x32xf32>
    %cst_333 = arith.constant dense<0.000000e+00> : vector<2x32xf32>
    %565 = tpu.matmul %557, %463, %cst_333 {dimension_numbers = #tpu.dot_dimension_numbers<[1], [0], [0], [1], [0, 0, 1, 1], [], []>} : vector<2x32xf32>, vector<32x32xf32>, vector<2x32xf32> -> vector<2x32xf32>
    %566 = arith.addf %564, %565 : vector<2x32xf32>
    %567 = arith.negf %566 : vector<2x32xf32>
    %568 = math.exp %567 : vector<2x32xf32>
    %cst_334 = arith.constant 1.000000e+00 : f32
    %569 = vector.broadcast %cst_334 : f32 to vector<2x32xf32>
    %570 = arith.addf %569, %568 : vector<2x32xf32>
    %571 = arith.divf %569, %570 : vector<2x32xf32>
    %c1_335 = arith.constant 1 : index
    %572 = arith.index_cast %c2_i32_329 : i32 to index
    %c0_336 = arith.constant 0 : index
    %c0_337 = arith.constant 0 : index
    %573 = vector.load %arg10[%c1_335, %572, %c0_336, %c0_337] : memref<4x8x2x32xf32, #tpu.memory_space<vmem>>, vector<1x1x2x32xf32>
    %574 = vector.shape_cast %573 : vector<1x1x2x32xf32> to vector<2x32xf32>
    %cst_338 = arith.constant dense<0.000000e+00> : vector<2x32xf32>
    %575 = tpu.matmul %557, %465, %cst_338 {dimension_numbers = #tpu.dot_dimension_numbers<[1], [0], [0], [1], [0, 0, 1, 1], [], []>} : vector<2x32xf32>, vector<32x32xf32>, vector<2x32xf32> -> vector<2x32xf32>
    %576 = arith.addf %574, %575 : vector<2x32xf32>
    %577 = arith.negf %576 : vector<2x32xf32>
    %578 = math.exp %577 : vector<2x32xf32>
    %cst_339 = arith.constant 1.000000e+00 : f32
    %579 = vector.broadcast %cst_339 : f32 to vector<2x32xf32>
    %580 = arith.addf %579, %578 : vector<2x32xf32>
    %581 = arith.divf %579, %580 : vector<2x32xf32>
    %c2_340 = arith.constant 2 : index
    %582 = arith.index_cast %c2_i32_329 : i32 to index
    %c0_341 = arith.constant 0 : index
    %c0_342 = arith.constant 0 : index
    %583 = vector.load %arg10[%c2_340, %582, %c0_341, %c0_342] : memref<4x8x2x32xf32, #tpu.memory_space<vmem>>, vector<1x1x2x32xf32>
    %584 = vector.shape_cast %583 : vector<1x1x2x32xf32> to vector<2x32xf32>
    %cst_343 = arith.constant dense<0.000000e+00> : vector<2x32xf32>
    %585 = tpu.matmul %557, %467, %cst_343 {dimension_numbers = #tpu.dot_dimension_numbers<[1], [0], [0], [1], [0, 0, 1, 1], [], []>} : vector<2x32xf32>, vector<32x32xf32>, vector<2x32xf32> -> vector<2x32xf32>
    %586 = arith.addf %584, %585 : vector<2x32xf32>
    %587 = math.tanh %586 : vector<2x32xf32>
    %c3_344 = arith.constant 3 : index
    %588 = arith.index_cast %c2_i32_329 : i32 to index
    %c0_345 = arith.constant 0 : index
    %c0_346 = arith.constant 0 : index
    %589 = vector.load %arg10[%c3_344, %588, %c0_345, %c0_346] : memref<4x8x2x32xf32, #tpu.memory_space<vmem>>, vector<1x1x2x32xf32>
    %590 = vector.shape_cast %589 : vector<1x1x2x32xf32> to vector<2x32xf32>
    %cst_347 = arith.constant dense<0.000000e+00> : vector<2x32xf32>
    %591 = tpu.matmul %557, %469, %cst_347 {dimension_numbers = #tpu.dot_dimension_numbers<[1], [0], [0], [1], [0, 0, 1, 1], [], []>} : vector<2x32xf32>, vector<32x32xf32>, vector<2x32xf32> -> vector<2x32xf32>
    %592 = arith.addf %590, %591 : vector<2x32xf32>
    %593 = arith.negf %592 : vector<2x32xf32>
    %594 = math.exp %593 : vector<2x32xf32>
    %cst_348 = arith.constant 1.000000e+00 : f32
    %595 = vector.broadcast %cst_348 : f32 to vector<2x32xf32>
    %596 = arith.addf %595, %594 : vector<2x32xf32>
    %597 = arith.divf %595, %596 : vector<2x32xf32>
    %598 = arith.mulf %581, %555 : vector<2x32xf32>
    %599 = arith.mulf %571, %587 : vector<2x32xf32>
    %600 = arith.addf %598, %599 : vector<2x32xf32>
    %601 = math.tanh %600 : vector<2x32xf32>
    %602 = arith.mulf %597, %601 : vector<2x32xf32>
    %603 = arith.index_cast %c2_i32_329 : i32 to index
    %c0_349 = arith.constant 0 : index
    %c0_350 = arith.constant 0 : index
    %604 = vector.load %arg11[%603, %c0_349, %c0_350] : memref<8x2x32xf32, #tpu.memory_space<vmem>>, vector<1x2x32xf32>
    %605 = vector.shape_cast %604 : vector<1x2x32xf32> to vector<2x32xf32>
    %606 = vector.shape_cast %602 : vector<2x32xf32> to vector<1x2x32xf32>
    tpu.vector_store %arg11[%603, %c0_349, %c0_350], %606 {strides = array<i32>} : memref<8x2x32xf32, #tpu.memory_space<vmem>>, vector<1x2x32xf32>,
    %c3_i32_351 = arith.constant 3 : i32
    %c0_352 = arith.constant 0 : index
    %607 = arith.index_cast %c3_i32_351 : i32 to index
    %c0_353 = arith.constant 0 : index
    %c0_354 = arith.constant 0 : index
    %608 = vector.load %arg10[%c0_352, %607, %c0_353, %c0_354] : memref<4x8x2x32xf32, #tpu.memory_space<vmem>>, vector<1x1x2x32xf32>
    %609 = vector.shape_cast %608 : vector<1x1x2x32xf32> to vector<2x32xf32>
    %cst_355 = arith.constant dense<0.000000e+00> : vector<2x32xf32>
    %610 = tpu.matmul %602, %463, %cst_355 {dimension_numbers = #tpu.dot_dimension_numbers<[1], [0], [0], [1], [0, 0, 1, 1], [], []>} : vector<2x32xf32>, vector<32x32xf32>, vector<2x32xf32> -> vector<2x32xf32>
    %611 = arith.addf %609, %610 : vector<2x32xf32>
    %612 = arith.negf %611 : vector<2x32xf32>
    %613 = math.exp %612 : vector<2x32xf32>
    %cst_356 = arith.constant 1.000000e+00 : f32
    %614 = vector.broadcast %cst_356 : f32 to vector<2x32xf32>
    %615 = arith.addf %614, %613 : vector<2x32xf32>
    %616 = arith.divf %614, %615 : vector<2x32xf32>
    %c1_357 = arith.constant 1 : index
    %617 = arith.index_cast %c3_i32_351 : i32 to index
    %c0_358 = arith.constant 0 : index
    %c0_359 = arith.constant 0 : index
    %618 = vector.load %arg10[%c1_357, %617, %c0_358, %c0_359] : memref<4x8x2x32xf32, #tpu.memory_space<vmem>>, vector<1x1x2x32xf32>
    %619 = vector.shape_cast %618 : vector<1x1x2x32xf32> to vector<2x32xf32>
    %cst_360 = arith.constant dense<0.000000e+00> : vector<2x32xf32>
    %620 = tpu.matmul %602, %465, %cst_360 {dimension_numbers = #tpu.dot_dimension_numbers<[1], [0], [0], [1], [0, 0, 1, 1], [], []>} : vector<2x32xf32>, vector<32x32xf32>, vector<2x32xf32> -> vector<2x32xf32>
    %621 = arith.addf %619, %620 : vector<2x32xf32>
    %622 = arith.negf %621 : vector<2x32xf32>
    %623 = math.exp %622 : vector<2x32xf32>
    %cst_361 = arith.constant 1.000000e+00 : f32
    %624 = vector.broadcast %cst_361 : f32 to vector<2x32xf32>
    %625 = arith.addf %624, %623 : vector<2x32xf32>
    %626 = arith.divf %624, %625 : vector<2x32xf32>
    %c2_362 = arith.constant 2 : index
    %627 = arith.index_cast %c3_i32_351 : i32 to index
    %c0_363 = arith.constant 0 : index
    %c0_364 = arith.constant 0 : index
    %628 = vector.load %arg10[%c2_362, %627, %c0_363, %c0_364] : memref<4x8x2x32xf32, #tpu.memory_space<vmem>>, vector<1x1x2x32xf32>
    %629 = vector.shape_cast %628 : vector<1x1x2x32xf32> to vector<2x32xf32>
    %cst_365 = arith.constant dense<0.000000e+00> : vector<2x32xf32>
    %630 = tpu.matmul %602, %467, %cst_365 {dimension_numbers = #tpu.dot_dimension_numbers<[1], [0], [0], [1], [0, 0, 1, 1], [], []>} : vector<2x32xf32>, vector<32x32xf32>, vector<2x32xf32> -> vector<2x32xf32>
    %631 = arith.addf %629, %630 : vector<2x32xf32>
    %632 = math.tanh %631 : vector<2x32xf32>
    %c3_366 = arith.constant 3 : index
    %633 = arith.index_cast %c3_i32_351 : i32 to index
    %c0_367 = arith.constant 0 : index
    %c0_368 = arith.constant 0 : index
    %634 = vector.load %arg10[%c3_366, %633, %c0_367, %c0_368] : memref<4x8x2x32xf32, #tpu.memory_space<vmem>>, vector<1x1x2x32xf32>
    %635 = vector.shape_cast %634 : vector<1x1x2x32xf32> to vector<2x32xf32>
    %cst_369 = arith.constant dense<0.000000e+00> : vector<2x32xf32>
    %636 = tpu.matmul %602, %469, %cst_369 {dimension_numbers = #tpu.dot_dimension_numbers<[1], [0], [0], [1], [0, 0, 1, 1], [], []>} : vector<2x32xf32>, vector<32x32xf32>, vector<2x32xf32> -> vector<2x32xf32>
    %637 = arith.addf %635, %636 : vector<2x32xf32>
    %638 = arith.negf %637 : vector<2x32xf32>
    %639 = math.exp %638 : vector<2x32xf32>
    %cst_370 = arith.constant 1.000000e+00 : f32
    %640 = vector.broadcast %cst_370 : f32 to vector<2x32xf32>
    %641 = arith.addf %640, %639 : vector<2x32xf32>
    %642 = arith.divf %640, %641 : vector<2x32xf32>
    %643 = arith.mulf %626, %600 : vector<2x32xf32>
    %644 = arith.mulf %616, %632 : vector<2x32xf32>
    %645 = arith.addf %643, %644 : vector<2x32xf32>
    %646 = math.tanh %645 : vector<2x32xf32>
    %647 = arith.mulf %642, %646 : vector<2x32xf32>
    %648 = arith.index_cast %c3_i32_351 : i32 to index
    %c0_371 = arith.constant 0 : index
    %c0_372 = arith.constant 0 : index
    %649 = vector.load %arg11[%648, %c0_371, %c0_372] : memref<8x2x32xf32, #tpu.memory_space<vmem>>, vector<1x2x32xf32>
    %650 = vector.shape_cast %649 : vector<1x2x32xf32> to vector<2x32xf32>
    %651 = vector.shape_cast %647 : vector<2x32xf32> to vector<1x2x32xf32>
    tpu.vector_store %arg11[%648, %c0_371, %c0_372], %651 {strides = array<i32>} : memref<8x2x32xf32, #tpu.memory_space<vmem>>, vector<1x2x32xf32>,
    %c4_i32_373 = arith.constant 4 : i32
    %c0_374 = arith.constant 0 : index
    %652 = arith.index_cast %c4_i32_373 : i32 to index
    %c0_375 = arith.constant 0 : index
    %c0_376 = arith.constant 0 : index
    %653 = vector.load %arg10[%c0_374, %652, %c0_375, %c0_376] : memref<4x8x2x32xf32, #tpu.memory_space<vmem>>, vector<1x1x2x32xf32>
    %654 = vector.shape_cast %653 : vector<1x1x2x32xf32> to vector<2x32xf32>
    %cst_377 = arith.constant dense<0.000000e+00> : vector<2x32xf32>
    %655 = tpu.matmul %647, %463, %cst_377 {dimension_numbers = #tpu.dot_dimension_numbers<[1], [0], [0], [1], [0, 0, 1, 1], [], []>} : vector<2x32xf32>, vector<32x32xf32>, vector<2x32xf32> -> vector<2x32xf32>
    %656 = arith.addf %654, %655 : vector<2x32xf32>
    %657 = arith.negf %656 : vector<2x32xf32>
    %658 = math.exp %657 : vector<2x32xf32>
    %cst_378 = arith.constant 1.000000e+00 : f32
    %659 = vector.broadcast %cst_378 : f32 to vector<2x32xf32>
    %660 = arith.addf %659, %658 : vector<2x32xf32>
    %661 = arith.divf %659, %660 : vector<2x32xf32>
    %c1_379 = arith.constant 1 : index
    %662 = arith.index_cast %c4_i32_373 : i32 to index
    %c0_380 = arith.constant 0 : index
    %c0_381 = arith.constant 0 : index
    %663 = vector.load %arg10[%c1_379, %662, %c0_380, %c0_381] : memref<4x8x2x32xf32, #tpu.memory_space<vmem>>, vector<1x1x2x32xf32>
    %664 = vector.shape_cast %663 : vector<1x1x2x32xf32> to vector<2x32xf32>
    %cst_382 = arith.constant dense<0.000000e+00> : vector<2x32xf32>
    %665 = tpu.matmul %647, %465, %cst_382 {dimension_numbers = #tpu.dot_dimension_numbers<[1], [0], [0], [1], [0, 0, 1, 1], [], []>} : vector<2x32xf32>, vector<32x32xf32>, vector<2x32xf32> -> vector<2x32xf32>
    %666 = arith.addf %664, %665 : vector<2x32xf32>
    %667 = arith.negf %666 : vector<2x32xf32>
    %668 = math.exp %667 : vector<2x32xf32>
    %cst_383 = arith.constant 1.000000e+00 : f32
    %669 = vector.broadcast %cst_383 : f32 to vector<2x32xf32>
    %670 = arith.addf %669, %668 : vector<2x32xf32>
    %671 = arith.divf %669, %670 : vector<2x32xf32>
    %c2_384 = arith.constant 2 : index
    %672 = arith.index_cast %c4_i32_373 : i32 to index
    %c0_385 = arith.constant 0 : index
    %c0_386 = arith.constant 0 : index
    %673 = vector.load %arg10[%c2_384, %672, %c0_385, %c0_386] : memref<4x8x2x32xf32, #tpu.memory_space<vmem>>, vector<1x1x2x32xf32>
    %674 = vector.shape_cast %673 : vector<1x1x2x32xf32> to vector<2x32xf32>
    %cst_387 = arith.constant dense<0.000000e+00> : vector<2x32xf32>
    %675 = tpu.matmul %647, %467, %cst_387 {dimension_numbers = #tpu.dot_dimension_numbers<[1], [0], [0], [1], [0, 0, 1, 1], [], []>} : vector<2x32xf32>, vector<32x32xf32>, vector<2x32xf32> -> vector<2x32xf32>
    %676 = arith.addf %674, %675 : vector<2x32xf32>
    %677 = math.tanh %676 : vector<2x32xf32>
    %c3_388 = arith.constant 3 : index
    %678 = arith.index_cast %c4_i32_373 : i32 to index
    %c0_389 = arith.constant 0 : index
    %c0_390 = arith.constant 0 : index
    %679 = vector.load %arg10[%c3_388, %678, %c0_389, %c0_390] : memref<4x8x2x32xf32, #tpu.memory_space<vmem>>, vector<1x1x2x32xf32>
    %680 = vector.shape_cast %679 : vector<1x1x2x32xf32> to vector<2x32xf32>
    %cst_391 = arith.constant dense<0.000000e+00> : vector<2x32xf32>
    %681 = tpu.matmul %647, %469, %cst_391 {dimension_numbers = #tpu.dot_dimension_numbers<[1], [0], [0], [1], [0, 0, 1, 1], [], []>} : vector<2x32xf32>, vector<32x32xf32>, vector<2x32xf32> -> vector<2x32xf32>
    %682 = arith.addf %680, %681 : vector<2x32xf32>
    %683 = arith.negf %682 : vector<2x32xf32>
    %684 = math.exp %683 : vector<2x32xf32>
    %cst_392 = arith.constant 1.000000e+00 : f32
    %685 = vector.broadcast %cst_392 : f32 to vector<2x32xf32>
    %686 = arith.addf %685, %684 : vector<2x32xf32>
    %687 = arith.divf %685, %686 : vector<2x32xf32>
    %688 = arith.mulf %671, %645 : vector<2x32xf32>
    %689 = arith.mulf %661, %677 : vector<2x32xf32>
    %690 = arith.addf %688, %689 : vector<2x32xf32>
    %691 = math.tanh %690 : vector<2x32xf32>
    %692 = arith.mulf %687, %691 : vector<2x32xf32>
    %693 = arith.index_cast %c4_i32_373 : i32 to index
    %c0_393 = arith.constant 0 : index
    %c0_394 = arith.constant 0 : index
    %694 = vector.load %arg11[%693, %c0_393, %c0_394] : memref<8x2x32xf32, #tpu.memory_space<vmem>>, vector<1x2x32xf32>
    %695 = vector.shape_cast %694 : vector<1x2x32xf32> to vector<2x32xf32>
    %696 = vector.shape_cast %692 : vector<2x32xf32> to vector<1x2x32xf32>
    tpu.vector_store %arg11[%693, %c0_393, %c0_394], %696 {strides = array<i32>} : memref<8x2x32xf32, #tpu.memory_space<vmem>>, vector<1x2x32xf32>,
    %c5_i32_395 = arith.constant 5 : i32
    %c0_396 = arith.constant 0 : index
    %697 = arith.index_cast %c5_i32_395 : i32 to index
    %c0_397 = arith.constant 0 : index
    %c0_398 = arith.constant 0 : index
    %698 = vector.load %arg10[%c0_396, %697, %c0_397, %c0_398] : memref<4x8x2x32xf32, #tpu.memory_space<vmem>>, vector<1x1x2x32xf32>
    %699 = vector.shape_cast %698 : vector<1x1x2x32xf32> to vector<2x32xf32>
    %cst_399 = arith.constant dense<0.000000e+00> : vector<2x32xf32>
    %700 = tpu.matmul %692, %463, %cst_399 {dimension_numbers = #tpu.dot_dimension_numbers<[1], [0], [0], [1], [0, 0, 1, 1], [], []>} : vector<2x32xf32>, vector<32x32xf32>, vector<2x32xf32> -> vector<2x32xf32>
    %701 = arith.addf %699, %700 : vector<2x32xf32>
    %702 = arith.negf %701 : vector<2x32xf32>
    %703 = math.exp %702 : vector<2x32xf32>
    %cst_400 = arith.constant 1.000000e+00 : f32
    %704 = vector.broadcast %cst_400 : f32 to vector<2x32xf32>
    %705 = arith.addf %704, %703 : vector<2x32xf32>
    %706 = arith.divf %704, %705 : vector<2x32xf32>
    %c1_401 = arith.constant 1 : index
    %707 = arith.index_cast %c5_i32_395 : i32 to index
    %c0_402 = arith.constant 0 : index
    %c0_403 = arith.constant 0 : index
    %708 = vector.load %arg10[%c1_401, %707, %c0_402, %c0_403] : memref<4x8x2x32xf32, #tpu.memory_space<vmem>>, vector<1x1x2x32xf32>
    %709 = vector.shape_cast %708 : vector<1x1x2x32xf32> to vector<2x32xf32>
    %cst_404 = arith.constant dense<0.000000e+00> : vector<2x32xf32>
    %710 = tpu.matmul %692, %465, %cst_404 {dimension_numbers = #tpu.dot_dimension_numbers<[1], [0], [0], [1], [0, 0, 1, 1], [], []>} : vector<2x32xf32>, vector<32x32xf32>, vector<2x32xf32> -> vector<2x32xf32>
    %711 = arith.addf %709, %710 : vector<2x32xf32>
    %712 = arith.negf %711 : vector<2x32xf32>
    %713 = math.exp %712 : vector<2x32xf32>
    %cst_405 = arith.constant 1.000000e+00 : f32
    %714 = vector.broadcast %cst_405 : f32 to vector<2x32xf32>
    %715 = arith.addf %714, %713 : vector<2x32xf32>
    %716 = arith.divf %714, %715 : vector<2x32xf32>
    %c2_406 = arith.constant 2 : index
    %717 = arith.index_cast %c5_i32_395 : i32 to index
    %c0_407 = arith.constant 0 : index
    %c0_408 = arith.constant 0 : index
    %718 = vector.load %arg10[%c2_406, %717, %c0_407, %c0_408] : memref<4x8x2x32xf32, #tpu.memory_space<vmem>>, vector<1x1x2x32xf32>
    %719 = vector.shape_cast %718 : vector<1x1x2x32xf32> to vector<2x32xf32>
    %cst_409 = arith.constant dense<0.000000e+00> : vector<2x32xf32>
    %720 = tpu.matmul %692, %467, %cst_409 {dimension_numbers = #tpu.dot_dimension_numbers<[1], [0], [0], [1], [0, 0, 1, 1], [], []>} : vector<2x32xf32>, vector<32x32xf32>, vector<2x32xf32> -> vector<2x32xf32>
    %721 = arith.addf %719, %720 : vector<2x32xf32>
    %722 = math.tanh %721 : vector<2x32xf32>
    %c3_410 = arith.constant 3 : index
    %723 = arith.index_cast %c5_i32_395 : i32 to index
    %c0_411 = arith.constant 0 : index
    %c0_412 = arith.constant 0 : index
    %724 = vector.load %arg10[%c3_410, %723, %c0_411, %c0_412] : memref<4x8x2x32xf32, #tpu.memory_space<vmem>>, vector<1x1x2x32xf32>
    %725 = vector.shape_cast %724 : vector<1x1x2x32xf32> to vector<2x32xf32>
    %cst_413 = arith.constant dense<0.000000e+00> : vector<2x32xf32>
    %726 = tpu.matmul %692, %469, %cst_413 {dimension_numbers = #tpu.dot_dimension_numbers<[1], [0], [0], [1], [0, 0, 1, 1], [], []>} : vector<2x32xf32>, vector<32x32xf32>, vector<2x32xf32> -> vector<2x32xf32>
    %727 = arith.addf %725, %726 : vector<2x32xf32>
    %728 = arith.negf %727 : vector<2x32xf32>
    %729 = math.exp %728 : vector<2x32xf32>
    %cst_414 = arith.constant 1.000000e+00 : f32
    %730 = vector.broadcast %cst_414 : f32 to vector<2x32xf32>
    %731 = arith.addf %730, %729 : vector<2x32xf32>
    %732 = arith.divf %730, %731 : vector<2x32xf32>
    %733 = arith.mulf %716, %690 : vector<2x32xf32>
    %734 = arith.mulf %706, %722 : vector<2x32xf32>
    %735 = arith.addf %733, %734 : vector<2x32xf32>
    %736 = math.tanh %735 : vector<2x32xf32>
    %737 = arith.mulf %732, %736 : vector<2x32xf32>
    %738 = arith.index_cast %c5_i32_395 : i32 to index
    %c0_415 = arith.constant 0 : index
    %c0_416 = arith.constant 0 : index
    %739 = vector.load %arg11[%738, %c0_415, %c0_416] : memref<8x2x32xf32, #tpu.memory_space<vmem>>, vector<1x2x32xf32>
    %740 = vector.shape_cast %739 : vector<1x2x32xf32> to vector<2x32xf32>
    %741 = vector.shape_cast %737 : vector<2x32xf32> to vector<1x2x32xf32>
    tpu.vector_store %arg11[%738, %c0_415, %c0_416], %741 {strides = array<i32>} : memref<8x2x32xf32, #tpu.memory_space<vmem>>, vector<1x2x32xf32>,
    %c6_i32_417 = arith.constant 6 : i32
    %c0_418 = arith.constant 0 : index
    %742 = arith.index_cast %c6_i32_417 : i32 to index
    %c0_419 = arith.constant 0 : index
    %c0_420 = arith.constant 0 : index
    %743 = vector.load %arg10[%c0_418, %742, %c0_419, %c0_420] : memref<4x8x2x32xf32, #tpu.memory_space<vmem>>, vector<1x1x2x32xf32>
    %744 = vector.shape_cast %743 : vector<1x1x2x32xf32> to vector<2x32xf32>
    %cst_421 = arith.constant dense<0.000000e+00> : vector<2x32xf32>
    %745 = tpu.matmul %737, %463, %cst_421 {dimension_numbers = #tpu.dot_dimension_numbers<[1], [0], [0], [1], [0, 0, 1, 1], [], []>} : vector<2x32xf32>, vector<32x32xf32>, vector<2x32xf32> -> vector<2x32xf32>
    %746 = arith.addf %744, %745 : vector<2x32xf32>
    %747 = arith.negf %746 : vector<2x32xf32>
    %748 = math.exp %747 : vector<2x32xf32>
    %cst_422 = arith.constant 1.000000e+00 : f32
    %749 = vector.broadcast %cst_422 : f32 to vector<2x32xf32>
    %750 = arith.addf %749, %748 : vector<2x32xf32>
    %751 = arith.divf %749, %750 : vector<2x32xf32>
    %c1_423 = arith.constant 1 : index
    %752 = arith.index_cast %c6_i32_417 : i32 to index
    %c0_424 = arith.constant 0 : index
    %c0_425 = arith.constant 0 : index
    %753 = vector.load %arg10[%c1_423, %752, %c0_424, %c0_425] : memref<4x8x2x32xf32, #tpu.memory_space<vmem>>, vector<1x1x2x32xf32>
    %754 = vector.shape_cast %753 : vector<1x1x2x32xf32> to vector<2x32xf32>
    %cst_426 = arith.constant dense<0.000000e+00> : vector<2x32xf32>
    %755 = tpu.matmul %737, %465, %cst_426 {dimension_numbers = #tpu.dot_dimension_numbers<[1], [0], [0], [1], [0, 0, 1, 1], [], []>} : vector<2x32xf32>, vector<32x32xf32>, vector<2x32xf32> -> vector<2x32xf32>
    %756 = arith.addf %754, %755 : vector<2x32xf32>
    %757 = arith.negf %756 : vector<2x32xf32>
    %758 = math.exp %757 : vector<2x32xf32>
    %cst_427 = arith.constant 1.000000e+00 : f32
    %759 = vector.broadcast %cst_427 : f32 to vector<2x32xf32>
    %760 = arith.addf %759, %758 : vector<2x32xf32>
    %761 = arith.divf %759, %760 : vector<2x32xf32>
    %c2_428 = arith.constant 2 : index
    %762 = arith.index_cast %c6_i32_417 : i32 to index
    %c0_429 = arith.constant 0 : index
    %c0_430 = arith.constant 0 : index
    %763 = vector.load %arg10[%c2_428, %762, %c0_429, %c0_430] : memref<4x8x2x32xf32, #tpu.memory_space<vmem>>, vector<1x1x2x32xf32>
    %764 = vector.shape_cast %763 : vector<1x1x2x32xf32> to vector<2x32xf32>
    %cst_431 = arith.constant dense<0.000000e+00> : vector<2x32xf32>
    %765 = tpu.matmul %737, %467, %cst_431 {dimension_numbers = #tpu.dot_dimension_numbers<[1], [0], [0], [1], [0, 0, 1, 1], [], []>} : vector<2x32xf32>, vector<32x32xf32>, vector<2x32xf32> -> vector<2x32xf32>
    %766 = arith.addf %764, %765 : vector<2x32xf32>
    %767 = math.tanh %766 : vector<2x32xf32>
    %c3_432 = arith.constant 3 : index
    %768 = arith.index_cast %c6_i32_417 : i32 to index
    %c0_433 = arith.constant 0 : index
    %c0_434 = arith.constant 0 : index
    %769 = vector.load %arg10[%c3_432, %768, %c0_433, %c0_434] : memref<4x8x2x32xf32, #tpu.memory_space<vmem>>, vector<1x1x2x32xf32>
    %770 = vector.shape_cast %769 : vector<1x1x2x32xf32> to vector<2x32xf32>
    %cst_435 = arith.constant dense<0.000000e+00> : vector<2x32xf32>
    %771 = tpu.matmul %737, %469, %cst_435 {dimension_numbers = #tpu.dot_dimension_numbers<[1], [0], [0], [1], [0, 0, 1, 1], [], []>} : vector<2x32xf32>, vector<32x32xf32>, vector<2x32xf32> -> vector<2x32xf32>
    %772 = arith.addf %770, %771 : vector<2x32xf32>
    %773 = arith.negf %772 : vector<2x32xf32>
    %774 = math.exp %773 : vector<2x32xf32>
    %cst_436 = arith.constant 1.000000e+00 : f32
    %775 = vector.broadcast %cst_436 : f32 to vector<2x32xf32>
    %776 = arith.addf %775, %774 : vector<2x32xf32>
    %777 = arith.divf %775, %776 : vector<2x32xf32>
    %778 = arith.mulf %761, %735 : vector<2x32xf32>
    %779 = arith.mulf %751, %767 : vector<2x32xf32>
    %780 = arith.addf %778, %779 : vector<2x32xf32>
    %781 = math.tanh %780 : vector<2x32xf32>
    %782 = arith.mulf %777, %781 : vector<2x32xf32>
    %783 = arith.index_cast %c6_i32_417 : i32 to index
    %c0_437 = arith.constant 0 : index
    %c0_438 = arith.constant 0 : index
    %784 = vector.load %arg11[%783, %c0_437, %c0_438] : memref<8x2x32xf32, #tpu.memory_space<vmem>>, vector<1x2x32xf32>
    %785 = vector.shape_cast %784 : vector<1x2x32xf32> to vector<2x32xf32>
    %786 = vector.shape_cast %782 : vector<2x32xf32> to vector<1x2x32xf32>
    tpu.vector_store %arg11[%783, %c0_437, %c0_438], %786 {strides = array<i32>} : memref<8x2x32xf32, #tpu.memory_space<vmem>>, vector<1x2x32xf32>,
    %c7_i32_439 = arith.constant 7 : i32
    %c0_440 = arith.constant 0 : index
    %787 = arith.index_cast %c7_i32_439 : i32 to index
    %c0_441 = arith.constant 0 : index
    %c0_442 = arith.constant 0 : index
    %788 = vector.load %arg10[%c0_440, %787, %c0_441, %c0_442] : memref<4x8x2x32xf32, #tpu.memory_space<vmem>>, vector<1x1x2x32xf32>
    %789 = vector.shape_cast %788 : vector<1x1x2x32xf32> to vector<2x32xf32>
    %cst_443 = arith.constant dense<0.000000e+00> : vector<2x32xf32>
    %790 = tpu.matmul %782, %463, %cst_443 {dimension_numbers = #tpu.dot_dimension_numbers<[1], [0], [0], [1], [0, 0, 1, 1], [], []>} : vector<2x32xf32>, vector<32x32xf32>, vector<2x32xf32> -> vector<2x32xf32>
    %791 = arith.addf %789, %790 : vector<2x32xf32>
    %792 = arith.negf %791 : vector<2x32xf32>
    %793 = math.exp %792 : vector<2x32xf32>
    %cst_444 = arith.constant 1.000000e+00 : f32
    %794 = vector.broadcast %cst_444 : f32 to vector<2x32xf32>
    %795 = arith.addf %794, %793 : vector<2x32xf32>
    %796 = arith.divf %794, %795 : vector<2x32xf32>
    %c1_445 = arith.constant 1 : index
    %797 = arith.index_cast %c7_i32_439 : i32 to index
    %c0_446 = arith.constant 0 : index
    %c0_447 = arith.constant 0 : index
    %798 = vector.load %arg10[%c1_445, %797, %c0_446, %c0_447] : memref<4x8x2x32xf32, #tpu.memory_space<vmem>>, vector<1x1x2x32xf32>
    %799 = vector.shape_cast %798 : vector<1x1x2x32xf32> to vector<2x32xf32>
    %cst_448 = arith.constant dense<0.000000e+00> : vector<2x32xf32>
    %800 = tpu.matmul %782, %465, %cst_448 {dimension_numbers = #tpu.dot_dimension_numbers<[1], [0], [0], [1], [0, 0, 1, 1], [], []>} : vector<2x32xf32>, vector<32x32xf32>, vector<2x32xf32> -> vector<2x32xf32>
    %801 = arith.addf %799, %800 : vector<2x32xf32>
    %802 = arith.negf %801 : vector<2x32xf32>
    %803 = math.exp %802 : vector<2x32xf32>
    %cst_449 = arith.constant 1.000000e+00 : f32
    %804 = vector.broadcast %cst_449 : f32 to vector<2x32xf32>
    %805 = arith.addf %804, %803 : vector<2x32xf32>
    %806 = arith.divf %804, %805 : vector<2x32xf32>
    %c2_450 = arith.constant 2 : index
    %807 = arith.index_cast %c7_i32_439 : i32 to index
    %c0_451 = arith.constant 0 : index
    %c0_452 = arith.constant 0 : index
    %808 = vector.load %arg10[%c2_450, %807, %c0_451, %c0_452] : memref<4x8x2x32xf32, #tpu.memory_space<vmem>>, vector<1x1x2x32xf32>
    %809 = vector.shape_cast %808 : vector<1x1x2x32xf32> to vector<2x32xf32>
    %cst_453 = arith.constant dense<0.000000e+00> : vector<2x32xf32>
    %810 = tpu.matmul %782, %467, %cst_453 {dimension_numbers = #tpu.dot_dimension_numbers<[1], [0], [0], [1], [0, 0, 1, 1], [], []>} : vector<2x32xf32>, vector<32x32xf32>, vector<2x32xf32> -> vector<2x32xf32>
    %811 = arith.addf %809, %810 : vector<2x32xf32>
    %812 = math.tanh %811 : vector<2x32xf32>
    %c3_454 = arith.constant 3 : index
    %813 = arith.index_cast %c7_i32_439 : i32 to index
    %c0_455 = arith.constant 0 : index
    %c0_456 = arith.constant 0 : index
    %814 = vector.load %arg10[%c3_454, %813, %c0_455, %c0_456] : memref<4x8x2x32xf32, #tpu.memory_space<vmem>>, vector<1x1x2x32xf32>
    %815 = vector.shape_cast %814 : vector<1x1x2x32xf32> to vector<2x32xf32>
    %cst_457 = arith.constant dense<0.000000e+00> : vector<2x32xf32>
    %816 = tpu.matmul %782, %469, %cst_457 {dimension_numbers = #tpu.dot_dimension_numbers<[1], [0], [0], [1], [0, 0, 1, 1], [], []>} : vector<2x32xf32>, vector<32x32xf32>, vector<2x32xf32> -> vector<2x32xf32>
    %817 = arith.addf %815, %816 : vector<2x32xf32>
    %818 = arith.negf %817 : vector<2x32xf32>
    %819 = math.exp %818 : vector<2x32xf32>
    %cst_458 = arith.constant 1.000000e+00 : f32
    %820 = vector.broadcast %cst_458 : f32 to vector<2x32xf32>
    %821 = arith.addf %820, %819 : vector<2x32xf32>
    %822 = arith.divf %820, %821 : vector<2x32xf32>
    %823 = arith.mulf %806, %780 : vector<2x32xf32>
    %824 = arith.mulf %796, %812 : vector<2x32xf32>
    %825 = arith.addf %823, %824 : vector<2x32xf32>
    %826 = math.tanh %825 : vector<2x32xf32>
    %827 = arith.mulf %822, %826 : vector<2x32xf32>
    %828 = arith.index_cast %c7_i32_439 : i32 to index
    %c0_459 = arith.constant 0 : index
    %c0_460 = arith.constant 0 : index
    %829 = vector.load %arg11[%828, %c0_459, %c0_460] : memref<8x2x32xf32, #tpu.memory_space<vmem>>, vector<1x2x32xf32>
    %830 = vector.shape_cast %829 : vector<1x2x32xf32> to vector<2x32xf32>
    %831 = vector.shape_cast %827 : vector<2x32xf32> to vector<1x2x32xf32>
    tpu.vector_store %arg11[%828, %c0_459, %c0_460], %831 {strides = array<i32>} : memref<8x2x32xf32, #tpu.memory_space<vmem>>, vector<1x2x32xf32>,
    %c8_i32_461 = arith.constant 8 : i32
    %c0_462 = arith.constant 0 : index
    %c0_463 = arith.constant 0 : index
    %c0_464 = arith.constant 0 : index
    %832 = vector.load %arg11[%c0_462, %c0_463, %c0_464] : memref<8x2x32xf32, #tpu.memory_space<vmem>>, vector<8x2x32xf32>
    %833 = vector.shape_cast %832 : vector<8x2x32xf32> to vector<16x32xf32>
    %c0_465 = arith.constant 0 : index
    %c0_466 = arith.constant 0 : index
    %834 = vector.load %arg7[%c0_465, %c0_466] : memref<32x4xf32, #tpu.memory_space<vmem>>, vector<32x4xf32>
    %cst_467 = arith.constant dense<0.000000e+00> : vector<16x4xf32>
    %835 = tpu.matmul %833, %834, %cst_467 {dimension_numbers = #tpu.dot_dimension_numbers<[1], [0], [0], [1], [0, 0, 1, 1], [], []>} : vector<16x32xf32>, vector<32x4xf32>, vector<16x4xf32> -> vector<16x4xf32>
    %c0_468 = arith.constant 0 : index
    %c0_469 = arith.constant 0 : index
    %836 = vector.load %arg8[%c0_468, %c0_469] : memref<1x4xf32, #tpu.memory_space<vmem>>, vector<1x4xf32>
    %837 = vector.broadcast %836 : vector<1x4xf32> to vector<16x4xf32>
    %838 = arith.addf %835, %837 : vector<16x4xf32>
    %839 = vector.shape_cast %838 : vector<16x4xf32> to vector<8x2x4xf32>
    %cst_470 = arith.constant dense<0xFF800000> : vector<2x4xf32>
    %840 = vector.multi_reduction <maximumf>, %839, %cst_470 [0] : vector<8x2x4xf32> to vector<2x4xf32>
    %841 = vector.shape_cast %840 : vector<2x4xf32> to vector<1x2x4xf32>
    %842 = vector.broadcast %841 : vector<1x2x4xf32> to vector<8x2x4xf32>
    %843 = arith.subf %839, %842 : vector<8x2x4xf32>
    %844 = math.exp %843 : vector<8x2x4xf32>
    %cst_471 = arith.constant dense<0.000000e+00> : vector<2x4xf32>
    %845 = vector.multi_reduction <add>, %844, %cst_471 [0] : vector<8x2x4xf32> to vector<2x4xf32>
    %846 = vector.shape_cast %845 : vector<2x4xf32> to vector<1x2x4xf32>
    %cst_472 = arith.constant 1.000000e+00 : f32
    %847 = vector.broadcast %cst_472 : f32 to vector<1x2x4xf32>
    %848 = arith.divf %847, %846 : vector<1x2x4xf32>
    %849 = vector.broadcast %848 : vector<1x2x4xf32> to vector<8x2x4xf32>
    %850 = arith.mulf %844, %849 : vector<8x2x4xf32>
    %c0_473 = arith.constant 0 : index
    %c0_474 = arith.constant 0 : index
    %c0_475 = arith.constant 0 : index
    %851 = vector.load %arg9[%c0_473, %c0_474, %c0_475] : memref<8x2x4xf32, #tpu.memory_space<vmem>>, vector<8x2x4xf32>
    tpu.vector_store %arg9[%c0_473, %c0_474, %c0_475], %850 {strides = array<i32>} : memref<8x2x4xf32, #tpu.memory_space<vmem>>, vector<8x2x4xf32>,
    return
  }
}

</mosaic_0001>

<llo_original>
// kernel: lstm_classifier_forward.1
$region0: #{lstm_classifier_forward.1}
  #allocation0 [shape = 'u32[]', space=smem, size = 0x4, offset = 0x4, fixed_abs, tag = 'smem constant byte address 0x4 - core index']
  #allocation1 [shape = 'u32[72,128]{1,0:T(1,128)}', space=vmem, size = 0x9000, scoped, tag = 'internal scratch']
  #allocation2 [shape = 'f32[4,8,2,32]{3,2,1,0:T(2,128)}', space=vmem, size = 0x8000, scoped, tag = 'scratch operand']
  #allocation3 [shape = 'f32[8,2,32]{2,1,0:T(2,128)}', space=vmem, size = 0x2000, scoped, tag = 'scratch operand']
  %s0 = inlined_call_operand.vmem [shape: f32[8,2,16], index: 0, kind: input, shape index: {}]
  %s1 = inlined_call_operand.vmem [shape: f32[4,16,32], index: 1, kind: input, shape index: {}]
  %s2 = inlined_call_operand.vmem [shape: f32[4,32,32], index: 2, kind: input, shape index: {}]
  %s3 = inlined_call_operand.vmem [shape: f32[4,1,32], index: 3, kind: input, shape index: {}]
  %s4 = inlined_call_operand.vmem [shape: f32[4,32,32], index: 4, kind: input, shape index: {}]
  %s5 = inlined_call_operand.vmem [shape: f32[4,32,32], index: 5, kind: input, shape index: {}]
  %s6 = inlined_call_operand.vmem [shape: f32[4,1,32], index: 6, kind: input, shape index: {}]
  %s7 = inlined_call_operand.vmem [shape: f32[32,4], index: 7, kind: input, shape index: {}]
  %s8 = inlined_call_operand.vmem [shape: f32[1,4], index: 8, kind: input, shape index: {}]
  %s9 = inlined_call_operand.vmem [shape: f32[8,2,4], index: 9, kind: output, shape index: {}]
  %s10 = sld [smem:[#allocation0]]
  $region46: #{lstm_classifier_forward.1} parent=0
    _
  %s12 = ssub.s32 1, %s10
  %s13 = scalar_select 0, %s12, %s10
  // Predicated region
  $region2: #{lstm_classifier_forward.1} parent=0 // pred_check
    _
  $region3: #{lstm_classifier_forward.1} parent=0 // pred_check_branch
    %15 = sbr.rel (0) target = $region5
  $region4: #{lstm_classifier_forward.1} parent=0 // pred_region
    _
  $region5: #{lstm_classifier_forward.1} parent=0 // pred_fallthru
    _
  // Predicated region
  $region6: #{lstm_classifier_forward.1} parent=0 // pred_check
    _
  $region7: #{lstm_classifier_forward.1} parent=0 // pred_check_branch
    %17 = sbr.rel (0) target = $region9
  $region8: #{lstm_classifier_forward.1} parent=0 // pred_region
    _
  $region9: #{lstm_classifier_forward.1} parent=0 // pred_fallthru
    _
  // Predicated region
  $region10: #{lstm_classifier_forward.1} parent=0 // pred_check
    _
  $region11: #{lstm_classifier_forward.1} parent=0 // pred_check_branch
    %19 = sbr.rel (0) target = $region13
  $region12: #{lstm_classifier_forward.1} parent=0 // pred_region
    _
  $region13: #{lstm_classifier_forward.1} parent=0 // pred_fallthru
    _
  // Predicated region
  $region14: #{lstm_classifier_forward.1} parent=0 // pred_check
    _
  $region15: #{lstm_classifier_forward.1} parent=0 // pred_check_branch
    %21 = sbr.rel (0) target = $region17
  $region16: #{lstm_classifier_forward.1} parent=0 // pred_region
    _
  $region17: #{lstm_classifier_forward.1} parent=0 // pred_fallthru
    _
  // Predicated region
  $region18: #{lstm_classifier_forward.1} parent=0 // pred_check
    _
  $region19: #{lstm_classifier_forward.1} parent=0 // pred_check_branch
    %23 = sbr.rel (0) target = $region21
  $region20: #{lstm_classifier_forward.1} parent=0 // pred_region
    _
  $region21: #{lstm_classifier_forward.1} parent=0 // pred_fallthru
    _
  // Predicated region
  $region22: #{lstm_classifier_forward.1} parent=0 // pred_check
    _
  $region23: #{lstm_classifier_forward.1} parent=0 // pred_check_branch
    %25 = sbr.rel (0) target = $region25
  $region24: #{lstm_classifier_forward.1} parent=0 // pred_region
    _
  $region25: #{lstm_classifier_forward.1} parent=0 // pred_fallthru
    _
  // Predicated region
  $region26: #{lstm_classifier_forward.1} parent=0 // pred_check
    _
  $region27: #{lstm_classifier_forward.1} parent=0 // pred_check_branch
    %27 = sbr.rel (0) target = $region29
  $region28: #{lstm_classifier_forward.1} parent=0 // pred_region
    _
  $region29: #{lstm_classifier_forward.1} parent=0 // pred_fallthru
    _
  // Predicated region
  $region30: #{lstm_classifier_forward.1} parent=0 // pred_check
    _
  $region31: #{lstm_classifier_forward.1} parent=0 // pred_check_branch
    %29 = sbr.rel (0) target = $region33
  $region32: #{lstm_classifier_forward.1} parent=0 // pred_region
    _
  $region33: #{lstm_classifier_forward.1} parent=0 // pred_fallthru
    _
  // Predicated region
  $region34: #{lstm_classifier_forward.1} parent=0 // pred_check
    _
  $region35: #{lstm_classifier_forward.1} parent=0 // pred_check_branch
    %31 = sbr.rel (0) target = $region37
  $region36: #{lstm_classifier_forward.1} parent=0 // pred_region
    _
  $region37: #{lstm_classifier_forward.1} parent=0 // pred_fallthru
    _
  %v32 = vld [vmem:[%s0] sm:$0x3]
  %v33 = vld [vmem:[%s0 + $0x2] sm:$0x3]
  %v34 = vld [vmem:[%s0 + $0x4] sm:$0x3]
  %v35 = vld [vmem:[%s0 + $0x6] sm:$0x3]
  %v36 = vld [vmem:[%s0 + $0x8] sm:$0x3]
  %v37 = vld [vmem:[%s0 + $0xa] sm:$0x3]
  %v38 = vld [vmem:[%s0 + $0xc] sm:$0x3]
  %v39 = vld [vmem:[%s0 + $0xe] sm:$0x3]
  %v40 = vld [vmem:[%s1] sm:$0xff]
  %v41 = vld [vmem:[%s1 + $0x8] sm:$0xff]
  %v42 = vld [vmem:[%s3] sm:$0x1]
  %v44 = vperm.slane %v42, 0
  %54 = vst [vmem:[#allocation1] ss:$4 sm:$0xff] %v32
  %s55 = scalar_lea.vmem [#allocation1], 1
  %56 = vst [vmem:[%s55] ss:$4 sm:$0xff] %v33
  %s57 = scalar_lea.vmem [#allocation1], 2
  %58 = vst [vmem:[%s57] ss:$4 sm:$0xff] %v34
  %s59 = scalar_lea.vmem [#allocation1], 3
  %60 = vst [vmem:[%s59] ss:$4 sm:$0xff] %v35
  %s61 = scalar_lea.vmem [#allocation1], 32
  %62 = vst [vmem:[%s61] ss:$4 sm:$0xff] %v36
  %s63 = scalar_lea.vmem [#allocation1], 33
  %64 = vst [vmem:[%s63] ss:$4 sm:$0xff] %v37
  %s65 = scalar_lea.vmem [#allocation1], 34
  %66 = vst [vmem:[%s65] ss:$4 sm:$0xff] %v38
  %s67 = scalar_lea.vmem [#allocation1], 35
  %68 = vst [vmem:[%s67] ss:$4 sm:$0xff] %v39
  %v69 = vld.sshfl [vmem:[#allocation1] sm:$0xff pattern:$0x73625140]
  %v70 = vld.sshfl [vmem:[#allocation1 + $0x20] sm:$0xff pattern:$0x73625140]
  %vm71 = vcmask 130048
  %v72 = vsel %vm71, %v69, 0
  %v74 = vsel %vm71, %v70, 0
  %76 = vmatpush.msra.mxu0 0.0
  %77 = vmatpush.msra.mxu0 0.0
  %78 = vmatpush.msra.mxu0 0.0
  %79 = vmatpush.msra.mxu0 0.0
  %80 = vmatpush.msra.mxu0 0.0
  %81 = vmatpush.msra.mxu0 0.0
  %82 = vmatpush.msra.mxu0 0.0
  %83 = vmatpush.msra.mxu0 0.0
  %84 = vmatpush.msra.mxu0 0.0
  %85 = vmatpush.msra.mxu0 0.0
  %86 = vmatpush.msra.mxu0 0.0
  %87 = vmatpush.msra.mxu0 0.0
  %88 = vmatpush.msra.mxu0 0.0
  %89 = vmatpush.msra.mxu0 0.0
  %90 = vmatpush.msra.mxu0 %v41
  %91 = vmatpush.msra.mxu0 %v40
  %92 = vmatmul.f32.gmra.mxu0 %v72
  %v93 = vpop.f32.mrf.mxu0
  %v94 = vadd.f32 %v44, %v93
  %95 = vmatmul.f32.gmra.mxu0 %v74
  %v96 = vpop.f32.mrf.mxu0
  %v97 = vadd.f32 %v44, %v96
  %98 = vdwg.mxu0
  %v101 = vrot.slane %v94, 2
  %v102 = vrot.slane %v94, 4
  %v103 = vrot.slane %v94, 6
  %v104 = vrot.slane %v97, 2
  %v105 = vrot.slane %v97, 4
  %v106 = vrot.slane %v97, 6
  %vm113 = vcmask 254976
  %114 = vst.msk [vmem:[#allocation2] sm:$0x3] %vm113, %v94
  %115 = vst.msk [vmem:[#allocation2 + $0x2] sm:$0x3] %vm113, %v101
  %116 = vst.msk [vmem:[#allocation2 + $0x4] sm:$0x3] %vm113, %v102
  %117 = vst.msk [vmem:[#allocation2 + $0x6] sm:$0x3] %vm113, %v103
  %118 = vst.msk [vmem:[#allocation2 + $0x8] sm:$0x3] %vm113, %v97
  %119 = vst.msk [vmem:[#allocation2 + $0xa] sm:$0x3] %vm113, %v104
  %120 = vst.msk [vmem:[#allocation2 + $0xc] sm:$0x3] %vm113, %v105
  %121 = vst.msk [vmem:[#allocation2 + $0xe] sm:$0x3] %vm113, %v106
  %s122 = scalar_lea.vmem %s1, 16
  %v123 = vld [vmem:[%s122] sm:$0xff]
  %v124 = vld [vmem:[%s122 + $0x8] sm:$0xff]
  %s125 = scalar_lea.vmem %s3, 1
  %v126 = vld [vmem:[%s125] sm:$0x1]
  %v128 = vperm.slane %v126, 0
  %130 = vst [vmem:[#allocation1] ss:$4 sm:$0xff] %v32
  %s131 = scalar_lea.vmem [#allocation1], 1
  %132 = vst [vmem:[%s131] ss:$4 sm:$0xff] %v33
  %s133 = scalar_lea.vmem [#allocation1], 2
  %134 = vst [vmem:[%s133] ss:$4 sm:$0xff] %v34
  %s135 = scalar_lea.vmem [#allocation1], 3
  %136 = vst [vmem:[%s135] ss:$4 sm:$0xff] %v35
  %s137 = scalar_lea.vmem [#allocation1], 32
  %138 = vst [vmem:[%s137] ss:$4 sm:$0xff] %v36
  %s139 = scalar_lea.vmem [#allocation1], 33
  %140 = vst [vmem:[%s139] ss:$4 sm:$0xff] %v37
  %s141 = scalar_lea.vmem [#allocation1], 34
  %142 = vst [vmem:[%s141] ss:$4 sm:$0xff] %v38
  %s143 = scalar_lea.vmem [#allocation1], 35
  %144 = vst [vmem:[%s143] ss:$4 sm:$0xff] %v39
  %v145 = vld.sshfl [vmem:[#allocation1] sm:$0xff pattern:$0x73625140]
  %v146 = vld.sshfl [vmem:[#allocation1 + $0x20] sm:$0xff pattern:$0x73625140]
  %v147 = vsel %vm71, %v145, 0
  %v149 = vsel %vm71, %v146, 0
  %151 = vmatpush.msra.mxu0 0.0
  %152 = vmatpush.msra.mxu0 0.0
  %153 = vmatpush.msra.mxu0 0.0
  %154 = vmatpush.msra.mxu0 0.0
  %155 = vmatpush.msra.mxu0 0.0
  %156 = vmatpush.msra.mxu0 0.0
  %157 = vmatpush.msra.mxu0 0.0
  %158 = vmatpush.msra.mxu0 0.0
  %159 = vmatpush.msra.mxu0 0.0
  %160 = vmatpush.msra.mxu0 0.0
  %161 = vmatpush.msra.mxu0 0.0
  %162 = vmatpush.msra.mxu0 0.0
  %163 = vmatpush.msra.mxu0 0.0
  %164 = vmatpush.msra.mxu0 0.0
  %165 = vmatpush.msra.mxu0 %v124
  %166 = vmatpush.msra.mxu0 %v123
  %167 = vmatmul.f32.gmra.mxu0 %v147
  %v168 = vpop.f32.mrf.mxu0
  %v169 = vadd.f32 %v128, %v168
  %170 = vmatmul.f32.gmra.mxu0 %v149
  %v171 = vpop.f32.mrf.mxu0
  %v172 = vadd.f32 %v128, %v171
  %173 = vdwg.mxu0
  %v176 = vrot.slane %v169, 2
  %v177 = vrot.slane %v169, 4
  %v178 = vrot.slane %v169, 6
  %v179 = vrot.slane %v172, 2
  %v180 = vrot.slane %v172, 4
  %v181 = vrot.slane %v172, 6
  %s188 = scalar_lea.vmem [#allocation2], 16
  %189 = vst.msk [vmem:[%s188] sm:$0x3] %vm113, %v169
  %190 = vst.msk [vmem:[%s188 + $0x2] sm:$0x3] %vm113, %v176
  %191 = vst.msk [vmem:[%s188 + $0x4] sm:$0x3] %vm113, %v177
  %192 = vst.msk [vmem:[%s188 + $0x6] sm:$0x3] %vm113, %v178
  %193 = vst.msk [vmem:[%s188 + $0x8] sm:$0x3] %vm113, %v172
  %194 = vst.msk [vmem:[%s188 + $0xa] sm:$0x3] %vm113, %v179
  %195 = vst.msk [vmem:[%s188 + $0xc] sm:$0x3] %vm113, %v180
  %196 = vst.msk [vmem:[%s188 + $0xe] sm:$0x3] %vm113, %v181
  %s197 = scalar_lea.vmem %s1, 32
  %v198 = vld [vmem:[%s197] sm:$0xff]
  %v199 = vld [vmem:[%s197 + $0x8] sm:$0xff]
  %s200 = scalar_lea.vmem %s3, 2
  %v201 = vld [vmem:[%s200] sm:$0x1]
  %v203 = vperm.slane %v201, 0
  %205 = vst [vmem:[#allocation1] ss:$4 sm:$0xff] %v32
  %s206 = scalar_lea.vmem [#allocation1], 1
  %207 = vst [vmem:[%s206] ss:$4 sm:$0xff] %v33
  %s208 = scalar_lea.vmem [#allocation1], 2
  %209 = vst [vmem:[%s208] ss:$4 sm:$0xff] %v34
  %s210 = scalar_lea.vmem [#allocation1], 3
  %211 = vst [vmem:[%s210] ss:$4 sm:$0xff] %v35
  %s212 = scalar_lea.vmem [#allocation1], 32
  %213 = vst [vmem:[%s212] ss:$4 sm:$0xff] %v36
  %s214 = scalar_lea.vmem [#allocation1], 33
  %215 = vst [vmem:[%s214] ss:$4 sm:$0xff] %v37
  %s216 = scalar_lea.vmem [#allocation1], 34
  %217 = vst [vmem:[%s216] ss:$4 sm:$0xff] %v38
  %s218 = scalar_lea.vmem [#allocation1], 35
  %219 = vst [vmem:[%s218] ss:$4 sm:$0xff] %v39
  %v220 = vld.sshfl [vmem:[#allocation1] sm:$0xff pattern:$0x73625140]
  %v221 = vld.sshfl [vmem:[#allocation1 + $0x20] sm:$0xff pattern:$0x73625140]
  %v222 = vsel %vm71, %v220, 0
  %v224 = vsel %vm71, %v221, 0
  %226 = vmatpush.msra.mxu0 0.0
  %227 = vmatpush.msra.mxu0 0.0
  %228 = vmatpush.msra.mxu0 0.0
  %229 = vmatpush.msra.mxu0 0.0
  %230 = vmatpush.msra.mxu0 0.0
  %231 = vmatpush.msra.mxu0 0.0
  %232 = vmatpush.msra.mxu0 0.0
  %233 = vmatpush.msra.mxu0 0.0
  %234 = vmatpush.msra.mxu0 0.0
  %235 = vmatpush.msra.mxu0 0.0
  %236 = vmatpush.msra.mxu0 0.0
  %237 = vmatpush.msra.mxu0 0.0
  %238 = vmatpush.msra.mxu0 0.0
  %239 = vmatpush.msra.mxu0 0.0
  %240 = vmatpush.msra.mxu0 %v199
  %241 = vmatpush.msra.mxu0 %v198
  %242 = vmatmul.f32.gmra.mxu0 %v222
  %v243 = vpop.f32.mrf.mxu0
  %v244 = vadd.f32 %v203, %v243
  %245 = vmatmul.f32.gmra.mxu0 %v224
  %v246 = vpop.f32.mrf.mxu0
  %v247 = vadd.f32 %v203, %v246
  %248 = vdwg.mxu0
  %v251 = vrot.slane %v244, 2
  %v252 = vrot.slane %v244, 4
  %v253 = vrot.slane %v244, 6
  %v254 = vrot.slane %v247, 2
  %v255 = vrot.slane %v247, 4
  %v256 = vrot.slane %v247, 6
  %s263 = scalar_lea.vmem [#allocation2], 32
  %264 = vst.msk [vmem:[%s263] sm:$0x3] %vm113, %v244
  %265 = vst.msk [vmem:[%s263 + $0x2] sm:$0x3] %vm113, %v251
  %266 = vst.msk [vmem:[%s263 + $0x4] sm:$0x3] %vm113, %v252
  %267 = vst.msk [vmem:[%s263 + $0x6] sm:$0x3] %vm113, %v253
  %268 = vst.msk [vmem:[%s263 + $0x8] sm:$0x3] %vm113, %v247
  %269 = vst.msk [vmem:[%s263 + $0xa] sm:$0x3] %vm113, %v254
  %270 = vst.msk [vmem:[%s263 + $0xc] sm:$0x3] %vm113, %v255
  %271 = vst.msk [vmem:[%s263 + $0xe] sm:$0x3] %vm113, %v256
  %s272 = scalar_lea.vmem %s1, 48
  %v273 = vld [vmem:[%s272] sm:$0xff]
  %v274 = vld [vmem:[%s272 + $0x8] sm:$0xff]
  %s275 = scalar_lea.vmem %s3, 3
  %v276 = vld [vmem:[%s275] sm:$0x1]
  %v278 = vperm.slane %v276, 0
  %280 = vst [vmem:[#allocation1] ss:$4 sm:$0xff] %v32
  %s281 = scalar_lea.vmem [#allocation1], 1
  %282 = vst [vmem:[%s281] ss:$4 sm:$0xff] %v33
  %s283 = scalar_lea.vmem [#allocation1], 2
  %284 = vst [vmem:[%s283] ss:$4 sm:$0xff] %v34
  %s285 = scalar_lea.vmem [#allocation1], 3
  %286 = vst [vmem:[%s285] ss:$4 sm:$0xff] %v35
  %s287 = scalar_lea.vmem [#allocation1], 32
  %288 = vst [vmem:[%s287] ss:$4 sm:$0xff] %v36
  %s289 = scalar_lea.vmem [#allocation1], 33
  %290 = vst [vmem:[%s289] ss:$4 sm:$0xff] %v37
  %s291 = scalar_lea.vmem [#allocation1], 34
  %292 = vst [vmem:[%s291] ss:$4 sm:$0xff] %v38
  %s293 = scalar_lea.vmem [#allocation1], 35
  %294 = vst [vmem:[%s293] ss:$4 sm:$0xff] %v39
  %v295 = vld.sshfl [vmem:[#allocation1] sm:$0xff pattern:$0x73625140]
  %v296 = vld.sshfl [vmem:[#allocation1 + $0x20] sm:$0xff pattern:$0x73625140]
  %v297 = vsel %vm71, %v295, 0
  %v299 = vsel %vm71, %v296, 0
  %301 = vmatpush.msra.mxu0 0.0
  %302 = vmatpush.msra.mxu0 0.0
  %303 = vmatpush.msra.mxu0 0.0
  %304 = vmatpush.msra.mxu0 0.0
  %305 = vmatpush.msra.mxu0 0.0
  %306 = vmatpush.msra.mxu0 0.0
  %307 = vmatpush.msra.mxu0 0.0
  %308 = vmatpush.msra.mxu0 0.0
  %309 = vmatpush.msra.mxu0 0.0
  %310 = vmatpush.msra.mxu0 0.0
  %311 = vmatpush.msra.mxu0 0.0
  %312 = vmatpush.msra.mxu0 0.0
  %313 = vmatpush.msra.mxu0 0.0
  %314 = vmatpush.msra.mxu0 0.0
  %315 = vmatpush.msra.mxu0 %v274
  %316 = vmatpush.msra.mxu0 %v273
  %317 = vmatmul.f32.gmra.mxu0 %v297
  %v318 = vpop.f32.mrf.mxu0
  %v319 = vadd.f32 %v278, %v318
  %320 = vmatmul.f32.gmra.mxu0 %v299
  %v321 = vpop.f32.mrf.mxu0
  %v322 = vadd.f32 %v278, %v321
  %323 = vdwg.mxu0
  %v326 = vrot.slane %v319, 2
  %v327 = vrot.slane %v319, 4
  %v328 = vrot.slane %v319, 6
  %v329 = vrot.slane %v322, 2
  %v330 = vrot.slane %v322, 4
  %v331 = vrot.slane %v322, 6
  %s338 = scalar_lea.vmem [#allocation2], 48
  %339 = vst.msk [vmem:[%s338] sm:$0x3] %vm113, %v319
  %340 = vst.msk [vmem:[%s338 + $0x2] sm:$0x3] %vm113, %v326
  %341 = vst.msk [vmem:[%s338 + $0x4] sm:$0x3] %vm113, %v327
  %342 = vst.msk [vmem:[%s338 + $0x6] sm:$0x3] %vm113, %v328
  %343 = vst.msk [vmem:[%s338 + $0x8] sm:$0x3] %vm113, %v322
  %344 = vst.msk [vmem:[%s338 + $0xa] sm:$0x3] %vm113, %v329
  %345 = vst.msk [vmem:[%s338 + $0xc] sm:$0x3] %vm113, %v330
  %346 = vst.msk [vmem:[%s338 + $0xe] sm:$0x3] %vm113, %v331
  %v347 = vld [vmem:[%s2] sm:$0xff]
  %v348 = vld [vmem:[%s2 + $0x8] sm:$0xff]
  %v349 = vld [vmem:[%s2 + $0x10] sm:$0xff]
  %v350 = vld [vmem:[%s2 + $0x18] sm:$0xff]
  %s351 = scalar_lea.vmem %s2, 32
  %v352 = vld [vmem:[%s351] sm:$0xff]
  %v353 = vld [vmem:[%s351 + $0x8] sm:$0xff]
  %v354 = vld [vmem:[%s351 + $0x10] sm:$0xff]
  %v355 = vld [vmem:[%s351 + $0x18] sm:$0xff]
  %s356 = scalar_lea.vmem %s2, 64
  %v357 = vld [vmem:[%s356] sm:$0xff]
  %v358 = vld [vmem:[%s356 + $0x8] sm:$0xff]
  %v359 = vld [vmem:[%s356 + $0x10] sm:$0xff]
  %v360 = vld [vmem:[%s356 + $0x18] sm:$0xff]
  %s361 = scalar_lea.vmem %s2, 96
  %v362 = vld [vmem:[%s361] sm:$0xff]
  %v363 = vld [vmem:[%s361 + $0x8] sm:$0xff]
  %v364 = vld [vmem:[%s361 + $0x10] sm:$0xff]
  %v365 = vld [vmem:[%s361 + $0x18] sm:$0xff]
  %v366 = vld [vmem:[#allocation2] sm:$0x3]
  %vm367 = vcmask 261120
  %v369 = vsel %vm367, 0.0, 0
  %371 = vmatpush.msra.mxu0 0.0
  %372 = vmatpush.msra.mxu0 0.0
  %373 = vmatpush.msra.mxu0 0.0
  %374 = vmatpush.msra.mxu0 0.0
  %375 = vmatpush.msra.mxu0 0.0
  %376 = vmatpush.msra.mxu0 0.0
  %377 = vmatpush.msra.mxu0 0.0
  %378 = vmatpush.msra.mxu0 0.0
  %379 = vmatpush.msra.mxu0 0.0
  %380 = vmatpush.msra.mxu0 0.0
  %381 = vmatpush.msra.mxu0 0.0
  %382 = vmatpush.msra.mxu0 0.0
  %383 = vmatpush.msra.mxu0 %v350
  %384 = vmatpush.msra.mxu0 %v349
  %385 = vmatpush.msra.mxu0 %v348
  %386 = vmatpush.msra.mxu0 %v347
  %387 = vmatmul.f32.gmra.mxu0 %v369
  %v388 = vpop.f32.mrf.mxu0
  %v389 = vadd.f32 0.0, %v388
  %390 = vdwg.mxu0
  %v391 = vadd.f32 %v366, %v389
  %v392 = vxor.u32 %v391, 2147483648
  %v393 = vmul.f32 %v392, 1.442695
  %v394 = vpow.pop %v393
  %v395 = vadd.f32 %v394, 1.0
  %v396 = vrcp.pop %v395
  %v397 = vmul.f32 %v395, %v396
  %v398 = vsub.f32 1.0, %v397
  %v399 = vmul.f32 %v396, %v398
  %v400 = vadd.f32 %v396, %v399
  %vm401 = vweird.f32 %v395
  %vm402 = vweird.f32 %v396
  %vm403 = vmor %vm401, %vm402
  %v404 = vsel %vm403, %v396, %v400
  %v405 = vand.u32 2147483647, %v395
  %vm406 = vcmp.eq.f32.partialorder %v405, 8.507059e+37
  %v407 = vand.u32 %v395, 2147483648
  %v408 = vor.u32 1.1754944e-38, %v407
  %v409 = vsel %vm406, %v408, %v404
  %v410 = vmul.f32 1.0, %v409
  %v411 = vld [vmem:[%s188] sm:$0x3]
  %412 = vmatpush.msra.mxu0 0.0
  %413 = vmatpush.msra.mxu0 0.0
  %414 = vmatpush.msra.mxu0 0.0
  %415 = vmatpush.msra.mxu0 0.0
  %416 = vmatpush.msra.mxu0 0.0
  %417 = vmatpush.msra.mxu0 0.0
  %418 = vmatpush.msra.mxu0 0.0
  %419 = vmatpush.msra.mxu0 0.0
  %420 = vmatpush.msra.mxu0 0.0
  %421 = vmatpush.msra.mxu0 0.0
  %422 = vmatpush.msra.mxu0 0.0
  %423 = vmatpush.msra.mxu0 0.0
  %424 = vmatpush.msra.mxu0 %v355
  %425 = vmatpush.msra.mxu0 %v354
  %426 = vmatpush.msra.mxu0 %v353
  %427 = vmatpush.msra.mxu0 %v352
  %428 = vmatmul.f32.gmra.mxu0 %v369
  %v429 = vpop.f32.mrf.mxu0
  %v430 = vadd.f32 0.0, %v429
  %431 = vdwg.mxu0
  %v432 = vadd.f32 %v411, %v430
  %v433 = vxor.u32 %v432, 2147483648
  %v434 = vmul.f32 %v433, 1.442695
  %v435 = vpow.pop %v434
  %v436 = vadd.f32 %v435, 1.0
  %v437 = vrcp.pop %v436
  %v438 = vmul.f32 %v436, %v437
  %v439 = vsub.f32 1.0, %v438
  %v440 = vmul.f32 %v437, %v439
  %v441 = vadd.f32 %v437, %v440
  %vm442 = vweird.f32 %v436
  %vm443 = vweird.f32 %v437
  %vm444 = vmor %vm442, %vm443
  %v445 = vsel %vm444, %v437, %v441
  %v446 = vand.u32 2147483647, %v436
  %vm447 = vcmp.eq.f32.partialorder %v446, 8.507059e+37
  %v448 = vand.u32 %v436, 2147483648
  %v449 = vor.u32 1.1754944e-38, %v448
  %v450 = vsel %vm447, %v449, %v445
  %v451 = vmul.f32 1.0, %v450
  %v452 = vld [vmem:[%s263] sm:$0x3]
  %453 = vmatpush.msra.mxu0 0.0
  %454 = vmatpush.msra.mxu0 0.0
  %455 = vmatpush.msra.mxu0 0.0
  %456 = vmatpush.msra.mxu0 0.0
  %457 = vmatpush.msra.mxu0 0.0
  %458 = vmatpush.msra.mxu0 0.0
  %459 = vmatpush.msra.mxu0 0.0
  %460 = vmatpush.msra.mxu0 0.0
  %461 = vmatpush.msra.mxu0 0.0
  %462 = vmatpush.msra.mxu0 0.0
  %463 = vmatpush.msra.mxu0 0.0
  %464 = vmatpush.msra.mxu0 0.0
  %465 = vmatpush.msra.mxu0 %v360
  %466 = vmatpush.msra.mxu0 %v359
  %467 = vmatpush.msra.mxu0 %v358
  %468 = vmatpush.msra.mxu0 %v357
  %469 = vmatmul.f32.gmra.mxu0 %v369
  %v470 = vpop.f32.mrf.mxu0
  %v471 = vadd.f32 0.0, %v470
  %472 = vdwg.mxu0
  %v473 = vadd.f32 %v452, %v471
  %v474 = vtanh.pop %v473
  %v475 = vld [vmem:[%s338] sm:$0x3]
  %476 = vmatpush.msra.mxu0 0.0
  %477 = vmatpush.msra.mxu0 0.0
  %478 = vmatpush.msra.mxu0 0.0
  %479 = vmatpush.msra.mxu0 0.0
  %480 = vmatpush.msra.mxu0 0.0
  %481 = vmatpush.msra.mxu0 0.0
  %482 = vmatpush.msra.mxu0 0.0
  %483 = vmatpush.msra.mxu0 0.0
  %484 = vmatpush.msra.mxu0 0.0
  %485 = vmatpush.msra.mxu0 0.0
  %486 = vmatpush.msra.mxu0 0.0
  %487 = vmatpush.msra.mxu0 0.0
  %488 = vmatpush.msra.mxu0 %v365
  %489 = vmatpush.msra.mxu0 %v364
  %490 = vmatpush.msra.mxu0 %v363
  %491 = vmatpush.msra.mxu0 %v362
  %492 = vmatmul.f32.gmra.mxu0 %v369
  %v493 = vpop.f32.mrf.mxu0
  %v494 = vadd.f32 0.0, %v493
  %495 = vdwg.mxu0
  %v496 = vadd.f32 %v475, %v494
  %v497 = vxor.u32 %v496, 2147483648
  %v498 = vmul.f32 %v497, 1.442695
  %v499 = vpow.pop %v498
  %v500 = vadd.f32 %v499, 1.0
  %v501 = vrcp.pop %v500
  %v502 = vmul.f32 %v500, %v501
  %v503 = vsub.f32 1.0, %v502
  %v504 = vmul.f32 %v501, %v503
  %v505 = vadd.f32 %v501, %v504
  %vm506 = vweird.f32 %v500
  %vm507 = vweird.f32 %v501
  %vm508 = vmor %vm506, %vm507
  %v509 = vsel %vm508, %v501, %v505
  %v510 = vand.u32 2147483647, %v500
  %vm511 = vcmp.eq.f32.partialorder %v510, 8.507059e+37
  %v512 = vand.u32 %v500, 2147483648
  %v513 = vor.u32 1.1754944e-38, %v512
  %v514 = vsel %vm511, %v513, %v509
  %v515 = vmul.f32 1.0, %v514
  %v516 = vmul.f32 %v451, 0.0
  %v517 = vmul.f32 %v410, %v474
  %v518 = vadd.f32 %v516, %v517
  %v519 = vtanh.pop %v518
  %v520 = vmul.f32 %v515, %v519
  %521 = vst.msk [vmem:[#allocation3] sm:$0x3] %vm113, %v520
  %s522 = scalar_lea.vmem [#allocation2], 2
  %v523 = vld [vmem:[%s522] sm:$0x3]
  %v525 = vsel %vm367, %v520, 0
  %527 = vmatpush.msra.mxu0 0.0
  %528 = vmatpush.msra.mxu0 0.0
  %529 = vmatpush.msra.mxu0 0.0
  %530 = vmatpush.msra.mxu0 0.0
  %531 = vmatpush.msra.mxu0 0.0
  %532 = vmatpush.msra.mxu0 0.0
  %533 = vmatpush.msra.mxu0 0.0
  %534 = vmatpush.msra.mxu0 0.0
  %535 = vmatpush.msra.mxu0 0.0
  %536 = vmatpush.msra.mxu0 0.0
  %537 = vmatpush.msra.mxu0 0.0
  %538 = vmatpush.msra.mxu0 0.0
  %539 = vmatpush.msra.mxu0 %v350
  %540 = vmatpush.msra.mxu0 %v349
  %541 = vmatpush.msra.mxu0 %v348
  %542 = vmatpush.msra.mxu0 %v347
  %543 = vmatmul.f32.gmra.mxu0 %v525
  %v544 = vpop.f32.mrf.mxu0
  %v545 = vadd.f32 0.0, %v544
  %546 = vdwg.mxu0
  %v547 = vadd.f32 %v523, %v545
  %v548 = vxor.u32 %v547, 2147483648
  %v549 = vmul.f32 %v548, 1.442695
  %v550 = vpow.pop %v549
  %v551 = vadd.f32 %v550, 1.0
  %v552 = vrcp.pop %v551
  %v553 = vmul.f32 %v551, %v552
  %v554 = vsub.f32 1.0, %v553
  %v555 = vmul.f32 %v552, %v554
  %v556 = vadd.f32 %v552, %v555
  %vm557 = vweird.f32 %v551
  %vm558 = vweird.f32 %v552
  %vm559 = vmor %vm557, %vm558
  %v560 = vsel %vm559, %v552, %v556
  %v561 = vand.u32 2147483647, %v551
  %vm562 = vcmp.eq.f32.partialorder %v561, 8.507059e+37
  %v563 = vand.u32 %v551, 2147483648
  %v564 = vor.u32 1.1754944e-38, %v563
  %v565 = vsel %vm562, %v564, %v560
  %v566 = vmul.f32 1.0, %v565
  %s567 = scalar_lea.vmem [#allocation2], 18
  %v568 = vld [vmem:[%s567] sm:$0x3]
  %569 = vmatpush.msra.mxu0 0.0
  %570 = vmatpush.msra.mxu0 0.0
  %571 = vmatpush.msra.mxu0 0.0
  %572 = vmatpush.msra.mxu0 0.0
  %573 = vmatpush.msra.mxu0 0.0
  %574 = vmatpush.msra.mxu0 0.0
  %575 = vmatpush.msra.mxu0 0.0
  %576 = vmatpush.msra.mxu0 0.0
  %577 = vmatpush.msra.mxu0 0.0
  %578 = vmatpush.msra.mxu0 0.0
  %579 = vmatpush.msra.mxu0 0.0
  %580 = vmatpush.msra.mxu0 0.0
  %581 = vmatpush.msra.mxu0 %v355
  %582 = vmatpush.msra.mxu0 %v354
  %583 = vmatpush.msra.mxu0 %v353
  %584 = vmatpush.msra.mxu0 %v352
  %585 = vmatmul.f32.gmra.mxu0 %v525
  %v586 = vpop.f32.mrf.mxu0
  %v587 = vadd.f32 0.0, %v586
  %588 = vdwg.mxu0
  %v589 = vadd.f32 %v568, %v587
  %v590 = vxor.u32 %v589, 2147483648
  %v591 = vmul.f32 %v590, 1.442695
  %v592 = vpow.pop %v591
  %v593 = vadd.f32 %v592, 1.0
  %v594 = vrcp.pop %v593
  %v595 = vmul.f32 %v593, %v594
  %v596 = vsub.f32 1.0, %v595
  %v597 = vmul.f32 %v594, %v596
  %v598 = vadd.f32 %v594, %v597
  %vm599 = vweird.f32 %v593
  %vm600 = vweird.f32 %v594
  %vm601 = vmor %vm599, %vm600
  %v602 = vsel %vm601, %v594, %v598
  %v603 = vand.u32 2147483647, %v593
  %vm604 = vcmp.eq.f32.partialorder %v603, 8.507059e+37
  %v605 = vand.u32 %v593, 2147483648
  %v606 = vor.u32 1.1754944e-38, %v605
  %v607 = vsel %vm604, %v606, %v602
  %v608 = vmul.f32 1.0, %v607
  %s609 = scalar_lea.vmem [#allocation2], 34
  %v610 = vld [vmem:[%s609] sm:$0x3]
  %611 = vmatpush.msra.mxu0 0.0
  %612 = vmatpush.msra.mxu0 0.0
  %613 = vmatpush.msra.mxu0 0.0
  %614 = vmatpush.msra.mxu0 0.0
  %615 = vmatpush.msra.mxu0 0.0
  %616 = vmatpush.msra.mxu0 0.0
  %617 = vmatpush.msra.mxu0 0.0
  %618 = vmatpush.msra.mxu0 0.0
  %619 = vmatpush.msra.mxu0 0.0
  %620 = vmatpush.msra.mxu0 0.0
  %621 = vmatpush.msra.mxu0 0.0
  %622 = vmatpush.msra.mxu0 0.0
  %623 = vmatpush.msra.mxu0 %v360
  %624 = vmatpush.msra.mxu0 %v359
  %625 = vmatpush.msra.mxu0 %v358
  %626 = vmatpush.msra.mxu0 %v357
  %627 = vmatmul.f32.gmra.mxu0 %v525
  %v628 = vpop.f32.mrf.mxu0
  %v629 = vadd.f32 0.0, %v628
  %630 = vdwg.mxu0
  %v631 = vadd.f32 %v610, %v629
  %v632 = vtanh.pop %v631
  %s633 = scalar_lea.vmem [#allocation2], 50
  %v634 = vld [vmem:[%s633] sm:$0x3]
  %635 = vmatpush.msra.mxu0 0.0
  %636 = vmatpush.msra.mxu0 0.0
  %637 = vmatpush.msra.mxu0 0.0
  %638 = vmatpush.msra.mxu0 0.0
  %639 = vmatpush.msra.mxu0 0.0
  %640 = vmatpush.msra.mxu0 0.0
  %641 = vmatpush.msra.mxu0 0.0
  %642 = vmatpush.msra.mxu0 0.0
  %643 = vmatpush.msra.mxu0 0.0
  %644 = vmatpush.msra.mxu0 0.0
  %645 = vmatpush.msra.mxu0 0.0
  %646 = vmatpush.msra.mxu0 0.0
  %647 = vmatpush.msra.mxu0 %v365
  %648 = vmatpush.msra.mxu0 %v364
  %649 = vmatpush.msra.mxu0 %v363
  %650 = vmatpush.msra.mxu0 %v362
  %651 = vmatmul.f32.gmra.mxu0 %v525
  %v652 = vpop.f32.mrf.mxu0
  %v653 = vadd.f32 0.0, %v652
  %654 = vdwg.mxu0
  %v655 = vadd.f32 %v634, %v653
  %v656 = vxor.u32 %v655, 2147483648
  %v657 = vmul.f32 %v656, 1.442695
  %v658 = vpow.pop %v657
  %v659 = vadd.f32 %v658, 1.0
  %v660 = vrcp.pop %v659
  %v661 = vmul.f32 %v659, %v660
  %v662 = vsub.f32 1.0, %v661
  %v663 = vmul.f32 %v660, %v662
  %v664 = vadd.f32 %v660, %v663
  %vm665 = vweird.f32 %v659
  %vm666 = vweird.f32 %v660
  %vm667 = vmor %vm665, %vm666
  %v668 = vsel %vm667, %v660, %v664
  %v669 = vand.u32 2147483647, %v659
  %vm670 = vcmp.eq.f32.partialorder %v669, 8.507059e+37
  %v671 = vand.u32 %v659, 2147483648
  %v672 = vor.u32 1.1754944e-38, %v671
  %v673 = vsel %vm670, %v672, %v668
  %v674 = vmul.f32 1.0, %v673
  %v675 = vmul.f32 %v608, %v518
  %v676 = vmul.f32 %v566, %v632
  %v677 = vadd.f32 %v675, %v676
  %v678 = vtanh.pop %v677
  %v679 = vmul.f32 %v674, %v678
  %s680 = scalar_lea.vmem [#allocation3], 2
  %681 = vst.msk [vmem:[%s680] sm:$0x3] %vm113, %v679
  %s682 = scalar_lea.vmem [#allocation2], 4
  %v683 = vld [vmem:[%s682] sm:$0x3]
  %v685 = vsel %vm367, %v679, 0
  %687 = vmatpush.msra.mxu0 0.0
  %688 = vmatpush.msra.mxu0 0.0
  %689 = vmatpush.msra.mxu0 0.0
  %690 = vmatpush.msra.mxu0 0.0
  %691 = vmatpush.msra.mxu0 0.0
  %692 = vmatpush.msra.mxu0 0.0
  %693 = vmatpush.msra.mxu0 0.0
  %694 = vmatpush.msra.mxu0 0.0
  %695 = vmatpush.msra.mxu0 0.0
  %696 = vmatpush.msra.mxu0 0.0
  %697 = vmatpush.msra.mxu0 0.0
  %698 = vmatpush.msra.mxu0 0.0
  %699 = vmatpush.msra.mxu0 %v350
  %700 = vmatpush.msra.mxu0 %v349
  %701 = vmatpush.msra.mxu0 %v348
  %702 = vmatpush.msra.mxu0 %v347
  %703 = vmatmul.f32.gmra.mxu0 %v685
  %v704 = vpop.f32.mrf.mxu0
  %v705 = vadd.f32 0.0, %v704
  %706 = vdwg.mxu0
  %v707 = vadd.f32 %v683, %v705
  %v708 = vxor.u32 %v707, 2147483648
  %v709 = vmul.f32 %v708, 1.442695
  %v710 = vpow.pop %v709
  %v711 = vadd.f32 %v710, 1.0
  %v712 = vrcp.pop %v711
  %v713 = vmul.f32 %v711, %v712
  %v714 = vsub.f32 1.0, %v713
  %v715 = vmul.f32 %v712, %v714
  %v716 = vadd.f32 %v712, %v715
  %vm717 = vweird.f32 %v711
  %vm718 = vweird.f32 %v712
  %vm719 = vmor %vm717, %vm718
  %v720 = vsel %vm719, %v712, %v716
  %v721 = vand.u32 2147483647, %v711
  %vm722 = vcmp.eq.f32.partialorder %v721, 8.507059e+37
  %v723 = vand.u32 %v711, 2147483648
  %v724 = vor.u32 1.1754944e-38, %v723
  %v725 = vsel %vm722, %v724, %v720
  %v726 = vmul.f32 1.0, %v725
  %s727 = scalar_lea.vmem [#allocation2], 20
  %v728 = vld [vmem:[%s727] sm:$0x3]
  %729 = vmatpush.msra.mxu0 0.0
  %730 = vmatpush.msra.mxu0 0.0
  %731 = vmatpush.msra.mxu0 0.0
  %732 = vmatpush.msra.mxu0 0.0
  %733 = vmatpush.msra.mxu0 0.0
  %734 = vmatpush.msra.mxu0 0.0
  %735 = vmatpush.msra.mxu0 0.0
  %736 = vmatpush.msra.mxu0 0.0
  %737 = vmatpush.msra.mxu0 0.0
  %738 = vmatpush.msra.mxu0 0.0
  %739 = vmatpush.msra.mxu0 0.0
  %740 = vmatpush.msra.mxu0 0.0
  %741 = vmatpush.msra.mxu0 %v355
  %742 = vmatpush.msra.mxu0 %v354
  %743 = vmatpush.msra.mxu0 %v353
  %744 = vmatpush.msra.mxu0 %v352
  %745 = vmatmul.f32.gmra.mxu0 %v685
  %v746 = vpop.f32.mrf.mxu0
  %v747 = vadd.f32 0.0, %v746
  %748 = vdwg.mxu0
  %v749 = vadd.f32 %v728, %v747
  %v750 = vxor.u32 %v749, 2147483648
  %v751 = vmul.f32 %v750, 1.442695
  %v752 = vpow.pop %v751
  %v753 = vadd.f32 %v752, 1.0
  %v754 = vrcp.pop %v753
  %v755 = vmul.f32 %v753, %v754
  %v756 = vsub.f32 1.0, %v755
  %v757 = vmul.f32 %v754, %v756
  %v758 = vadd.f32 %v754, %v757
  %vm759 = vweird.f32 %v753
  %vm760 = vweird.f32 %v754
  %vm761 = vmor %vm759, %vm760
  %v762 = vsel %vm761, %v754, %v758
  %v763 = vand.u32 2147483647, %v753
  %vm764 = vcmp.eq.f32.partialorder %v763, 8.507059e+37
  %v765 = vand.u32 %v753, 2147483648
  %v766 = vor.u32 1.1754944e-38, %v765
  %v767 = vsel %vm764, %v766, %v762
  %v768 = vmul.f32 1.0, %v767
  %s769 = scalar_lea.vmem [#allocation2], 36
  %v770 = vld [vmem:[%s769] sm:$0x3]
  %771 = vmatpush.msra.mxu0 0.0
  %772 = vmatpush.msra.mxu0 0.0
  %773 = vmatpush.msra.mxu0 0.0
  %774 = vmatpush.msra.mxu0 0.0
  %775 = vmatpush.msra.mxu0 0.0
  %776 = vmatpush.msra.mxu0 0.0
  %777 = vmatpush.msra.mxu0 0.0
  %778 = vmatpush.msra.mxu0 0.0
  %779 = vmatpush.msra.mxu0 0.0
  %780 = vmatpush.msra.mxu0 0.0
  %781 = vmatpush.msra.mxu0 0.0
  %782 = vmatpush.msra.mxu0 0.0
  %783 = vmatpush.msra.mxu0 %v360
  %784 = vmatpush.msra.mxu0 %v359
  %785 = vmatpush.msra.mxu0 %v358
  %786 = vmatpush.msra.mxu0 %v357
  %787 = vmatmul.f32.gmra.mxu0 %v685
  %v788 = vpop.f32.mrf.mxu0
  %v789 = vadd.f32 0.0, %v788
  %790 = vdwg.mxu0
  %v791 = vadd.f32 %v770, %v789
  %v792 = vtanh.pop %v791
  %s793 = scalar_lea.vmem [#allocation2], 52
  %v794 = vld [vmem:[%s793] sm:$0x3]
  %795 = vmatpush.msra.mxu0 0.0
  %796 = vmatpush.msra.mxu0 0.0
  %797 = vmatpush.msra.mxu0 0.0
  %798 = vmatpush.msra.mxu0 0.0
  %799 = vmatpush.msra.mxu0 0.0
  %800 = vmatpush.msra.mxu0 0.0
  %801 = vmatpush.msra.mxu0 0.0
  %802 = vmatpush.msra.mxu0 0.0
  %803 = vmatpush.msra.mxu0 0.0
  %804 = vmatpush.msra.mxu0 0.0
  %805 = vmatpush.msra.mxu0 0.0
  %806 = vmatpush.msra.mxu0 0.0
  %807 = vmatpush.msra.mxu0 %v365
  %808 = vmatpush.msra.mxu0 %v364
  %809 = vmatpush.msra.mxu0 %v363
  %810 = vmatpush.msra.mxu0 %v362
  %811 = vmatmul.f32.gmra.mxu0 %v685
  %v812 = vpop.f32.mrf.mxu0
  %v813 = vadd.f32 0.0, %v812
  %814 = vdwg.mxu0
  %v815 = vadd.f32 %v794, %v813
  %v816 = vxor.u32 %v815, 2147483648
  %v817 = vmul.f32 %v816, 1.442695
  %v818 = vpow.pop %v817
  %v819 = vadd.f32 %v818, 1.0
  %v820 = vrcp.pop %v819
  %v821 = vmul.f32 %v819, %v820
  %v822 = vsub.f32 1.0, %v821
  %v823 = vmul.f32 %v820, %v822
  %v824 = vadd.f32 %v820, %v823
  %vm825 = vweird.f32 %v819
  %vm826 = vweird.f32 %v820
  %vm827 = vmor %vm825, %vm826
  %v828 = vsel %vm827, %v820, %v824
  %v829 = vand.u32 2147483647, %v819
  %vm830 = vcmp.eq.f32.partialorder %v829, 8.507059e+37
  %v831 = vand.u32 %v819, 2147483648
  %v832 = vor.u32 1.1754944e-38, %v831
  %v833 = vsel %vm830, %v832, %v828
  %v834 = vmul.f32 1.0, %v833
  %v835 = vmul.f32 %v768, %v677
  %v836 = vmul.f32 %v726, %v792
  %v837 = vadd.f32 %v835, %v836
  %v838 = vtanh.pop %v837
  %v839 = vmul.f32 %v834, %v838
  %s840 = scalar_lea.vmem [#allocation3], 4
  %841 = vst.msk [vmem:[%s840] sm:$0x3] %vm113, %v839
  %s842 = scalar_lea.vmem [#allocation2], 6
  %v843 = vld [vmem:[%s842] sm:$0x3]
  %v845 = vsel %vm367, %v839, 0
  %847 = vmatpush.msra.mxu0 0.0
  %848 = vmatpush.msra.mxu0 0.0
  %849 = vmatpush.msra.mxu0 0.0
  %850 = vmatpush.msra.mxu0 0.0
  %851 = vmatpush.msra.mxu0 0.0
  %852 = vmatpush.msra.mxu0 0.0
  %853 = vmatpush.msra.mxu0 0.0
  %854 = vmatpush.msra.mxu0 0.0
  %855 = vmatpush.msra.mxu0 0.0
  %856 = vmatpush.msra.mxu0 0.0
  %857 = vmatpush.msra.mxu0 0.0
  %858 = vmatpush.msra.mxu0 0.0
  %859 = vmatpush.msra.mxu0 %v350
  %860 = vmatpush.msra.mxu0 %v349
  %861 = vmatpush.msra.mxu0 %v348
  %862 = vmatpush.msra.mxu0 %v347
  %863 = vmatmul.f32.gmra.mxu0 %v845
  %v864 = vpop.f32.mrf.mxu0
  %v865 = vadd.f32 0.0, %v864
  %866 = vdwg.mxu0
  %v867 = vadd.f32 %v843, %v865
  %v868 = vxor.u32 %v867, 2147483648
  %v869 = vmul.f32 %v868, 1.442695
  %v870 = vpow.pop %v869
  %v871 = vadd.f32 %v870, 1.0
  %v872 = vrcp.pop %v871
  %v873 = vmul.f32 %v871, %v872
  %v874 = vsub.f32 1.0, %v873
  %v875 = vmul.f32 %v872, %v874
  %v876 = vadd.f32 %v872, %v875
  %vm877 = vweird.f32 %v871
  %vm878 = vweird.f32 %v872
  %vm879 = vmor %vm877, %vm878
  %v880 = vsel %vm879, %v872, %v876
  %v881 = vand.u32 2147483647, %v871
  %vm882 = vcmp.eq.f32.partialorder %v881, 8.507059e+37
  %v883 = vand.u32 %v871, 2147483648
  %v884 = vor.u32 1.1754944e-38, %v883
  %v885 = vsel %vm882, %v884, %v880
  %v886 = vmul.f32 1.0, %v885
  %s887 = scalar_lea.vmem [#allocation2], 22
  %v888 = vld [vmem:[%s887] sm:$0x3]
  %889 = vmatpush.msra.mxu0 0.0
  %890 = vmatpush.msra.mxu0 0.0
  %891 = vmatpush.msra.mxu0 0.0
  %892 = vmatpush.msra.mxu0 0.0
  %893 = vmatpush.msra.mxu0 0.0
  %894 = vmatpush.msra.mxu0 0.0
  %895 = vmatpush.msra.mxu0 0.0
  %896 = vmatpush.msra.mxu0 0.0
  %897 = vmatpush.msra.mxu0 0.0
  %898 = vmatpush.msra.mxu0 0.0
  %899 = vmatpush.msra.mxu0 0.0
  %900 = vmatpush.msra.mxu0 0.0
  %901 = vmatpush.msra.mxu0 %v355
  %902 = vmatpush.msra.mxu0 %v354
  %903 = vmatpush.msra.mxu0 %v353
  %904 = vmatpush.msra.mxu0 %v352
  %905 = vmatmul.f32.gmra.mxu0 %v845
  %v906 = vpop.f32.mrf.mxu0
  %v907 = vadd.f32 0.0, %v906
  %908 = vdwg.mxu0
  %v909 = vadd.f32 %v888, %v907
  %v910 = vxor.u32 %v909, 2147483648
  %v911 = vmul.f32 %v910, 1.442695
  %v912 = vpow.pop %v911
  %v913 = vadd.f32 %v912, 1.0
  %v914 = vrcp.pop %v913
  %v915 = vmul.f32 %v913, %v914
  %v916 = vsub.f32 1.0, %v915
  %v917 = vmul.f32 %v914, %v916
  %v918 = vadd.f32 %v914, %v917
  %vm919 = vweird.f32 %v913
  %vm920 = vweird.f32 %v914
  %vm921 = vmor %vm919, %vm920
  %v922 = vsel %vm921, %v914, %v918
  %v923 = vand.u32 2147483647, %v913
  %vm924 = vcmp.eq.f32.partialorder %v923, 8.507059e+37
  %v925 = vand.u32 %v913, 2147483648
  %v926 = vor.u32 1.1754944e-38, %v925
  %v927 = vsel %vm924, %v926, %v922
  %v928 = vmul.f32 1.0, %v927
  %s929 = scalar_lea.vmem [#allocation2], 38
  %v930 = vld [vmem:[%s929] sm:$0x3]
  %931 = vmatpush.msra.mxu0 0.0
  %932 = vmatpush.msra.mxu0 0.0
  %933 = vmatpush.msra.mxu0 0.0
  %934 = vmatpush.msra.mxu0 0.0
  %935 = vmatpush.msra.mxu0 0.0
  %936 = vmatpush.msra.mxu0 0.0
  %937 = vmatpush.msra.mxu0 0.0
  %938 = vmatpush.msra.mxu0 0.0
  %939 = vmatpush.msra.mxu0 0.0
  %940 = vmatpush.msra.mxu0 0.0
  %941 = vmatpush.msra.mxu0 0.0
  %942 = vmatpush.msra.mxu0 0.0
  %943 = vmatpush.msra.mxu0 %v360
  %944 = vmatpush.msra.mxu0 %v359
  %945 = vmatpush.msra.mxu0 %v358
  %946 = vmatpush.msra.mxu0 %v357
  %947 = vmatmul.f32.gmra.mxu0 %v845
  %v948 = vpop.f32.mrf.mxu0
  %v949 = vadd.f32 0.0, %v948
  %950 = vdwg.mxu0
  %v951 = vadd.f32 %v930, %v949
  %v952 = vtanh.pop %v951
  %s953 = scalar_lea.vmem [#allocation2], 54
  %v954 = vld [vmem:[%s953] sm:$0x3]
  %955 = vmatpush.msra.mxu0 0.0
  %956 = vmatpush.msra.mxu0 0.0
  %957 = vmatpush.msra.mxu0 0.0
  %958 = vmatpush.msra.mxu0 0.0
  %959 = vmatpush.msra.mxu0 0.0
  %960 = vmatpush.msra.mxu0 0.0
  %961 = vmatpush.msra.mxu0 0.0
  %962 = vmatpush.msra.mxu0 0.0
  %963 = vmatpush.msra.mxu0 0.0
  %964 = vmatpush.msra.mxu0 0.0
  %965 = vmatpush.msra.mxu0 0.0
  %966 = vmatpush.msra.mxu0 0.0
  %967 = vmatpush.msra.mxu0 %v365
  %968 = vmatpush.msra.mxu0 %v364
  %969 = vmatpush.msra.mxu0 %v363
  %970 = vmatpush.msra.mxu0 %v362
  %971 = vmatmul.f32.gmra.mxu0 %v845
  %v972 = vpop.f32.mrf.mxu0
  %v973 = vadd.f32 0.0, %v972
  %974 = vdwg.mxu0
  %v975 = vadd.f32 %v954, %v973
  %v976 = vxor.u32 %v975, 2147483648
  %v977 = vmul.f32 %v976, 1.442695
  %v978 = vpow.pop %v977
  %v979 = vadd.f32 %v978, 1.0
  %v980 = vrcp.pop %v979
  %v981 = vmul.f32 %v979, %v980
  %v982 = vsub.f32 1.0, %v981
  %v983 = vmul.f32 %v980, %v982
  %v984 = vadd.f32 %v980, %v983
  %vm985 = vweird.f32 %v979
  %vm986 = vweird.f32 %v980
  %vm987 = vmor %vm985, %vm986
  %v988 = vsel %vm987, %v980, %v984
  %v989 = vand.u32 2147483647, %v979
  %vm990 = vcmp.eq.f32.partialorder %v989, 8.507059e+37
  %v991 = vand.u32 %v979, 2147483648
  %v992 = vor.u32 1.1754944e-38, %v991
  %v993 = vsel %vm990, %v992, %v988
  %v994 = vmul.f32 1.0, %v993
  %v995 = vmul.f32 %v928, %v837
  %v996 = vmul.f32 %v886, %v952
  %v997 = vadd.f32 %v995, %v996
  %v998 = vtanh.pop %v997
  %v999 = vmul.f32 %v994, %v998
  %s1000 = scalar_lea.vmem [#allocation3], 6
  %1001 = vst.msk [vmem:[%s1000] sm:$0x3] %vm113, %v999
  %s1002 = scalar_lea.vmem [#allocation2], 8
  %v1003 = vld [vmem:[%s1002] sm:$0x3]
  %v1005 = vsel %vm367, %v999, 0
  %1007 = vmatpush.msra.mxu0 0.0
  %1008 = vmatpush.msra.mxu0 0.0
  %1009 = vmatpush.msra.mxu0 0.0
  %1010 = vmatpush.msra.mxu0 0.0
  %1011 = vmatpush.msra.mxu0 0.0
  %1012 = vmatpush.msra.mxu0 0.0
  %1013 = vmatpush.msra.mxu0 0.0
  %1014 = vmatpush.msra.mxu0 0.0
  %1015 = vmatpush.msra.mxu0 0.0
  %1016 = vmatpush.msra.mxu0 0.0
  %1017 = vmatpush.msra.mxu0 0.0
  %1018 = vmatpush.msra.mxu0 0.0
  %1019 = vmatpush.msra.mxu0 %v350
  %1020 = vmatpush.msra.mxu0 %v349
  %1021 = vmatpush.msra.mxu0 %v348
  %1022 = vmatpush.msra.mxu0 %v347
  %1023 = vmatmul.f32.gmra.mxu0 %v1005
  %v1024 = vpop.f32.mrf.mxu0
  %v1025 = vadd.f32 0.0, %v1024
  %1026 = vdwg.mxu0
  %v1027 = vadd.f32 %v1003, %v1025
  %v1028 = vxor.u32 %v1027, 2147483648
  %v1029 = vmul.f32 %v1028, 1.442695
  %v1030 = vpow.pop %v1029
  %v1031 = vadd.f32 %v1030, 1.0
  %v1032 = vrcp.pop %v1031
  %v1033 = vmul.f32 %v1031, %v1032
  %v1034 = vsub.f32 1.0, %v1033
  %v1035 = vmul.f32 %v1032, %v1034
  %v1036 = vadd.f32 %v1032, %v1035
  %vm1037 = vweird.f32 %v1031
  %vm1038 = vweird.f32 %v1032
  %vm1039 = vmor %vm1037, %vm1038
  %v1040 = vsel %vm1039, %v1032, %v1036
  %v1041 = vand.u32 2147483647, %v1031
  %vm1042 = vcmp.eq.f32.partialorder %v1041, 8.507059e+37
  %v1043 = vand.u32 %v1031, 2147483648
  %v1044 = vor.u32 1.1754944e-38, %v1043
  %v1045 = vsel %vm1042, %v1044, %v1040
  %v1046 = vmul.f32 1.0, %v1045
  %s1047 = scalar_lea.vmem [#allocation2], 24
  %v1048 = vld [vmem:[%s1047] sm:$0x3]
  %1049 = vmatpush.msra.mxu0 0.0
  %1050 = vmatpush.msra.mxu0 0.0
  %1051 = vmatpush.msra.mxu0 0.0
  %1052 = vmatpush.msra.mxu0 0.0
  %1053 = vmatpush.msra.mxu0 0.0
  %1054 = vmatpush.msra.mxu0 0.0
  %1055 = vmatpush.msra.mxu0 0.0
  %1056 = vmatpush.msra.mxu0 0.0
  %1057 = vmatpush.msra.mxu0 0.0
  %1058 = vmatpush.msra.mxu0 0.0
  %1059 = vmatpush.msra.mxu0 0.0
  %1060 = vmatpush.msra.mxu0 0.0
  %1061 = vmatpush.msra.mxu0 %v355
  %1062 = vmatpush.msra.mxu0 %v354
  %1063 = vmatpush.msra.mxu0 %v353
  %1064 = vmatpush.msra.mxu0 %v352
  %1065 = vmatmul.f32.gmra.mxu0 %v1005
  %v1066 = vpop.f32.mrf.mxu0
  %v1067 = vadd.f32 0.0, %v1066
  %1068 = vdwg.mxu0
  %v1069 = vadd.f32 %v1048, %v1067
  %v1070 = vxor.u32 %v1069, 2147483648
  %v1071 = vmul.f32 %v1070, 1.442695
  %v1072 = vpow.pop %v1071
  %v1073 = vadd.f32 %v1072, 1.0
  %v1074 = vrcp.pop %v1073
  %v1075 = vmul.f32 %v1073, %v1074
  %v1076 = vsub.f32 1.0, %v1075
  %v1077 = vmul.f32 %v1074, %v1076
  %v1078 = vadd.f32 %v1074, %v1077
  %vm1079 = vweird.f32 %v1073
  %vm1080 = vweird.f32 %v1074
  %vm1081 = vmor %vm1079, %vm1080
  %v1082 = vsel %vm1081, %v1074, %v1078
  %v1083 = vand.u32 2147483647, %v1073
  %vm1084 = vcmp.eq.f32.partialorder %v1083, 8.507059e+37
  %v1085 = vand.u32 %v1073, 2147483648
  %v1086 = vor.u32 1.1754944e-38, %v1085
  %v1087 = vsel %vm1084, %v1086, %v1082
  %v1088 = vmul.f32 1.0, %v1087
  %s1089 = scalar_lea.vmem [#allocation2], 40
  %v1090 = vld [vmem:[%s1089] sm:$0x3]
  %1091 = vmatpush.msra.mxu0 0.0
  %1092 = vmatpush.msra.mxu0 0.0
  %1093 = vmatpush.msra.mxu0 0.0
  %1094 = vmatpush.msra.mxu0 0.0
  %1095 = vmatpush.msra.mxu0 0.0
  %1096 = vmatpush.msra.mxu0 0.0
  %1097 = vmatpush.msra.mxu0 0.0
  %1098 = vmatpush.msra.mxu0 0.0
  %1099 = vmatpush.msra.mxu0 0.0
  %1100 = vmatpush.msra.mxu0 0.0
  %1101 = vmatpush.msra.mxu0 0.0
  %1102 = vmatpush.msra.mxu0 0.0
  %1103 = vmatpush.msra.mxu0 %v360
  %1104 = vmatpush.msra.mxu0 %v359
  %1105 = vmatpush.msra.mxu0 %v358
  %1106 = vmatpush.msra.mxu0 %v357
  %1107 = vmatmul.f32.gmra.mxu0 %v1005
  %v1108 = vpop.f32.mrf.mxu0
  %v1109 = vadd.f32 0.0, %v1108
  %1110 = vdwg.mxu0
  %v1111 = vadd.f32 %v1090, %v1109
  %v1112 = vtanh.pop %v1111
  %s1113 = scalar_lea.vmem [#allocation2], 56
  %v1114 = vld [vmem:[%s1113] sm:$0x3]
  %1115 = vmatpush.msra.mxu0 0.0
  %1116 = vmatpush.msra.mxu0 0.0
  %1117 = vmatpush.msra.mxu0 0.0
  %1118 = vmatpush.msra.mxu0 0.0
  %1119 = vmatpush.msra.mxu0 0.0
  %1120 = vmatpush.msra.mxu0 0.0
  %1121 = vmatpush.msra.mxu0 0.0
  %1122 = vmatpush.msra.mxu0 0.0
  %1123 = vmatpush.msra.mxu0 0.0
  %1124 = vmatpush.msra.mxu0 0.0
  %1125 = vmatpush.msra.mxu0 0.0
  %1126 = vmatpush.msra.mxu0 0.0
  %1127 = vmatpush.msra.mxu0 %v365
  %1128 = vmatpush.msra.mxu0 %v364
  %1129 = vmatpush.msra.mxu0 %v363
  %1130 = vmatpush.msra.mxu0 %v362
  %1131 = vmatmul.f32.gmra.mxu0 %v1005
  %v1132 = vpop.f32.mrf.mxu0
  %v1133 = vadd.f32 0.0, %v1132
  %1134 = vdwg.mxu0
  %v1135 = vadd.f32 %v1114, %v1133
  %v1136 = vxor.u32 %v1135, 2147483648
  %v1137 = vmul.f32 %v1136, 1.442695
  %v1138 = vpow.pop %v1137
  %v1139 = vadd.f32 %v1138, 1.0
  %v1140 = vrcp.pop %v1139
  %v1141 = vmul.f32 %v1139, %v1140
  %v1142 = vsub.f32 1.0, %v1141
  %v1143 = vmul.f32 %v1140, %v1142
  %v1144 = vadd.f32 %v1140, %v1143
  %vm1145 = vweird.f32 %v1139
  %vm1146 = vweird.f32 %v1140
  %vm1147 = vmor %vm1145, %vm1146
  %v1148 = vsel %vm1147, %v1140, %v1144
  %v1149 = vand.u32 2147483647, %v1139
  %vm1150 = vcmp.eq.f32.partialorder %v1149, 8.507059e+37
  %v1151 = vand.u32 %v1139, 2147483648
  %v1152 = vor.u32 1.1754944e-38, %v1151
  %v1153 = vsel %vm1150, %v1152, %v1148
  %v1154 = vmul.f32 1.0, %v1153
  %v1155 = vmul.f32 %v1088, %v997
  %v1156 = vmul.f32 %v1046, %v1112
  %v1157 = vadd.f32 %v1155, %v1156
  %v1158 = vtanh.pop %v1157
  %v1159 = vmul.f32 %v1154, %v1158
  %s1160 = scalar_lea.vmem [#allocation3], 8
  %1161 = vst.msk [vmem:[%s1160] sm:$0x3] %vm113, %v1159
  %s1162 = scalar_lea.vmem [#allocation2], 10
  %v1163 = vld [vmem:[%s1162] sm:$0x3]
  %v1165 = vsel %vm367, %v1159, 0
  %1167 = vmatpush.msra.mxu0 0.0
  %1168 = vmatpush.msra.mxu0 0.0
  %1169 = vmatpush.msra.mxu0 0.0
  %1170 = vmatpush.msra.mxu0 0.0
  %1171 = vmatpush.msra.mxu0 0.0
  %1172 = vmatpush.msra.mxu0 0.0
  %1173 = vmatpush.msra.mxu0 0.0
  %1174 = vmatpush.msra.mxu0 0.0
  %1175 = vmatpush.msra.mxu0 0.0
  %1176 = vmatpush.msra.mxu0 0.0
  %1177 = vmatpush.msra.mxu0 0.0
  %1178 = vmatpush.msra.mxu0 0.0
  %1179 = vmatpush.msra.mxu0 %v350
  %1180 = vmatpush.msra.mxu0 %v349
  %1181 = vmatpush.msra.mxu0 %v348
  %1182 = vmatpush.msra.mxu0 %v347
  %1183 = vmatmul.f32.gmra.mxu0 %v1165
  %v1184 = vpop.f32.mrf.mxu0
  %v1185 = vadd.f32 0.0, %v1184
  %1186 = vdwg.mxu0
  %v1187 = vadd.f32 %v1163, %v1185
  %v1188 = vxor.u32 %v1187, 2147483648
  %v1189 = vmul.f32 %v1188, 1.442695
  %v1190 = vpow.pop %v1189
  %v1191 = vadd.f32 %v1190, 1.0
  %v1192 = vrcp.pop %v1191
  %v1193 = vmul.f32 %v1191, %v1192
  %v1194 = vsub.f32 1.0, %v1193
  %v1195 = vmul.f32 %v1192, %v1194
  %v1196 = vadd.f32 %v1192, %v1195
  %vm1197 = vweird.f32 %v1191
  %vm1198 = vweird.f32 %v1192
  %vm1199 = vmor %vm1197, %vm1198
  %v1200 = vsel %vm1199, %v1192, %v1196
  %v1201 = vand.u32 2147483647, %v1191
  %vm1202 = vcmp.eq.f32.partialorder %v1201, 8.507059e+37
  %v1203 = vand.u32 %v1191, 2147483648
  %v1204 = vor.u32 1.1754944e-38, %v1203
  %v1205 = vsel %vm1202, %v1204, %v1200
  %v1206 = vmul.f32 1.0, %v1205
  %s1207 = scalar_lea.vmem [#allocation2], 26
  %v1208 = vld [vmem:[%s1207] sm:$0x3]
  %1209 = vmatpush.msra.mxu0 0.0
  %1210 = vmatpush.msra.mxu0 0.0
  %1211 = vmatpush.msra.mxu0 0.0
  %1212 = vmatpush.msra.mxu0 0.0
  %1213 = vmatpush.msra.mxu0 0.0
  %1214 = vmatpush.msra.mxu0 0.0
  %1215 = vmatpush.msra.mxu0 0.0
  %1216 = vmatpush.msra.mxu0 0.0
  %1217 = vmatpush.msra.mxu0 0.0
  %1218 = vmatpush.msra.mxu0 0.0
  %1219 = vmatpush.msra.mxu0 0.0
  %1220 = vmatpush.msra.mxu0 0.0
  %1221 = vmatpush.msra.mxu0 %v355
  %1222 = vmatpush.msra.mxu0 %v354
  %1223 = vmatpush.msra.mxu0 %v353
  %1224 = vmatpush.msra.mxu0 %v352
  %1225 = vmatmul.f32.gmra.mxu0 %v1165
  %v1226 = vpop.f32.mrf.mxu0
  %v1227 = vadd.f32 0.0, %v1226
  %1228 = vdwg.mxu0
  %v1229 = vadd.f32 %v1208, %v1227
  %v1230 = vxor.u32 %v1229, 2147483648
  %v1231 = vmul.f32 %v1230, 1.442695
  %v1232 = vpow.pop %v1231
  %v1233 = vadd.f32 %v1232, 1.0
  %v1234 = vrcp.pop %v1233
  %v1235 = vmul.f32 %v1233, %v1234
  %v1236 = vsub.f32 1.0, %v1235
  %v1237 = vmul.f32 %v1234, %v1236
  %v1238 = vadd.f32 %v1234, %v1237
  %vm1239 = vweird.f32 %v1233
  %vm1240 = vweird.f32 %v1234
  %vm1241 = vmor %vm1239, %vm1240
  %v1242 = vsel %vm1241, %v1234, %v1238
  %v1243 = vand.u32 2147483647, %v1233
  %vm1244 = vcmp.eq.f32.partialorder %v1243, 8.507059e+37
  %v1245 = vand.u32 %v1233, 2147483648
  %v1246 = vor.u32 1.1754944e-38, %v1245
  %v1247 = vsel %vm1244, %v1246, %v1242
  %v1248 = vmul.f32 1.0, %v1247
  %s1249 = scalar_lea.vmem [#allocation2], 42
  %v1250 = vld [vmem:[%s1249] sm:$0x3]
  %1251 = vmatpush.msra.mxu0 0.0
  %1252 = vmatpush.msra.mxu0 0.0
  %1253 = vmatpush.msra.mxu0 0.0
  %1254 = vmatpush.msra.mxu0 0.0
  %1255 = vmatpush.msra.mxu0 0.0
  %1256 = vmatpush.msra.mxu0 0.0
  %1257 = vmatpush.msra.mxu0 0.0
  %1258 = vmatpush.msra.mxu0 0.0
  %1259 = vmatpush.msra.mxu0 0.0
  %1260 = vmatpush.msra.mxu0 0.0
  %1261 = vmatpush.msra.mxu0 0.0
  %1262 = vmatpush.msra.mxu0 0.0
  %1263 = vmatpush.msra.mxu0 %v360
  %1264 = vmatpush.msra.mxu0 %v359
  %1265 = vmatpush.msra.mxu0 %v358
  %1266 = vmatpush.msra.mxu0 %v357
  %1267 = vmatmul.f32.gmra.mxu0 %v1165
  %v1268 = vpop.f32.mrf.mxu0
  %v1269 = vadd.f32 0.0, %v1268
  %1270 = vdwg.mxu0
  %v1271 = vadd.f32 %v1250, %v1269
  %v1272 = vtanh.pop %v1271
  %s1273 = scalar_lea.vmem [#allocation2], 58
  %v1274 = vld [vmem:[%s1273] sm:$0x3]
  %1275 = vmatpush.msra.mxu0 0.0
  %1276 = vmatpush.msra.mxu0 0.0
  %1277 = vmatpush.msra.mxu0 0.0
  %1278 = vmatpush.msra.mxu0 0.0
  %1279 = vmatpush.msra.mxu0 0.0
  %1280 = vmatpush.msra.mxu0 0.0
  %1281 = vmatpush.msra.mxu0 0.0
  %1282 = vmatpush.msra.mxu0 0.0
  %1283 = vmatpush.msra.mxu0 0.0
  %1284 = vmatpush.msra.mxu0 0.0
  %1285 = vmatpush.msra.mxu0 0.0
  %1286 = vmatpush.msra.mxu0 0.0
  %1287 = vmatpush.msra.mxu0 %v365
  %1288 = vmatpush.msra.mxu0 %v364
  %1289 = vmatpush.msra.mxu0 %v363
  %1290 = vmatpush.msra.mxu0 %v362
  %1291 = vmatmul.f32.gmra.mxu0 %v1165
  %v1292 = vpop.f32.mrf.mxu0
  %v1293 = vadd.f32 0.0, %v1292
  %1294 = vdwg.mxu0
  %v1295 = vadd.f32 %v1274, %v1293
  %v1296 = vxor.u32 %v1295, 2147483648
  %v1297 = vmul.f32 %v1296, 1.442695
  %v1298 = vpow.pop %v1297
  %v1299 = vadd.f32 %v1298, 1.0
  %v1300 = vrcp.pop %v1299
  %v1301 = vmul.f32 %v1299, %v1300
  %v1302 = vsub.f32 1.0, %v1301
  %v1303 = vmul.f32 %v1300, %v1302
  %v1304 = vadd.f32 %v1300, %v1303
  %vm1305 = vweird.f32 %v1299
  %vm1306 = vweird.f32 %v1300
  %vm1307 = vmor %vm1305, %vm1306
  %v1308 = vsel %vm1307, %v1300, %v1304
  %v1309 = vand.u32 2147483647, %v1299
  %vm1310 = vcmp.eq.f32.partialorder %v1309, 8.507059e+37
  %v1311 = vand.u32 %v1299, 2147483648
  %v1312 = vor.u32 1.1754944e-38, %v1311
  %v1313 = vsel %vm1310, %v1312, %v1308
  %v1314 = vmul.f32 1.0, %v1313
  %v1315 = vmul.f32 %v1248, %v1157
  %v1316 = vmul.f32 %v1206, %v1272
  %v1317 = vadd.f32 %v1315, %v1316
  %v1318 = vtanh.pop %v1317
  %v1319 = vmul.f32 %v1314, %v1318
  %s1320 = scalar_lea.vmem [#allocation3], 10
  %1321 = vst.msk [vmem:[%s1320] sm:$0x3] %vm113, %v1319
  %s1322 = scalar_lea.vmem [#allocation2], 12
  %v1323 = vld [vmem:[%s1322] sm:$0x3]
  %v1325 = vsel %vm367, %v1319, 0
  %1327 = vmatpush.msra.mxu0 0.0
  %1328 = vmatpush.msra.mxu0 0.0
  %1329 = vmatpush.msra.mxu0 0.0
  %1330 = vmatpush.msra.mxu0 0.0
  %1331 = vmatpush.msra.mxu0 0.0
  %1332 = vmatpush.msra.mxu0 0.0
  %1333 = vmatpush.msra.mxu0 0.0
  %1334 = vmatpush.msra.mxu0 0.0
  %1335 = vmatpush.msra.mxu0 0.0
  %1336 = vmatpush.msra.mxu0 0.0
  %1337 = vmatpush.msra.mxu0 0.0
  %1338 = vmatpush.msra.mxu0 0.0
  %1339 = vmatpush.msra.mxu0 %v350
  %1340 = vmatpush.msra.mxu0 %v349
  %1341 = vmatpush.msra.mxu0 %v348
  %1342 = vmatpush.msra.mxu0 %v347
  %1343 = vmatmul.f32.gmra.mxu0 %v1325
  %v1344 = vpop.f32.mrf.mxu0
  %v1345 = vadd.f32 0.0, %v1344
  %1346 = vdwg.mxu0
  %v1347 = vadd.f32 %v1323, %v1345
  %v1348 = vxor.u32 %v1347, 2147483648
  %v1349 = vmul.f32 %v1348, 1.442695
  %v1350 = vpow.pop %v1349
  %v1351 = vadd.f32 %v1350, 1.0
  %v1352 = vrcp.pop %v1351
  %v1353 = vmul.f32 %v1351, %v1352
  %v1354 = vsub.f32 1.0, %v1353
  %v1355 = vmul.f32 %v1352, %v1354
  %v1356 = vadd.f32 %v1352, %v1355
  %vm1357 = vweird.f32 %v1351
  %vm1358 = vweird.f32 %v1352
  %vm1359 = vmor %vm1357, %vm1358
  %v1360 = vsel %vm1359, %v1352, %v1356
  %v1361 = vand.u32 2147483647, %v1351
  %vm1362 = vcmp.eq.f32.partialorder %v1361, 8.507059e+37
  %v1363 = vand.u32 %v1351, 2147483648
  %v1364 = vor.u32 1.1754944e-38, %v1363
  %v1365 = vsel %vm1362, %v1364, %v1360
  %v1366 = vmul.f32 1.0, %v1365
  %s1367 = scalar_lea.vmem [#allocation2], 28
  %v1368 = vld [vmem:[%s1367] sm:$0x3]
  %1369 = vmatpush.msra.mxu0 0.0
  %1370 = vmatpush.msra.mxu0 0.0
  %1371 = vmatpush.msra.mxu0 0.0
  %1372 = vmatpush.msra.mxu0 0.0
  %1373 = vmatpush.msra.mxu0 0.0
  %1374 = vmatpush.msra.mxu0 0.0
  %1375 = vmatpush.msra.mxu0 0.0
  %1376 = vmatpush.msra.mxu0 0.0
  %1377 = vmatpush.msra.mxu0 0.0
  %1378 = vmatpush.msra.mxu0 0.0
  %1379 = vmatpush.msra.mxu0 0.0
  %1380 = vmatpush.msra.mxu0 0.0
  %1381 = vmatpush.msra.mxu0 %v355
  %1382 = vmatpush.msra.mxu0 %v354
  %1383 = vmatpush.msra.mxu0 %v353
  %1384 = vmatpush.msra.mxu0 %v352
  %1385 = vmatmul.f32.gmra.mxu0 %v1325
  %v1386 = vpop.f32.mrf.mxu0
  %v1387 = vadd.f32 0.0, %v1386
  %1388 = vdwg.mxu0
  %v1389 = vadd.f32 %v1368, %v1387
  %v1390 = vxor.u32 %v1389, 2147483648
  %v1391 = vmul.f32 %v1390, 1.442695
  %v1392 = vpow.pop %v1391
  %v1393 = vadd.f32 %v1392, 1.0
  %v1394 = vrcp.pop %v1393
  %v1395 = vmul.f32 %v1393, %v1394
  %v1396 = vsub.f32 1.0, %v1395
  %v1397 = vmul.f32 %v1394, %v1396
  %v1398 = vadd.f32 %v1394, %v1397
  %vm1399 = vweird.f32 %v1393
  %vm1400 = vweird.f32 %v1394
  %vm1401 = vmor %vm1399, %vm1400
  %v1402 = vsel %vm1401, %v1394, %v1398
  %v1403 = vand.u32 2147483647, %v1393
  %vm1404 = vcmp.eq.f32.partialorder %v1403, 8.507059e+37
  %v1405 = vand.u32 %v1393, 2147483648
  %v1406 = vor.u32 1.1754944e-38, %v1405
  %v1407 = vsel %vm1404, %v1406, %v1402
  %v1408 = vmul.f32 1.0, %v1407
  %s1409 = scalar_lea.vmem [#allocation2], 44
  %v1410 = vld [vmem:[%s1409] sm:$0x3]
  %1411 = vmatpush.msra.mxu0 0.0
  %1412 = vmatpush.msra.mxu0 0.0
  %1413 = vmatpush.msra.mxu0 0.0
  %1414 = vmatpush.msra.mxu0 0.0
  %1415 = vmatpush.msra.mxu0 0.0
  %1416 = vmatpush.msra.mxu0 0.0
  %1417 = vmatpush.msra.mxu0 0.0
  %1418 = vmatpush.msra.mxu0 0.0
  %1419 = vmatpush.msra.mxu0 0.0
  %1420 = vmatpush.msra.mxu0 0.0
  %1421 = vmatpush.msra.mxu0 0.0
  %1422 = vmatpush.msra.mxu0 0.0
  %1423 = vmatpush.msra.mxu0 %v360
  %1424 = vmatpush.msra.mxu0 %v359
  %1425 = vmatpush.msra.mxu0 %v358
  %1426 = vmatpush.msra.mxu0 %v357
  %1427 = vmatmul.f32.gmra.mxu0 %v1325
  %v1428 = vpop.f32.mrf.mxu0
  %v1429 = vadd.f32 0.0, %v1428
  %1430 = vdwg.mxu0
  %v1431 = vadd.f32 %v1410, %v1429
  %v1432 = vtanh.pop %v1431
  %s1433 = scalar_lea.vmem [#allocation2], 60
  %v1434 = vld [vmem:[%s1433] sm:$0x3]
  %1435 = vmatpush.msra.mxu0 0.0
  %1436 = vmatpush.msra.mxu0 0.0
  %1437 = vmatpush.msra.mxu0 0.0
  %1438 = vmatpush.msra.mxu0 0.0
  %1439 = vmatpush.msra.mxu0 0.0
  %1440 = vmatpush.msra.mxu0 0.0
  %1441 = vmatpush.msra.mxu0 0.0
  %1442 = vmatpush.msra.mxu0 0.0
  %1443 = vmatpush.msra.mxu0 0.0
  %1444 = vmatpush.msra.mxu0 0.0
  %1445 = vmatpush.msra.mxu0 0.0
  %1446 = vmatpush.msra.mxu0 0.0
  %1447 = vmatpush.msra.mxu0 %v365
  %1448 = vmatpush.msra.mxu0 %v364
  %1449 = vmatpush.msra.mxu0 %v363
  %1450 = vmatpush.msra.mxu0 %v362
  %1451 = vmatmul.f32.gmra.mxu0 %v1325
  %v1452 = vpop.f32.mrf.mxu0
  %v1453 = vadd.f32 0.0, %v1452
  %1454 = vdwg.mxu0
  %v1455 = vadd.f32 %v1434, %v1453
  %v1456 = vxor.u32 %v1455, 2147483648
  %v1457 = vmul.f32 %v1456, 1.442695
  %v1458 = vpow.pop %v1457
  %v1459 = vadd.f32 %v1458, 1.0
  %v1460 = vrcp.pop %v1459
  %v1461 = vmul.f32 %v1459, %v1460
  %v1462 = vsub.f32 1.0, %v1461
  %v1463 = vmul.f32 %v1460, %v1462
  %v1464 = vadd.f32 %v1460, %v1463
  %vm1465 = vweird.f32 %v1459
  %vm1466 = vweird.f32 %v1460
  %vm1467 = vmor %vm1465, %vm1466
  %v1468 = vsel %vm1467, %v1460, %v1464
  %v1469 = vand.u32 2147483647, %v1459
  %vm1470 = vcmp.eq.f32.partialorder %v1469, 8.507059e+37
  %v1471 = vand.u32 %v1459, 2147483648
  %v1472 = vor.u32 1.1754944e-38, %v1471
  %v1473 = vsel %vm1470, %v1472, %v1468
  %v1474 = vmul.f32 1.0, %v1473
  %v1475 = vmul.f32 %v1408, %v1317
  %v1476 = vmul.f32 %v1366, %v1432
  %v1477 = vadd.f32 %v1475, %v1476
  %v1478 = vtanh.pop %v1477
  %v1479 = vmul.f32 %v1474, %v1478
  %s1480 = scalar_lea.vmem [#allocation3], 12
  %1481 = vst.msk [vmem:[%s1480] sm:$0x3] %vm113, %v1479
  %s1482 = scalar_lea.vmem [#allocation2], 14
  %v1483 = vld [vmem:[%s1482] sm:$0x3]
  %v1485 = vsel %vm367, %v1479, 0
  %1487 = vmatpush.msra.mxu0 0.0
  %1488 = vmatpush.msra.mxu0 0.0
  %1489 = vmatpush.msra.mxu0 0.0
  %1490 = vmatpush.msra.mxu0 0.0
  %1491 = vmatpush.msra.mxu0 0.0
  %1492 = vmatpush.msra.mxu0 0.0
  %1493 = vmatpush.msra.mxu0 0.0
  %1494 = vmatpush.msra.mxu0 0.0
  %1495 = vmatpush.msra.mxu0 0.0
  %1496 = vmatpush.msra.mxu0 0.0
  %1497 = vmatpush.msra.mxu0 0.0
  %1498 = vmatpush.msra.mxu0 0.0
  %1499 = vmatpush.msra.mxu0 %v350
  %1500 = vmatpush.msra.mxu0 %v349
  %1501 = vmatpush.msra.mxu0 %v348
  %1502 = vmatpush.msra.mxu0 %v347
  %1503 = vmatmul.f32.gmra.mxu0 %v1485
  %v1504 = vpop.f32.mrf.mxu0
  %v1505 = vadd.f32 0.0, %v1504
  %1506 = vdwg.mxu0
  %v1507 = vadd.f32 %v1483, %v1505
  %v1508 = vxor.u32 %v1507, 2147483648
  %v1509 = vmul.f32 %v1508, 1.442695
  %v1510 = vpow.pop %v1509
  %v1511 = vadd.f32 %v1510, 1.0
  %v1512 = vrcp.pop %v1511
  %v1513 = vmul.f32 %v1511, %v1512
  %v1514 = vsub.f32 1.0, %v1513
  %v1515 = vmul.f32 %v1512, %v1514
  %v1516 = vadd.f32 %v1512, %v1515
  %vm1517 = vweird.f32 %v1511
  %vm1518 = vweird.f32 %v1512
  %vm1519 = vmor %vm1517, %vm1518
  %v1520 = vsel %vm1519, %v1512, %v1516
  %v1521 = vand.u32 2147483647, %v1511
  %vm1522 = vcmp.eq.f32.partialorder %v1521, 8.507059e+37
  %v1523 = vand.u32 %v1511, 2147483648
  %v1524 = vor.u32 1.1754944e-38, %v1523
  %v1525 = vsel %vm1522, %v1524, %v1520
  %v1526 = vmul.f32 1.0, %v1525
  %s1527 = scalar_lea.vmem [#allocation2], 30
  %v1528 = vld [vmem:[%s1527] sm:$0x3]
  %1529 = vmatpush.msra.mxu0 0.0
  %1530 = vmatpush.msra.mxu0 0.0
  %1531 = vmatpush.msra.mxu0 0.0
  %1532 = vmatpush.msra.mxu0 0.0
  %1533 = vmatpush.msra.mxu0 0.0
  %1534 = vmatpush.msra.mxu0 0.0
  %1535 = vmatpush.msra.mxu0 0.0
  %1536 = vmatpush.msra.mxu0 0.0
  %1537 = vmatpush.msra.mxu0 0.0
  %1538 = vmatpush.msra.mxu0 0.0
  %1539 = vmatpush.msra.mxu0 0.0
  %1540 = vmatpush.msra.mxu0 0.0
  %1541 = vmatpush.msra.mxu0 %v355
  %1542 = vmatpush.msra.mxu0 %v354
  %1543 = vmatpush.msra.mxu0 %v353
  %1544 = vmatpush.msra.mxu0 %v352
  %1545 = vmatmul.f32.gmra.mxu0 %v1485
  %v1546 = vpop.f32.mrf.mxu0
  %v1547 = vadd.f32 0.0, %v1546
  %1548 = vdwg.mxu0
  %v1549 = vadd.f32 %v1528, %v1547
  %v1550 = vxor.u32 %v1549, 2147483648
  %v1551 = vmul.f32 %v1550, 1.442695
  %v1552 = vpow.pop %v1551
  %v1553 = vadd.f32 %v1552, 1.0
  %v1554 = vrcp.pop %v1553
  %v1555 = vmul.f32 %v1553, %v1554
  %v1556 = vsub.f32 1.0, %v1555
  %v1557 = vmul.f32 %v1554, %v1556
  %v1558 = vadd.f32 %v1554, %v1557
  %vm1559 = vweird.f32 %v1553
  %vm1560 = vweird.f32 %v1554
  %vm1561 = vmor %vm1559, %vm1560
  %v1562 = vsel %vm1561, %v1554, %v1558
  %v1563 = vand.u32 2147483647, %v1553
  %vm1564 = vcmp.eq.f32.partialorder %v1563, 8.507059e+37
  %v1565 = vand.u32 %v1553, 2147483648
  %v1566 = vor.u32 1.1754944e-38, %v1565
  %v1567 = vsel %vm1564, %v1566, %v1562
  %v1568 = vmul.f32 1.0, %v1567
  %s1569 = scalar_lea.vmem [#allocation2], 46
  %v1570 = vld [vmem:[%s1569] sm:$0x3]
  %1571 = vmatpush.msra.mxu0 0.0
  %1572 = vmatpush.msra.mxu0 0.0
  %1573 = vmatpush.msra.mxu0 0.0
  %1574 = vmatpush.msra.mxu0 0.0
  %1575 = vmatpush.msra.mxu0 0.0
  %1576 = vmatpush.msra.mxu0 0.0
  %1577 = vmatpush.msra.mxu0 0.0
  %1578 = vmatpush.msra.mxu0 0.0
  %1579 = vmatpush.msra.mxu0 0.0
  %1580 = vmatpush.msra.mxu0 0.0
  %1581 = vmatpush.msra.mxu0 0.0
  %1582 = vmatpush.msra.mxu0 0.0
  %1583 = vmatpush.msra.mxu0 %v360
  %1584 = vmatpush.msra.mxu0 %v359
  %1585 = vmatpush.msra.mxu0 %v358
  %1586 = vmatpush.msra.mxu0 %v357
  %1587 = vmatmul.f32.gmra.mxu0 %v1485
  %v1588 = vpop.f32.mrf.mxu0
  %v1589 = vadd.f32 0.0, %v1588
  %1590 = vdwg.mxu0
  %v1591 = vadd.f32 %v1570, %v1589
  %v1592 = vtanh.pop %v1591
  %s1593 = scalar_lea.vmem [#allocation2], 62
  %v1594 = vld [vmem:[%s1593] sm:$0x3]
  %1595 = vmatpush.msra.mxu0 0.0
  %1596 = vmatpush.msra.mxu0 0.0
  %1597 = vmatpush.msra.mxu0 0.0
  %1598 = vmatpush.msra.mxu0 0.0
  %1599 = vmatpush.msra.mxu0 0.0
  %1600 = vmatpush.msra.mxu0 0.0
  %1601 = vmatpush.msra.mxu0 0.0
  %1602 = vmatpush.msra.mxu0 0.0
  %1603 = vmatpush.msra.mxu0 0.0
  %1604 = vmatpush.msra.mxu0 0.0
  %1605 = vmatpush.msra.mxu0 0.0
  %1606 = vmatpush.msra.mxu0 0.0
  %1607 = vmatpush.msra.mxu0 %v365
  %1608 = vmatpush.msra.mxu0 %v364
  %1609 = vmatpush.msra.mxu0 %v363
  %1610 = vmatpush.msra.mxu0 %v362
  %1611 = vmatmul.f32.gmra.mxu0 %v1485
  %v1612 = vpop.f32.mrf.mxu0
  %v1613 = vadd.f32 0.0, %v1612
  %1614 = vdwg.mxu0
  %v1615 = vadd.f32 %v1594, %v1613
  %v1616 = vxor.u32 %v1615, 2147483648
  %v1617 = vmul.f32 %v1616, 1.442695
  %v1618 = vpow.pop %v1617
  %v1619 = vadd.f32 %v1618, 1.0
  %v1620 = vrcp.pop %v1619
  %v1621 = vmul.f32 %v1619, %v1620
  %v1622 = vsub.f32 1.0, %v1621
  %v1623 = vmul.f32 %v1620, %v1622
  %v1624 = vadd.f32 %v1620, %v1623
  %vm1625 = vweird.f32 %v1619
  %vm1626 = vweird.f32 %v1620
  %vm1627 = vmor %vm1625, %vm1626
  %v1628 = vsel %vm1627, %v1620, %v1624
  %v1629 = vand.u32 2147483647, %v1619
  %vm1630 = vcmp.eq.f32.partialorder %v1629, 8.507059e+37
  %v1631 = vand.u32 %v1619, 2147483648
  %v1632 = vor.u32 1.1754944e-38, %v1631
  %v1633 = vsel %vm1630, %v1632, %v1628
  %v1634 = vmul.f32 1.0, %v1633
  %v1635 = vmul.f32 %v1568, %v1477
  %v1636 = vmul.f32 %v1526, %v1592
  %v1637 = vadd.f32 %v1635, %v1636
  %v1638 = vtanh.pop %v1637
  %v1639 = vmul.f32 %v1634, %v1638
  %s1640 = scalar_lea.vmem [#allocation3], 14
  %1641 = vst.msk [vmem:[%s1640] sm:$0x3] %vm113, %v1639
  %v1642 = vld [vmem:[#allocation3] sm:$0x3]
  %v1643 = vld [vmem:[#allocation3 + $0x2] sm:$0x3]
  %v1644 = vld [vmem:[#allocation3 + $0x4] sm:$0x3]
  %v1645 = vld [vmem:[#allocation3 + $0x6] sm:$0x3]
  %v1646 = vld [vmem:[#allocation3 + $0x8] sm:$0x3]
  %v1647 = vld [vmem:[#allocation3 + $0xa] sm:$0x3]
  %v1648 = vld [vmem:[#allocation3 + $0xc] sm:$0x3]
  %v1649 = vld [vmem:[#allocation3 + $0xe] sm:$0x3]
  %v1650 = vld [vmem:[%s4] sm:$0xff]
  %v1651 = vld [vmem:[%s4 + $0x8] sm:$0xff]
  %v1652 = vld [vmem:[%s4 + $0x10] sm:$0xff]
  %v1653 = vld [vmem:[%s4 + $0x18] sm:$0xff]
  %v1654 = vld [vmem:[%s6] sm:$0x1]
  %v1656 = vperm.slane %v1654, 0
  %1666 = vst [vmem:[#allocation1] ss:$4 sm:$0xff] %v1642
  %s1667 = scalar_lea.vmem [#allocation1], 1
  %1668 = vst [vmem:[%s1667] ss:$4 sm:$0xff] %v1643
  %s1669 = scalar_lea.vmem [#allocation1], 2
  %1670 = vst [vmem:[%s1669] ss:$4 sm:$0xff] %v1644
  %s1671 = scalar_lea.vmem [#allocation1], 3
  %1672 = vst [vmem:[%s1671] ss:$4 sm:$0xff] %v1645
  %s1673 = scalar_lea.vmem [#allocation1], 32
  %1674 = vst [vmem:[%s1673] ss:$4 sm:$0xff] %v1646
  %s1675 = scalar_lea.vmem [#allocation1], 33
  %1676 = vst [vmem:[%s1675] ss:$4 sm:$0xff] %v1647
  %s1677 = scalar_lea.vmem [#allocation1], 34
  %1678 = vst [vmem:[%s1677] ss:$4 sm:$0xff] %v1648
  %s1679 = scalar_lea.vmem [#allocation1], 35
  %1680 = vst [vmem:[%s1679] ss:$4 sm:$0xff] %v1649
  %v1681 = vld.sshfl [vmem:[#allocation1] sm:$0xff pattern:$0x73625140]
  %v1682 = vld.sshfl [vmem:[#allocation1 + $0x20] sm:$0xff pattern:$0x73625140]
  %v1683 = vsel %vm367, %v1681, 0
  %v1685 = vsel %vm367, %v1682, 0
  %1687 = vmatpush.msra.mxu0 0.0
  %1688 = vmatpush.msra.mxu0 0.0
  %1689 = vmatpush.msra.mxu0 0.0
  %1690 = vmatpush.msra.mxu0 0.0
  %1691 = vmatpush.msra.mxu0 0.0
  %1692 = vmatpush.msra.mxu0 0.0
  %1693 = vmatpush.msra.mxu0 0.0
  %1694 = vmatpush.msra.mxu0 0.0
  %1695 = vmatpush.msra.mxu0 0.0
  %1696 = vmatpush.msra.mxu0 0.0
  %1697 = vmatpush.msra.mxu0 0.0
  %1698 = vmatpush.msra.mxu0 0.0
  %1699 = vmatpush.msra.mxu0 %v1653
  %1700 = vmatpush.msra.mxu0 %v1652
  %1701 = vmatpush.msra.mxu0 %v1651
  %1702 = vmatpush.msra.mxu0 %v1650
  %1703 = vmatmul.f32.gmra.mxu0 %v1683
  %v1704 = vpop.f32.mrf.mxu0
  %v1705 = vadd.f32 %v1656, %v1704
  %1706 = vmatmul.f32.gmra.mxu0 %v1685
  %v1707 = vpop.f32.mrf.mxu0
  %v1708 = vadd.f32 %v1656, %v1707
  %1709 = vdwg.mxu0
  %v1712 = vrot.slane %v1705, 2
  %v1713 = vrot.slane %v1705, 4
  %v1714 = vrot.slane %v1705, 6
  %v1715 = vrot.slane %v1708, 2
  %v1716 = vrot.slane %v1708, 4
  %v1717 = vrot.slane %v1708, 6
  %1724 = vst.msk [vmem:[#allocation2] sm:$0x3] %vm113, %v1705
  %1725 = vst.msk [vmem:[#allocation2 + $0x2] sm:$0x3] %vm113, %v1712
  %1726 = vst.msk [vmem:[#allocation2 + $0x4] sm:$0x3] %vm113, %v1713
  %1727 = vst.msk [vmem:[#allocation2 + $0x6] sm:$0x3] %vm113, %v1714
  %1728 = vst.msk [vmem:[#allocation2 + $0x8] sm:$0x3] %vm113, %v1708
  %1729 = vst.msk [vmem:[#allocation2 + $0xa] sm:$0x3] %vm113, %v1715
  %1730 = vst.msk [vmem:[#allocation2 + $0xc] sm:$0x3] %vm113, %v1716
  %1731 = vst.msk [vmem:[#allocation2 + $0xe] sm:$0x3] %vm113, %v1717
  %s1732 = scalar_lea.vmem %s4, 32
  %v1733 = vld [vmem:[%s1732] sm:$0xff]
  %v1734 = vld [vmem:[%s1732 + $0x8] sm:$0xff]
  %v1735 = vld [vmem:[%s1732 + $0x10] sm:$0xff]
  %v1736 = vld [vmem:[%s1732 + $0x18] sm:$0xff]
  %s1737 = scalar_lea.vmem %s6, 1
  %v1738 = vld [vmem:[%s1737] sm:$0x1]
  %v1740 = vperm.slane %v1738, 0
  %1742 = vst [vmem:[#allocation1] ss:$4 sm:$0xff] %v1642
  %s1743 = scalar_lea.vmem [#allocation1], 1
  %1744 = vst [vmem:[%s1743] ss:$4 sm:$0xff] %v1643
  %s1745 = scalar_lea.vmem [#allocation1], 2
  %1746 = vst [vmem:[%s1745] ss:$4 sm:$0xff] %v1644
  %s1747 = scalar_lea.vmem [#allocation1], 3
  %1748 = vst [vmem:[%s1747] ss:$4 sm:$0xff] %v1645
  %s1749 = scalar_lea.vmem [#allocation1], 32
  %1750 = vst [vmem:[%s1749] ss:$4 sm:$0xff] %v1646
  %s1751 = scalar_lea.vmem [#allocation1], 33
  %1752 = vst [vmem:[%s1751] ss:$4 sm:$0xff] %v1647
  %s1753 = scalar_lea.vmem [#allocation1], 34
  %1754 = vst [vmem:[%s1753] ss:$4 sm:$0xff] %v1648
  %s1755 = scalar_lea.vmem [#allocation1], 35
  %1756 = vst [vmem:[%s1755] ss:$4 sm:$0xff] %v1649
  %v1757 = vld.sshfl [vmem:[#allocation1] sm:$0xff pattern:$0x73625140]
  %v1758 = vld.sshfl [vmem:[#allocation1 + $0x20] sm:$0xff pattern:$0x73625140]
  %v1759 = vsel %vm367, %v1757, 0
  %v1761 = vsel %vm367, %v1758, 0
  %1763 = vmatpush.msra.mxu0 0.0
  %1764 = vmatpush.msra.mxu0 0.0
  %1765 = vmatpush.msra.mxu0 0.0
  %1766 = vmatpush.msra.mxu0 0.0
  %1767 = vmatpush.msra.mxu0 0.0
  %1768 = vmatpush.msra.mxu0 0.0
  %1769 = vmatpush.msra.mxu0 0.0
  %1770 = vmatpush.msra.mxu0 0.0
  %1771 = vmatpush.msra.mxu0 0.0
  %1772 = vmatpush.msra.mxu0 0.0
  %1773 = vmatpush.msra.mxu0 0.0
  %1774 = vmatpush.msra.mxu0 0.0
  %1775 = vmatpush.msra.mxu0 %v1736
  %1776 = vmatpush.msra.mxu0 %v1735
  %1777 = vmatpush.msra.mxu0 %v1734
  %1778 = vmatpush.msra.mxu0 %v1733
  %1779 = vmatmul.f32.gmra.mxu0 %v1759
  %v1780 = vpop.f32.mrf.mxu0
  %v1781 = vadd.f32 %v1740, %v1780
  %1782 = vmatmul.f32.gmra.mxu0 %v1761
  %v1783 = vpop.f32.mrf.mxu0
  %v1784 = vadd.f32 %v1740, %v1783
  %1785 = vdwg.mxu0
  %v1788 = vrot.slane %v1781, 2
  %v1789 = vrot.slane %v1781, 4
  %v1790 = vrot.slane %v1781, 6
  %v1791 = vrot.slane %v1784, 2
  %v1792 = vrot.slane %v1784, 4
  %v1793 = vrot.slane %v1784, 6
  %1800 = vst.msk [vmem:[%s188] sm:$0x3] %vm113, %v1781
  %1801 = vst.msk [vmem:[%s188 + $0x2] sm:$0x3] %vm113, %v1788
  %1802 = vst.msk [vmem:[%s188 + $0x4] sm:$0x3] %vm113, %v1789
  %1803 = vst.msk [vmem:[%s188 + $0x6] sm:$0x3] %vm113, %v1790
  %1804 = vst.msk [vmem:[%s188 + $0x8] sm:$0x3] %vm113, %v1784
  %1805 = vst.msk [vmem:[%s188 + $0xa] sm:$0x3] %vm113, %v1791
  %1806 = vst.msk [vmem:[%s188 + $0xc] sm:$0x3] %vm113, %v1792
  %1807 = vst.msk [vmem:[%s188 + $0xe] sm:$0x3] %vm113, %v1793
  %s1808 = scalar_lea.vmem %s4, 64
  %v1809 = vld [vmem:[%s1808] sm:$0xff]
  %v1810 = vld [vmem:[%s1808 + $0x8] sm:$0xff]
  %v1811 = vld [vmem:[%s1808 + $0x10] sm:$0xff]
  %v1812 = vld [vmem:[%s1808 + $0x18] sm:$0xff]
  %s1813 = scalar_lea.vmem %s6, 2
  %v1814 = vld [vmem:[%s1813] sm:$0x1]
  %v1816 = vperm.slane %v1814, 0
  %1818 = vst [vmem:[#allocation1] ss:$4 sm:$0xff] %v1642
  %s1819 = scalar_lea.vmem [#allocation1], 1
  %1820 = vst [vmem:[%s1819] ss:$4 sm:$0xff] %v1643
  %s1821 = scalar_lea.vmem [#allocation1], 2
  %1822 = vst [vmem:[%s1821] ss:$4 sm:$0xff] %v1644
  %s1823 = scalar_lea.vmem [#allocation1], 3
  %1824 = vst [vmem:[%s1823] ss:$4 sm:$0xff] %v1645
  %s1825 = scalar_lea.vmem [#allocation1], 32
  %1826 = vst [vmem:[%s1825] ss:$4 sm:$0xff] %v1646
  %s1827 = scalar_lea.vmem [#allocation1], 33
  %1828 = vst [vmem:[%s1827] ss:$4 sm:$0xff] %v1647
  %s1829 = scalar_lea.vmem [#allocation1], 34
  %1830 = vst [vmem:[%s1829] ss:$4 sm:$0xff] %v1648
  %s1831 = scalar_lea.vmem [#allocation1], 35
  %1832 = vst [vmem:[%s1831] ss:$4 sm:$0xff] %v1649
  %v1833 = vld.sshfl [vmem:[#allocation1] sm:$0xff pattern:$0x73625140]
  %v1834 = vld.sshfl [vmem:[#allocation1 + $0x20] sm:$0xff pattern:$0x73625140]
  %v1835 = vsel %vm367, %v1833, 0
  %v1837 = vsel %vm367, %v1834, 0
  %1839 = vmatpush.msra.mxu0 0.0
  %1840 = vmatpush.msra.mxu0 0.0
  %1841 = vmatpush.msra.mxu0 0.0
  %1842 = vmatpush.msra.mxu0 0.0
  %1843 = vmatpush.msra.mxu0 0.0
  %1844 = vmatpush.msra.mxu0 0.0
  %1845 = vmatpush.msra.mxu0 0.0
  %1846 = vmatpush.msra.mxu0 0.0
  %1847 = vmatpush.msra.mxu0 0.0
  %1848 = vmatpush.msra.mxu0 0.0
  %1849 = vmatpush.msra.mxu0 0.0
  %1850 = vmatpush.msra.mxu0 0.0
  %1851 = vmatpush.msra.mxu0 %v1812
  %1852 = vmatpush.msra.mxu0 %v1811
  %1853 = vmatpush.msra.mxu0 %v1810
  %1854 = vmatpush.msra.mxu0 %v1809
  %1855 = vmatmul.f32.gmra.mxu0 %v1835
  %v1856 = vpop.f32.mrf.mxu0
  %v1857 = vadd.f32 %v1816, %v1856
  %1858 = vmatmul.f32.gmra.mxu0 %v1837
  %v1859 = vpop.f32.mrf.mxu0
  %v1860 = vadd.f32 %v1816, %v1859
  %1861 = vdwg.mxu0
  %v1864 = vrot.slane %v1857, 2
  %v1865 = vrot.slane %v1857, 4
  %v1866 = vrot.slane %v1857, 6
  %v1867 = vrot.slane %v1860, 2
  %v1868 = vrot.slane %v1860, 4
  %v1869 = vrot.slane %v1860, 6
  %1876 = vst.msk [vmem:[%s263] sm:$0x3] %vm113, %v1857
  %1877 = vst.msk [vmem:[%s263 + $0x2] sm:$0x3] %vm113, %v1864
  %1878 = vst.msk [vmem:[%s263 + $0x4] sm:$0x3] %vm113, %v1865
  %1879 = vst.msk [vmem:[%s263 + $0x6] sm:$0x3] %vm113, %v1866
  %1880 = vst.msk [vmem:[%s263 + $0x8] sm:$0x3] %vm113, %v1860
  %1881 = vst.msk [vmem:[%s263 + $0xa] sm:$0x3] %vm113, %v1867
  %1882 = vst.msk [vmem:[%s263 + $0xc] sm:$0x3] %vm113, %v1868
  %1883 = vst.msk [vmem:[%s263 + $0xe] sm:$0x3] %vm113, %v1869
  %s1884 = scalar_lea.vmem %s4, 96
  %v1885 = vld [vmem:[%s1884] sm:$0xff]
  %v1886 = vld [vmem:[%s1884 + $0x8] sm:$0xff]
  %v1887 = vld [vmem:[%s1884 + $0x10] sm:$0xff]
  %v1888 = vld [vmem:[%s1884 + $0x18] sm:$0xff]
  %s1889 = scalar_lea.vmem %s6, 3
  %v1890 = vld [vmem:[%s1889] sm:$0x1]
  %v1892 = vperm.slane %v1890, 0
  %1894 = vst [vmem:[#allocation1] ss:$4 sm:$0xff] %v1642
  %s1895 = scalar_lea.vmem [#allocation1], 1
  %1896 = vst [vmem:[%s1895] ss:$4 sm:$0xff] %v1643
  %s1897 = scalar_lea.vmem [#allocation1], 2
  %1898 = vst [vmem:[%s1897] ss:$4 sm:$0xff] %v1644
  %s1899 = scalar_lea.vmem [#allocation1], 3
  %1900 = vst [vmem:[%s1899] ss:$4 sm:$0xff] %v1645
  %s1901 = scalar_lea.vmem [#allocation1], 32
  %1902 = vst [vmem:[%s1901] ss:$4 sm:$0xff] %v1646
  %s1903 = scalar_lea.vmem [#allocation1], 33
  %1904 = vst [vmem:[%s1903] ss:$4 sm:$0xff] %v1647
  %s1905 = scalar_lea.vmem [#allocation1], 34
  %1906 = vst [vmem:[%s1905] ss:$4 sm:$0xff] %v1648
  %s1907 = scalar_lea.vmem [#allocation1], 35
  %1908 = vst [vmem:[%s1907] ss:$4 sm:$0xff] %v1649
  %v1909 = vld.sshfl [vmem:[#allocation1] sm:$0xff pattern:$0x73625140]
  %v1910 = vld.sshfl [vmem:[#allocation1 + $0x20] sm:$0xff pattern:$0x73625140]
  %v1911 = vsel %vm367, %v1909, 0
  %v1913 = vsel %vm367, %v1910, 0
  %1915 = vmatpush.msra.mxu0 0.0
  %1916 = vmatpush.msra.mxu0 0.0
  %1917 = vmatpush.msra.mxu0 0.0
  %1918 = vmatpush.msra.mxu0 0.0
  %1919 = vmatpush.msra.mxu0 0.0
  %1920 = vmatpush.msra.mxu0 0.0
  %1921 = vmatpush.msra.mxu0 0.0
  %1922 = vmatpush.msra.mxu0 0.0
  %1923 = vmatpush.msra.mxu0 0.0
  %1924 = vmatpush.msra.mxu0 0.0
  %1925 = vmatpush.msra.mxu0 0.0
  %1926 = vmatpush.msra.mxu0 0.0
  %1927 = vmatpush.msra.mxu0 %v1888
  %1928 = vmatpush.msra.mxu0 %v1887
  %1929 = vmatpush.msra.mxu0 %v1886
  %1930 = vmatpush.msra.mxu0 %v1885
  %1931 = vmatmul.f32.gmra.mxu0 %v1911
  %v1932 = vpop.f32.mrf.mxu0
  %v1933 = vadd.f32 %v1892, %v1932
  %1934 = vmatmul.f32.gmra.mxu0 %v1913
  %v1935 = vpop.f32.mrf.mxu0
  %v1936 = vadd.f32 %v1892, %v1935
  %1937 = vdwg.mxu0
  %v1940 = vrot.slane %v1933, 2
  %v1941 = vrot.slane %v1933, 4
  %v1942 = vrot.slane %v1933, 6
  %v1943 = vrot.slane %v1936, 2
  %v1944 = vrot.slane %v1936, 4
  %v1945 = vrot.slane %v1936, 6
  %1952 = vst.msk [vmem:[%s338] sm:$0x3] %vm113, %v1933
  %1953 = vst.msk [vmem:[%s338 + $0x2] sm:$0x3] %vm113, %v1940
  %1954 = vst.msk [vmem:[%s338 + $0x4] sm:$0x3] %vm113, %v1941
  %1955 = vst.msk [vmem:[%s338 + $0x6] sm:$0x3] %vm113, %v1942
  %1956 = vst.msk [vmem:[%s338 + $0x8] sm:$0x3] %vm113, %v1936
  %1957 = vst.msk [vmem:[%s338 + $0xa] sm:$0x3] %vm113, %v1943
  %1958 = vst.msk [vmem:[%s338 + $0xc] sm:$0x3] %vm113, %v1944
  %1959 = vst.msk [vmem:[%s338 + $0xe] sm:$0x3] %vm113, %v1945
  %v1960 = vld [vmem:[%s5] sm:$0xff]
  %v1961 = vld [vmem:[%s5 + $0x8] sm:$0xff]
  %v1962 = vld [vmem:[%s5 + $0x10] sm:$0xff]
  %v1963 = vld [vmem:[%s5 + $0x18] sm:$0xff]
  %s1964 = scalar_lea.vmem %s5, 32
  %v1965 = vld [vmem:[%s1964] sm:$0xff]
  %v1966 = vld [vmem:[%s1964 + $0x8] sm:$0xff]
  %v1967 = vld [vmem:[%s1964 + $0x10] sm:$0xff]
  %v1968 = vld [vmem:[%s1964 + $0x18] sm:$0xff]
  %s1969 = scalar_lea.vmem %s5, 64
  %v1970 = vld [vmem:[%s1969] sm:$0xff]
  %v1971 = vld [vmem:[%s1969 + $0x8] sm:$0xff]
  %v1972 = vld [vmem:[%s1969 + $0x10] sm:$0xff]
  %v1973 = vld [vmem:[%s1969 + $0x18] sm:$0xff]
  %s1974 = scalar_lea.vmem %s5, 96
  %v1975 = vld [vmem:[%s1974] sm:$0xff]
  %v1976 = vld [vmem:[%s1974 + $0x8] sm:$0xff]
  %v1977 = vld [vmem:[%s1974 + $0x10] sm:$0xff]
  %v1978 = vld [vmem:[%s1974 + $0x18] sm:$0xff]
  %v1979 = vld [vmem:[#allocation2] sm:$0x3]
  %1980 = vmatpush.msra.mxu0 0.0
  %1981 = vmatpush.msra.mxu0 0.0
  %1982 = vmatpush.msra.mxu0 0.0
  %1983 = vmatpush.msra.mxu0 0.0
  %1984 = vmatpush.msra.mxu0 0.0
  %1985 = vmatpush.msra.mxu0 0.0
  %1986 = vmatpush.msra.mxu0 0.0
  %1987 = vmatpush.msra.mxu0 0.0
  %1988 = vmatpush.msra.mxu0 0.0
  %1989 = vmatpush.msra.mxu0 0.0
  %1990 = vmatpush.msra.mxu0 0.0
  %1991 = vmatpush.msra.mxu0 0.0
  %1992 = vmatpush.msra.mxu0 %v1963
  %1993 = vmatpush.msra.mxu0 %v1962
  %1994 = vmatpush.msra.mxu0 %v1961
  %1995 = vmatpush.msra.mxu0 %v1960
  %1996 = vmatmul.f32.gmra.mxu0 %v369
  %v1997 = vpop.f32.mrf.mxu0
  %v1998 = vadd.f32 0.0, %v1997
  %1999 = vdwg.mxu0
  %v2000 = vadd.f32 %v1979, %v1998
  %v2001 = vxor.u32 %v2000, 2147483648
  %v2002 = vmul.f32 %v2001, 1.442695
  %v2003 = vpow.pop %v2002
  %v2004 = vadd.f32 %v2003, 1.0
  %v2005 = vrcp.pop %v2004
  %v2006 = vmul.f32 %v2004, %v2005
  %v2007 = vsub.f32 1.0, %v2006
  %v2008 = vmul.f32 %v2005, %v2007
  %v2009 = vadd.f32 %v2005, %v2008
  %vm2010 = vweird.f32 %v2004
  %vm2011 = vweird.f32 %v2005
  %vm2012 = vmor %vm2010, %vm2011
  %v2013 = vsel %vm2012, %v2005, %v2009
  %v2014 = vand.u32 2147483647, %v2004
  %vm2015 = vcmp.eq.f32.partialorder %v2014, 8.507059e+37
  %v2016 = vand.u32 %v2004, 2147483648
  %v2017 = vor.u32 1.1754944e-38, %v2016
  %v2018 = vsel %vm2015, %v2017, %v2013
  %v2019 = vmul.f32 1.0, %v2018
  %v2020 = vld [vmem:[%s188] sm:$0x3]
  %2021 = vmatpush.msra.mxu0 0.0
  %2022 = vmatpush.msra.mxu0 0.0
  %2023 = vmatpush.msra.mxu0 0.0
  %2024 = vmatpush.msra.mxu0 0.0
  %2025 = vmatpush.msra.mxu0 0.0
  %2026 = vmatpush.msra.mxu0 0.0
  %2027 = vmatpush.msra.mxu0 0.0
  %2028 = vmatpush.msra.mxu0 0.0
  %2029 = vmatpush.msra.mxu0 0.0
  %2030 = vmatpush.msra.mxu0 0.0
  %2031 = vmatpush.msra.mxu0 0.0
  %2032 = vmatpush.msra.mxu0 0.0
  %2033 = vmatpush.msra.mxu0 %v1968
  %2034 = vmatpush.msra.mxu0 %v1967
  %2035 = vmatpush.msra.mxu0 %v1966
  %2036 = vmatpush.msra.mxu0 %v1965
  %2037 = vmatmul.f32.gmra.mxu0 %v369
  %v2038 = vpop.f32.mrf.mxu0
  %v2039 = vadd.f32 0.0, %v2038
  %2040 = vdwg.mxu0
  %v2041 = vadd.f32 %v2020, %v2039
  %v2042 = vxor.u32 %v2041, 2147483648
  %v2043 = vmul.f32 %v2042, 1.442695
  %v2044 = vpow.pop %v2043
  %v2045 = vadd.f32 %v2044, 1.0
  %v2046 = vrcp.pop %v2045
  %v2047 = vmul.f32 %v2045, %v2046
  %v2048 = vsub.f32 1.0, %v2047
  %v2049 = vmul.f32 %v2046, %v2048
  %v2050 = vadd.f32 %v2046, %v2049
  %vm2051 = vweird.f32 %v2045
  %vm2052 = vweird.f32 %v2046
  %vm2053 = vmor %vm2051, %vm2052
  %v2054 = vsel %vm2053, %v2046, %v2050
  %v2055 = vand.u32 2147483647, %v2045
  %vm2056 = vcmp.eq.f32.partialorder %v2055, 8.507059e+37
  %v2057 = vand.u32 %v2045, 2147483648
  %v2058 = vor.u32 1.1754944e-38, %v2057
  %v2059 = vsel %vm2056, %v2058, %v2054
  %v2060 = vmul.f32 1.0, %v2059
  %v2061 = vld [vmem:[%s263] sm:$0x3]
  %2062 = vmatpush.msra.mxu0 0.0
  %2063 = vmatpush.msra.mxu0 0.0
  %2064 = vmatpush.msra.mxu0 0.0
  %2065 = vmatpush.msra.mxu0 0.0
  %2066 = vmatpush.msra.mxu0 0.0
  %2067 = vmatpush.msra.mxu0 0.0
  %2068 = vmatpush.msra.mxu0 0.0
  %2069 = vmatpush.msra.mxu0 0.0
  %2070 = vmatpush.msra.mxu0 0.0
  %2071 = vmatpush.msra.mxu0 0.0
  %2072 = vmatpush.msra.mxu0 0.0
  %2073 = vmatpush.msra.mxu0 0.0
  %2074 = vmatpush.msra.mxu0 %v1973
  %2075 = vmatpush.msra.mxu0 %v1972
  %2076 = vmatpush.msra.mxu0 %v1971
  %2077 = vmatpush.msra.mxu0 %v1970
  %2078 = vmatmul.f32.gmra.mxu0 %v369
  %v2079 = vpop.f32.mrf.mxu0
  %v2080 = vadd.f32 0.0, %v2079
  %2081 = vdwg.mxu0
  %v2082 = vadd.f32 %v2061, %v2080
  %v2083 = vtanh.pop %v2082
  %v2084 = vld [vmem:[%s338] sm:$0x3]
  %2085 = vmatpush.msra.mxu0 0.0
  %2086 = vmatpush.msra.mxu0 0.0
  %2087 = vmatpush.msra.mxu0 0.0
  %2088 = vmatpush.msra.mxu0 0.0
  %2089 = vmatpush.msra.mxu0 0.0
  %2090 = vmatpush.msra.mxu0 0.0
  %2091 = vmatpush.msra.mxu0 0.0
  %2092 = vmatpush.msra.mxu0 0.0
  %2093 = vmatpush.msra.mxu0 0.0
  %2094 = vmatpush.msra.mxu0 0.0
  %2095 = vmatpush.msra.mxu0 0.0
  %2096 = vmatpush.msra.mxu0 0.0
  %2097 = vmatpush.msra.mxu0 %v1978
  %2098 = vmatpush.msra.mxu0 %v1977
  %2099 = vmatpush.msra.mxu0 %v1976
  %2100 = vmatpush.msra.mxu0 %v1975
  %2101 = vmatmul.f32.gmra.mxu0 %v369
  %v2102 = vpop.f32.mrf.mxu0
  %v2103 = vadd.f32 0.0, %v2102
  %2104 = vdwg.mxu0
  %v2105 = vadd.f32 %v2084, %v2103
  %v2106 = vxor.u32 %v2105, 2147483648
  %v2107 = vmul.f32 %v2106, 1.442695
  %v2108 = vpow.pop %v2107
  %v2109 = vadd.f32 %v2108, 1.0
  %v2110 = vrcp.pop %v2109
  %v2111 = vmul.f32 %v2109, %v2110
  %v2112 = vsub.f32 1.0, %v2111
  %v2113 = vmul.f32 %v2110, %v2112
  %v2114 = vadd.f32 %v2110, %v2113
  %vm2115 = vweird.f32 %v2109
  %vm2116 = vweird.f32 %v2110
  %vm2117 = vmor %vm2115, %vm2116
  %v2118 = vsel %vm2117, %v2110, %v2114
  %v2119 = vand.u32 2147483647, %v2109
  %vm2120 = vcmp.eq.f32.partialorder %v2119, 8.507059e+37
  %v2121 = vand.u32 %v2109, 2147483648
  %v2122 = vor.u32 1.1754944e-38, %v2121
  %v2123 = vsel %vm2120, %v2122, %v2118
  %v2124 = vmul.f32 1.0, %v2123
  %v2125 = vmul.f32 %v2060, 0.0
  %v2126 = vmul.f32 %v2019, %v2083
  %v2127 = vadd.f32 %v2125, %v2126
  %v2128 = vtanh.pop %v2127
  %v2129 = vmul.f32 %v2124, %v2128
  %2130 = vst.msk [vmem:[#allocation3] sm:$0x3] %vm113, %v2129
  %v2131 = vld [vmem:[%s522] sm:$0x3]
  %v2133 = vsel %vm367, %v2129, 0
  %2135 = vmatpush.msra.mxu0 0.0
  %2136 = vmatpush.msra.mxu0 0.0
  %2137 = vmatpush.msra.mxu0 0.0
  %2138 = vmatpush.msra.mxu0 0.0
  %2139 = vmatpush.msra.mxu0 0.0
  %2140 = vmatpush.msra.mxu0 0.0
  %2141 = vmatpush.msra.mxu0 0.0
  %2142 = vmatpush.msra.mxu0 0.0
  %2143 = vmatpush.msra.mxu0 0.0
  %2144 = vmatpush.msra.mxu0 0.0
  %2145 = vmatpush.msra.mxu0 0.0
  %2146 = vmatpush.msra.mxu0 0.0
  %2147 = vmatpush.msra.mxu0 %v1963
  %2148 = vmatpush.msra.mxu0 %v1962
  %2149 = vmatpush.msra.mxu0 %v1961
  %2150 = vmatpush.msra.mxu0 %v1960
  %2151 = vmatmul.f32.gmra.mxu0 %v2133
  %v2152 = vpop.f32.mrf.mxu0
  %v2153 = vadd.f32 0.0, %v2152
  %2154 = vdwg.mxu0
  %v2155 = vadd.f32 %v2131, %v2153
  %v2156 = vxor.u32 %v2155, 2147483648
  %v2157 = vmul.f32 %v2156, 1.442695
  %v2158 = vpow.pop %v2157
  %v2159 = vadd.f32 %v2158, 1.0
  %v2160 = vrcp.pop %v2159
  %v2161 = vmul.f32 %v2159, %v2160
  %v2162 = vsub.f32 1.0, %v2161
  %v2163 = vmul.f32 %v2160, %v2162
  %v2164 = vadd.f32 %v2160, %v2163
  %vm2165 = vweird.f32 %v2159
  %vm2166 = vweird.f32 %v2160
  %vm2167 = vmor %vm2165, %vm2166
  %v2168 = vsel %vm2167, %v2160, %v2164
  %v2169 = vand.u32 2147483647, %v2159
  %vm2170 = vcmp.eq.f32.partialorder %v2169, 8.507059e+37
  %v2171 = vand.u32 %v2159, 2147483648
  %v2172 = vor.u32 1.1754944e-38, %v2171
  %v2173 = vsel %vm2170, %v2172, %v2168
  %v2174 = vmul.f32 1.0, %v2173
  %v2175 = vld [vmem:[%s567] sm:$0x3]
  %2176 = vmatpush.msra.mxu0 0.0
  %2177 = vmatpush.msra.mxu0 0.0
  %2178 = vmatpush.msra.mxu0 0.0
  %2179 = vmatpush.msra.mxu0 0.0
  %2180 = vmatpush.msra.mxu0 0.0
  %2181 = vmatpush.msra.mxu0 0.0
  %2182 = vmatpush.msra.mxu0 0.0
  %2183 = vmatpush.msra.mxu0 0.0
  %2184 = vmatpush.msra.mxu0 0.0
  %2185 = vmatpush.msra.mxu0 0.0
  %2186 = vmatpush.msra.mxu0 0.0
  %2187 = vmatpush.msra.mxu0 0.0
  %2188 = vmatpush.msra.mxu0 %v1968
  %2189 = vmatpush.msra.mxu0 %v1967
  %2190 = vmatpush.msra.mxu0 %v1966
  %2191 = vmatpush.msra.mxu0 %v1965
  %2192 = vmatmul.f32.gmra.mxu0 %v2133
  %v2193 = vpop.f32.mrf.mxu0
  %v2194 = vadd.f32 0.0, %v2193
  %2195 = vdwg.mxu0
  %v2196 = vadd.f32 %v2175, %v2194
  %v2197 = vxor.u32 %v2196, 2147483648
  %v2198 = vmul.f32 %v2197, 1.442695
  %v2199 = vpow.pop %v2198
  %v2200 = vadd.f32 %v2199, 1.0
  %v2201 = vrcp.pop %v2200
  %v2202 = vmul.f32 %v2200, %v2201
  %v2203 = vsub.f32 1.0, %v2202
  %v2204 = vmul.f32 %v2201, %v2203
  %v2205 = vadd.f32 %v2201, %v2204
  %vm2206 = vweird.f32 %v2200
  %vm2207 = vweird.f32 %v2201
  %vm2208 = vmor %vm2206, %vm2207
  %v2209 = vsel %vm2208, %v2201, %v2205
  %v2210 = vand.u32 2147483647, %v2200
  %vm2211 = vcmp.eq.f32.partialorder %v2210, 8.507059e+37
  %v2212 = vand.u32 %v2200, 2147483648
  %v2213 = vor.u32 1.1754944e-38, %v2212
  %v2214 = vsel %vm2211, %v2213, %v2209
  %v2215 = vmul.f32 1.0, %v2214
  %v2216 = vld [vmem:[%s609] sm:$0x3]
  %2217 = vmatpush.msra.mxu0 0.0
  %2218 = vmatpush.msra.mxu0 0.0
  %2219 = vmatpush.msra.mxu0 0.0
  %2220 = vmatpush.msra.mxu0 0.0
  %2221 = vmatpush.msra.mxu0 0.0
  %2222 = vmatpush.msra.mxu0 0.0
  %2223 = vmatpush.msra.mxu0 0.0
  %2224 = vmatpush.msra.mxu0 0.0
  %2225 = vmatpush.msra.mxu0 0.0
  %2226 = vmatpush.msra.mxu0 0.0
  %2227 = vmatpush.msra.mxu0 0.0
  %2228 = vmatpush.msra.mxu0 0.0
  %2229 = vmatpush.msra.mxu0 %v1973
  %2230 = vmatpush.msra.mxu0 %v1972
  %2231 = vmatpush.msra.mxu0 %v1971
  %2232 = vmatpush.msra.mxu0 %v1970
  %2233 = vmatmul.f32.gmra.mxu0 %v2133
  %v2234 = vpop.f32.mrf.mxu0
  %v2235 = vadd.f32 0.0, %v2234
  %2236 = vdwg.mxu0
  %v2237 = vadd.f32 %v2216, %v2235
  %v2238 = vtanh.pop %v2237
  %v2239 = vld [vmem:[%s633] sm:$0x3]
  %2240 = vmatpush.msra.mxu0 0.0
  %2241 = vmatpush.msra.mxu0 0.0
  %2242 = vmatpush.msra.mxu0 0.0
  %2243 = vmatpush.msra.mxu0 0.0
  %2244 = vmatpush.msra.mxu0 0.0
  %2245 = vmatpush.msra.mxu0 0.0
  %2246 = vmatpush.msra.mxu0 0.0
  %2247 = vmatpush.msra.mxu0 0.0
  %2248 = vmatpush.msra.mxu0 0.0
  %2249 = vmatpush.msra.mxu0 0.0
  %2250 = vmatpush.msra.mxu0 0.0
  %2251 = vmatpush.msra.mxu0 0.0
  %2252 = vmatpush.msra.mxu0 %v1978
  %2253 = vmatpush.msra.mxu0 %v1977
  %2254 = vmatpush.msra.mxu0 %v1976
  %2255 = vmatpush.msra.mxu0 %v1975
  %2256 = vmatmul.f32.gmra.mxu0 %v2133
  %v2257 = vpop.f32.mrf.mxu0
  %v2258 = vadd.f32 0.0, %v2257
  %2259 = vdwg.mxu0
  %v2260 = vadd.f32 %v2239, %v2258
  %v2261 = vxor.u32 %v2260, 2147483648
  %v2262 = vmul.f32 %v2261, 1.442695
  %v2263 = vpow.pop %v2262
  %v2264 = vadd.f32 %v2263, 1.0
  %v2265 = vrcp.pop %v2264
  %v2266 = vmul.f32 %v2264, %v2265
  %v2267 = vsub.f32 1.0, %v2266
  %v2268 = vmul.f32 %v2265, %v2267
  %v2269 = vadd.f32 %v2265, %v2268
  %vm2270 = vweird.f32 %v2264
  %vm2271 = vweird.f32 %v2265
  %vm2272 = vmor %vm2270, %vm2271
  %v2273 = vsel %vm2272, %v2265, %v2269
  %v2274 = vand.u32 2147483647, %v2264
  %vm2275 = vcmp.eq.f32.partialorder %v2274, 8.507059e+37
  %v2276 = vand.u32 %v2264, 2147483648
  %v2277 = vor.u32 1.1754944e-38, %v2276
  %v2278 = vsel %vm2275, %v2277, %v2273
  %v2279 = vmul.f32 1.0, %v2278
  %v2280 = vmul.f32 %v2215, %v2127
  %v2281 = vmul.f32 %v2174, %v2238
  %v2282 = vadd.f32 %v2280, %v2281
  %v2283 = vtanh.pop %v2282
  %v2284 = vmul.f32 %v2279, %v2283
  %2285 = vst.msk [vmem:[%s680] sm:$0x3] %vm113, %v2284
  %v2286 = vld [vmem:[%s682] sm:$0x3]
  %v2288 = vsel %vm367, %v2284, 0
  %2290 = vmatpush.msra.mxu0 0.0
  %2291 = vmatpush.msra.mxu0 0.0
  %2292 = vmatpush.msra.mxu0 0.0
  %2293 = vmatpush.msra.mxu0 0.0
  %2294 = vmatpush.msra.mxu0 0.0
  %2295 = vmatpush.msra.mxu0 0.0
  %2296 = vmatpush.msra.mxu0 0.0
  %2297 = vmatpush.msra.mxu0 0.0
  %2298 = vmatpush.msra.mxu0 0.0
  %2299 = vmatpush.msra.mxu0 0.0
  %2300 = vmatpush.msra.mxu0 0.0
  %2301 = vmatpush.msra.mxu0 0.0
  %2302 = vmatpush.msra.mxu0 %v1963
  %2303 = vmatpush.msra.mxu0 %v1962
  %2304 = vmatpush.msra.mxu0 %v1961
  %2305 = vmatpush.msra.mxu0 %v1960
  %2306 = vmatmul.f32.gmra.mxu0 %v2288
  %v2307 = vpop.f32.mrf.mxu0
  %v2308 = vadd.f32 0.0, %v2307
  %2309 = vdwg.mxu0
  %v2310 = vadd.f32 %v2286, %v2308
  %v2311 = vxor.u32 %v2310, 2147483648
  %v2312 = vmul.f32 %v2311, 1.442695
  %v2313 = vpow.pop %v2312
  %v2314 = vadd.f32 %v2313, 1.0
  %v2315 = vrcp.pop %v2314
  %v2316 = vmul.f32 %v2314, %v2315
  %v2317 = vsub.f32 1.0, %v2316
  %v2318 = vmul.f32 %v2315, %v2317
  %v2319 = vadd.f32 %v2315, %v2318
  %vm2320 = vweird.f32 %v2314
  %vm2321 = vweird.f32 %v2315
  %vm2322 = vmor %vm2320, %vm2321
  %v2323 = vsel %vm2322, %v2315, %v2319
  %v2324 = vand.u32 2147483647, %v2314
  %vm2325 = vcmp.eq.f32.partialorder %v2324, 8.507059e+37
  %v2326 = vand.u32 %v2314, 2147483648
  %v2327 = vor.u32 1.1754944e-38, %v2326
  %v2328 = vsel %vm2325, %v2327, %v2323
  %v2329 = vmul.f32 1.0, %v2328
  %v2330 = vld [vmem:[%s727] sm:$0x3]
  %2331 = vmatpush.msra.mxu0 0.0
  %2332 = vmatpush.msra.mxu0 0.0
  %2333 = vmatpush.msra.mxu0 0.0
  %2334 = vmatpush.msra.mxu0 0.0
  %2335 = vmatpush.msra.mxu0 0.0
  %2336 = vmatpush.msra.mxu0 0.0
  %2337 = vmatpush.msra.mxu0 0.0
  %2338 = vmatpush.msra.mxu0 0.0
  %2339 = vmatpush.msra.mxu0 0.0
  %2340 = vmatpush.msra.mxu0 0.0
  %2341 = vmatpush.msra.mxu0 0.0
  %2342 = vmatpush.msra.mxu0 0.0
  %2343 = vmatpush.msra.mxu0 %v1968
  %2344 = vmatpush.msra.mxu0 %v1967
  %2345 = vmatpush.msra.mxu0 %v1966
  %2346 = vmatpush.msra.mxu0 %v1965
  %2347 = vmatmul.f32.gmra.mxu0 %v2288
  %v2348 = vpop.f32.mrf.mxu0
  %v2349 = vadd.f32 0.0, %v2348
  %2350 = vdwg.mxu0
  %v2351 = vadd.f32 %v2330, %v2349
  %v2352 = vxor.u32 %v2351, 2147483648
  %v2353 = vmul.f32 %v2352, 1.442695
  %v2354 = vpow.pop %v2353
  %v2355 = vadd.f32 %v2354, 1.0
  %v2356 = vrcp.pop %v2355
  %v2357 = vmul.f32 %v2355, %v2356
  %v2358 = vsub.f32 1.0, %v2357
  %v2359 = vmul.f32 %v2356, %v2358
  %v2360 = vadd.f32 %v2356, %v2359
  %vm2361 = vweird.f32 %v2355
  %vm2362 = vweird.f32 %v2356
  %vm2363 = vmor %vm2361, %vm2362
  %v2364 = vsel %vm2363, %v2356, %v2360
  %v2365 = vand.u32 2147483647, %v2355
  %vm2366 = vcmp.eq.f32.partialorder %v2365, 8.507059e+37
  %v2367 = vand.u32 %v2355, 2147483648
  %v2368 = vor.u32 1.1754944e-38, %v2367
  %v2369 = vsel %vm2366, %v2368, %v2364
  %v2370 = vmul.f32 1.0, %v2369
  %v2371 = vld [vmem:[%s769] sm:$0x3]
  %2372 = vmatpush.msra.mxu0 0.0
  %2373 = vmatpush.msra.mxu0 0.0
  %2374 = vmatpush.msra.mxu0 0.0
  %2375 = vmatpush.msra.mxu0 0.0
  %2376 = vmatpush.msra.mxu0 0.0
  %2377 = vmatpush.msra.mxu0 0.0
  %2378 = vmatpush.msra.mxu0 0.0
  %2379 = vmatpush.msra.mxu0 0.0
  %2380 = vmatpush.msra.mxu0 0.0
  %2381 = vmatpush.msra.mxu0 0.0
  %2382 = vmatpush.msra.mxu0 0.0
  %2383 = vmatpush.msra.mxu0 0.0
  %2384 = vmatpush.msra.mxu0 %v1973
  %2385 = vmatpush.msra.mxu0 %v1972
  %2386 = vmatpush.msra.mxu0 %v1971
  %2387 = vmatpush.msra.mxu0 %v1970
  %2388 = vmatmul.f32.gmra.mxu0 %v2288
  %v2389 = vpop.f32.mrf.mxu0
  %v2390 = vadd.f32 0.0, %v2389
  %2391 = vdwg.mxu0
  %v2392 = vadd.f32 %v2371, %v2390
  %v2393 = vtanh.pop %v2392
  %v2394 = vld [vmem:[%s793] sm:$0x3]
  %2395 = vmatpush.msra.mxu0 0.0
  %2396 = vmatpush.msra.mxu0 0.0
  %2397 = vmatpush.msra.mxu0 0.0
  %2398 = vmatpush.msra.mxu0 0.0
  %2399 = vmatpush.msra.mxu0 0.0
  %2400 = vmatpush.msra.mxu0 0.0
  %2401 = vmatpush.msra.mxu0 0.0
  %2402 = vmatpush.msra.mxu0 0.0
  %2403 = vmatpush.msra.mxu0 0.0
  %2404 = vmatpush.msra.mxu0 0.0
  %2405 = vmatpush.msra.mxu0 0.0
  %2406 = vmatpush.msra.mxu0 0.0
  %2407 = vmatpush.msra.mxu0 %v1978
  %2408 = vmatpush.msra.mxu0 %v1977
  %2409 = vmatpush.msra.mxu0 %v1976
  %2410 = vmatpush.msra.mxu0 %v1975
  %2411 = vmatmul.f32.gmra.mxu0 %v2288
  %v2412 = vpop.f32.mrf.mxu0
  %v2413 = vadd.f32 0.0, %v2412
  %2414 = vdwg.mxu0
  %v2415 = vadd.f32 %v2394, %v2413
  %v2416 = vxor.u32 %v2415, 2147483648
  %v2417 = vmul.f32 %v2416, 1.442695
  %v2418 = vpow.pop %v2417
  %v2419 = vadd.f32 %v2418, 1.0
  %v2420 = vrcp.pop %v2419
  %v2421 = vmul.f32 %v2419, %v2420
  %v2422 = vsub.f32 1.0, %v2421
  %v2423 = vmul.f32 %v2420, %v2422
  %v2424 = vadd.f32 %v2420, %v2423
  %vm2425 = vweird.f32 %v2419
  %vm2426 = vweird.f32 %v2420
  %vm2427 = vmor %vm2425, %vm2426
  %v2428 = vsel %vm2427, %v2420, %v2424
  %v2429 = vand.u32 2147483647, %v2419
  %vm2430 = vcmp.eq.f32.partialorder %v2429, 8.507059e+37
  %v2431 = vand.u32 %v2419, 2147483648
  %v2432 = vor.u32 1.1754944e-38, %v2431
  %v2433 = vsel %vm2430, %v2432, %v2428
  %v2434 = vmul.f32 1.0, %v2433
  %v2435 = vmul.f32 %v2370, %v2282
  %v2436 = vmul.f32 %v2329, %v2393
  %v2437 = vadd.f32 %v2435, %v2436
  %v2438 = vtanh.pop %v2437
  %v2439 = vmul.f32 %v2434, %v2438
  %2440 = vst.msk [vmem:[%s840] sm:$0x3] %vm113, %v2439
  %v2441 = vld [vmem:[%s842] sm:$0x3]
  %v2443 = vsel %vm367, %v2439, 0
  %2445 = vmatpush.msra.mxu0 0.0
  %2446 = vmatpush.msra.mxu0 0.0
  %2447 = vmatpush.msra.mxu0 0.0
  %2448 = vmatpush.msra.mxu0 0.0
  %2449 = vmatpush.msra.mxu0 0.0
  %2450 = vmatpush.msra.mxu0 0.0
  %2451 = vmatpush.msra.mxu0 0.0
  %2452 = vmatpush.msra.mxu0 0.0
  %2453 = vmatpush.msra.mxu0 0.0
  %2454 = vmatpush.msra.mxu0 0.0
  %2455 = vmatpush.msra.mxu0 0.0
  %2456 = vmatpush.msra.mxu0 0.0
  %2457 = vmatpush.msra.mxu0 %v1963
  %2458 = vmatpush.msra.mxu0 %v1962
  %2459 = vmatpush.msra.mxu0 %v1961
  %2460 = vmatpush.msra.mxu0 %v1960
  %2461 = vmatmul.f32.gmra.mxu0 %v2443
  %v2462 = vpop.f32.mrf.mxu0
  %v2463 = vadd.f32 0.0, %v2462
  %2464 = vdwg.mxu0
  %v2465 = vadd.f32 %v2441, %v2463
  %v2466 = vxor.u32 %v2465, 2147483648
  %v2467 = vmul.f32 %v2466, 1.442695
  %v2468 = vpow.pop %v2467
  %v2469 = vadd.f32 %v2468, 1.0
  %v2470 = vrcp.pop %v2469
  %v2471 = vmul.f32 %v2469, %v2470
  %v2472 = vsub.f32 1.0, %v2471
  %v2473 = vmul.f32 %v2470, %v2472
  %v2474 = vadd.f32 %v2470, %v2473
  %vm2475 = vweird.f32 %v2469
  %vm2476 = vweird.f32 %v2470
  %vm2477 = vmor %vm2475, %vm2476
  %v2478 = vsel %vm2477, %v2470, %v2474
  %v2479 = vand.u32 2147483647, %v2469
  %vm2480 = vcmp.eq.f32.partialorder %v2479, 8.507059e+37
  %v2481 = vand.u32 %v2469, 2147483648
  %v2482 = vor.u32 1.1754944e-38, %v2481
  %v2483 = vsel %vm2480, %v2482, %v2478
  %v2484 = vmul.f32 1.0, %v2483
  %v2485 = vld [vmem:[%s887] sm:$0x3]
  %2486 = vmatpush.msra.mxu0 0.0
  %2487 = vmatpush.msra.mxu0 0.0
  %2488 = vmatpush.msra.mxu0 0.0
  %2489 = vmatpush.msra.mxu0 0.0
  %2490 = vmatpush.msra.mxu0 0.0
  %2491 = vmatpush.msra.mxu0 0.0
  %2492 = vmatpush.msra.mxu0 0.0
  %2493 = vmatpush.msra.mxu0 0.0
  %2494 = vmatpush.msra.mxu0 0.0
  %2495 = vmatpush.msra.mxu0 0.0
  %2496 = vmatpush.msra.mxu0 0.0
  %2497 = vmatpush.msra.mxu0 0.0
  %2498 = vmatpush.msra.mxu0 %v1968
  %2499 = vmatpush.msra.mxu0 %v1967
  %2500 = vmatpush.msra.mxu0 %v1966
  %2501 = vmatpush.msra.mxu0 %v1965
  %2502 = vmatmul.f32.gmra.mxu0 %v2443
  %v2503 = vpop.f32.mrf.mxu0
  %v2504 = vadd.f32 0.0, %v2503
  %2505 = vdwg.mxu0
  %v2506 = vadd.f32 %v2485, %v2504
  %v2507 = vxor.u32 %v2506, 2147483648
  %v2508 = vmul.f32 %v2507, 1.442695
  %v2509 = vpow.pop %v2508
  %v2510 = vadd.f32 %v2509, 1.0
  %v2511 = vrcp.pop %v2510
  %v2512 = vmul.f32 %v2510, %v2511
  %v2513 = vsub.f32 1.0, %v2512
  %v2514 = vmul.f32 %v2511, %v2513
  %v2515 = vadd.f32 %v2511, %v2514
  %vm2516 = vweird.f32 %v2510
  %vm2517 = vweird.f32 %v2511
  %vm2518 = vmor %vm2516, %vm2517
  %v2519 = vsel %vm2518, %v2511, %v2515
  %v2520 = vand.u32 2147483647, %v2510
  %vm2521 = vcmp.eq.f32.partialorder %v2520, 8.507059e+37
  %v2522 = vand.u32 %v2510, 2147483648
  %v2523 = vor.u32 1.1754944e-38, %v2522
  %v2524 = vsel %vm2521, %v2523, %v2519
  %v2525 = vmul.f32 1.0, %v2524
  %v2526 = vld [vmem:[%s929] sm:$0x3]
  %2527 = vmatpush.msra.mxu0 0.0
  %2528 = vmatpush.msra.mxu0 0.0
  %2529 = vmatpush.msra.mxu0 0.0
  %2530 = vmatpush.msra.mxu0 0.0
  %2531 = vmatpush.msra.mxu0 0.0
  %2532 = vmatpush.msra.mxu0 0.0
  %2533 = vmatpush.msra.mxu0 0.0
  %2534 = vmatpush.msra.mxu0 0.0
  %2535 = vmatpush.msra.mxu0 0.0
  %2536 = vmatpush.msra.mxu0 0.0
  %2537 = vmatpush.msra.mxu0 0.0
  %2538 = vmatpush.msra.mxu0 0.0
  %2539 = vmatpush.msra.mxu0 %v1973
  %2540 = vmatpush.msra.mxu0 %v1972
  %2541 = vmatpush.msra.mxu0 %v1971
  %2542 = vmatpush.msra.mxu0 %v1970
  %2543 = vmatmul.f32.gmra.mxu0 %v2443
  %v2544 = vpop.f32.mrf.mxu0
  %v2545 = vadd.f32 0.0, %v2544
  %2546 = vdwg.mxu0
  %v2547 = vadd.f32 %v2526, %v2545
  %v2548 = vtanh.pop %v2547
  %v2549 = vld [vmem:[%s953] sm:$0x3]
  %2550 = vmatpush.msra.mxu0 0.0
  %2551 = vmatpush.msra.mxu0 0.0
  %2552 = vmatpush.msra.mxu0 0.0
  %2553 = vmatpush.msra.mxu0 0.0
  %2554 = vmatpush.msra.mxu0 0.0
  %2555 = vmatpush.msra.mxu0 0.0
  %2556 = vmatpush.msra.mxu0 0.0
  %2557 = vmatpush.msra.mxu0 0.0
  %2558 = vmatpush.msra.mxu0 0.0
  %2559 = vmatpush.msra.mxu0 0.0
  %2560 = vmatpush.msra.mxu0 0.0
  %2561 = vmatpush.msra.mxu0 0.0
  %2562 = vmatpush.msra.mxu0 %v1978
  %2563 = vmatpush.msra.mxu0 %v1977
  %2564 = vmatpush.msra.mxu0 %v1976
  %2565 = vmatpush.msra.mxu0 %v1975
  %2566 = vmatmul.f32.gmra.mxu0 %v2443
  %v2567 = vpop.f32.mrf.mxu0
  %v2568 = vadd.f32 0.0, %v2567
  %2569 = vdwg.mxu0
  %v2570 = vadd.f32 %v2549, %v2568
  %v2571 = vxor.u32 %v2570, 2147483648
  %v2572 = vmul.f32 %v2571, 1.442695
  %v2573 = vpow.pop %v2572
  %v2574 = vadd.f32 %v2573, 1.0
  %v2575 = vrcp.pop %v2574
  %v2576 = vmul.f32 %v2574, %v2575
  %v2577 = vsub.f32 1.0, %v2576
  %v2578 = vmul.f32 %v2575, %v2577
  %v2579 = vadd.f32 %v2575, %v2578
  %vm2580 = vweird.f32 %v2574
  %vm2581 = vweird.f32 %v2575
  %vm2582 = vmor %vm2580, %vm2581
  %v2583 = vsel %vm2582, %v2575, %v2579
  %v2584 = vand.u32 2147483647, %v2574
  %vm2585 = vcmp.eq.f32.partialorder %v2584, 8.507059e+37
  %v2586 = vand.u32 %v2574, 2147483648
  %v2587 = vor.u32 1.1754944e-38, %v2586
  %v2588 = vsel %vm2585, %v2587, %v2583
  %v2589 = vmul.f32 1.0, %v2588
  %v2590 = vmul.f32 %v2525, %v2437
  %v2591 = vmul.f32 %v2484, %v2548
  %v2592 = vadd.f32 %v2590, %v2591
  %v2593 = vtanh.pop %v2592
  %v2594 = vmul.f32 %v2589, %v2593
  %2595 = vst.msk [vmem:[%s1000] sm:$0x3] %vm113, %v2594
  %v2596 = vld [vmem:[%s1002] sm:$0x3]
  %v2598 = vsel %vm367, %v2594, 0
  %2600 = vmatpush.msra.mxu0 0.0
  %2601 = vmatpush.msra.mxu0 0.0
  %2602 = vmatpush.msra.mxu0 0.0
  %2603 = vmatpush.msra.mxu0 0.0
  %2604 = vmatpush.msra.mxu0 0.0
  %2605 = vmatpush.msra.mxu0 0.0
  %2606 = vmatpush.msra.mxu0 0.0
  %2607 = vmatpush.msra.mxu0 0.0
  %2608 = vmatpush.msra.mxu0 0.0
  %2609 = vmatpush.msra.mxu0 0.0
  %2610 = vmatpush.msra.mxu0 0.0
  %2611 = vmatpush.msra.mxu0 0.0
  %2612 = vmatpush.msra.mxu0 %v1963
  %2613 = vmatpush.msra.mxu0 %v1962
  %2614 = vmatpush.msra.mxu0 %v1961
  %2615 = vmatpush.msra.mxu0 %v1960
  %2616 = vmatmul.f32.gmra.mxu0 %v2598
  %v2617 = vpop.f32.mrf.mxu0
  %v2618 = vadd.f32 0.0, %v2617
  %2619 = vdwg.mxu0
  %v2620 = vadd.f32 %v2596, %v2618
  %v2621 = vxor.u32 %v2620, 2147483648
  %v2622 = vmul.f32 %v2621, 1.442695
  %v2623 = vpow.pop %v2622
  %v2624 = vadd.f32 %v2623, 1.0
  %v2625 = vrcp.pop %v2624
  %v2626 = vmul.f32 %v2624, %v2625
  %v2627 = vsub.f32 1.0, %v2626
  %v2628 = vmul.f32 %v2625, %v2627
  %v2629 = vadd.f32 %v2625, %v2628
  %vm2630 = vweird.f32 %v2624
  %vm2631 = vweird.f32 %v2625
  %vm2632 = vmor %vm2630, %vm2631
  %v2633 = vsel %vm2632, %v2625, %v2629
  %v2634 = vand.u32 2147483647, %v2624
  %vm2635 = vcmp.eq.f32.partialorder %v2634, 8.507059e+37
  %v2636 = vand.u32 %v2624, 2147483648
  %v2637 = vor.u32 1.1754944e-38, %v2636
  %v2638 = vsel %vm2635, %v2637, %v2633
  %v2639 = vmul.f32 1.0, %v2638
  %v2640 = vld [vmem:[%s1047] sm:$0x3]
  %2641 = vmatpush.msra.mxu0 0.0
  %2642 = vmatpush.msra.mxu0 0.0
  %2643 = vmatpush.msra.mxu0 0.0
  %2644 = vmatpush.msra.mxu0 0.0
  %2645 = vmatpush.msra.mxu0 0.0
  %2646 = vmatpush.msra.mxu0 0.0
  %2647 = vmatpush.msra.mxu0 0.0
  %2648 = vmatpush.msra.mxu0 0.0
  %2649 = vmatpush.msra.mxu0 0.0
  %2650 = vmatpush.msra.mxu0 0.0
  %2651 = vmatpush.msra.mxu0 0.0
  %2652 = vmatpush.msra.mxu0 0.0
  %2653 = vmatpush.msra.mxu0 %v1968
  %2654 = vmatpush.msra.mxu0 %v1967
  %2655 = vmatpush.msra.mxu0 %v1966
  %2656 = vmatpush.msra.mxu0 %v1965
  %2657 = vmatmul.f32.gmra.mxu0 %v2598
  %v2658 = vpop.f32.mrf.mxu0
  %v2659 = vadd.f32 0.0, %v2658
  %2660 = vdwg.mxu0
  %v2661 = vadd.f32 %v2640, %v2659
  %v2662 = vxor.u32 %v2661, 2147483648
  %v2663 = vmul.f32 %v2662, 1.442695
  %v2664 = vpow.pop %v2663
  %v2665 = vadd.f32 %v2664, 1.0
  %v2666 = vrcp.pop %v2665
  %v2667 = vmul.f32 %v2665, %v2666
  %v2668 = vsub.f32 1.0, %v2667
  %v2669 = vmul.f32 %v2666, %v2668
  %v2670 = vadd.f32 %v2666, %v2669
  %vm2671 = vweird.f32 %v2665
  %vm2672 = vweird.f32 %v2666
  %vm2673 = vmor %vm2671, %vm2672
  %v2674 = vsel %vm2673, %v2666, %v2670
  %v2675 = vand.u32 2147483647, %v2665
  %vm2676 = vcmp.eq.f32.partialorder %v2675, 8.507059e+37
  %v2677 = vand.u32 %v2665, 2147483648
  %v2678 = vor.u32 1.1754944e-38, %v2677
  %v2679 = vsel %vm2676, %v2678, %v2674
  %v2680 = vmul.f32 1.0, %v2679
  %v2681 = vld [vmem:[%s1089] sm:$0x3]
  %2682 = vmatpush.msra.mxu0 0.0
  %2683 = vmatpush.msra.mxu0 0.0
  %2684 = vmatpush.msra.mxu0 0.0
  %2685 = vmatpush.msra.mxu0 0.0
  %2686 = vmatpush.msra.mxu0 0.0
  %2687 = vmatpush.msra.mxu0 0.0
  %2688 = vmatpush.msra.mxu0 0.0
  %2689 = vmatpush.msra.mxu0 0.0
  %2690 = vmatpush.msra.mxu0 0.0
  %2691 = vmatpush.msra.mxu0 0.0
  %2692 = vmatpush.msra.mxu0 0.0
  %2693 = vmatpush.msra.mxu0 0.0
  %2694 = vmatpush.msra.mxu0 %v1973
  %2695 = vmatpush.msra.mxu0 %v1972
  %2696 = vmatpush.msra.mxu0 %v1971
  %2697 = vmatpush.msra.mxu0 %v1970
  %2698 = vmatmul.f32.gmra.mxu0 %v2598
  %v2699 = vpop.f32.mrf.mxu0
  %v2700 = vadd.f32 0.0, %v2699
  %2701 = vdwg.mxu0
  %v2702 = vadd.f32 %v2681, %v2700
  %v2703 = vtanh.pop %v2702
  %v2704 = vld [vmem:[%s1113] sm:$0x3]
  %2705 = vmatpush.msra.mxu0 0.0
  %2706 = vmatpush.msra.mxu0 0.0
  %2707 = vmatpush.msra.mxu0 0.0
  %2708 = vmatpush.msra.mxu0 0.0
  %2709 = vmatpush.msra.mxu0 0.0
  %2710 = vmatpush.msra.mxu0 0.0
  %2711 = vmatpush.msra.mxu0 0.0
  %2712 = vmatpush.msra.mxu0 0.0
  %2713 = vmatpush.msra.mxu0 0.0
  %2714 = vmatpush.msra.mxu0 0.0
  %2715 = vmatpush.msra.mxu0 0.0
  %2716 = vmatpush.msra.mxu0 0.0
  %2717 = vmatpush.msra.mxu0 %v1978
  %2718 = vmatpush.msra.mxu0 %v1977
  %2719 = vmatpush.msra.mxu0 %v1976
  %2720 = vmatpush.msra.mxu0 %v1975
  %2721 = vmatmul.f32.gmra.mxu0 %v2598
  %v2722 = vpop.f32.mrf.mxu0
  %v2723 = vadd.f32 0.0, %v2722
  %2724 = vdwg.mxu0
  %v2725 = vadd.f32 %v2704, %v2723
  %v2726 = vxor.u32 %v2725, 2147483648
  %v2727 = vmul.f32 %v2726, 1.442695
  %v2728 = vpow.pop %v2727
  %v2729 = vadd.f32 %v2728, 1.0
  %v2730 = vrcp.pop %v2729
  %v2731 = vmul.f32 %v2729, %v2730
  %v2732 = vsub.f32 1.0, %v2731
  %v2733 = vmul.f32 %v2730, %v2732
  %v2734 = vadd.f32 %v2730, %v2733
  %vm2735 = vweird.f32 %v2729
  %vm2736 = vweird.f32 %v2730
  %vm2737 = vmor %vm2735, %vm2736
  %v2738 = vsel %vm2737, %v2730, %v2734
  %v2739 = vand.u32 2147483647, %v2729
  %vm2740 = vcmp.eq.f32.partialorder %v2739, 8.507059e+37
  %v2741 = vand.u32 %v2729, 2147483648
  %v2742 = vor.u32 1.1754944e-38, %v2741
  %v2743 = vsel %vm2740, %v2742, %v2738
  %v2744 = vmul.f32 1.0, %v2743
  %v2745 = vmul.f32 %v2680, %v2592
  %v2746 = vmul.f32 %v2639, %v2703
  %v2747 = vadd.f32 %v2745, %v2746
  %v2748 = vtanh.pop %v2747
  %v2749 = vmul.f32 %v2744, %v2748
  %2750 = vst.msk [vmem:[%s1160] sm:$0x3] %vm113, %v2749
  %v2751 = vld [vmem:[%s1162] sm:$0x3]
  %v2753 = vsel %vm367, %v2749, 0
  %2755 = vmatpush.msra.mxu0 0.0
  %2756 = vmatpush.msra.mxu0 0.0
  %2757 = vmatpush.msra.mxu0 0.0
  %2758 = vmatpush.msra.mxu0 0.0
  %2759 = vmatpush.msra.mxu0 0.0
  %2760 = vmatpush.msra.mxu0 0.0
  %2761 = vmatpush.msra.mxu0 0.0
  %2762 = vmatpush.msra.mxu0 0.0
  %2763 = vmatpush.msra.mxu0 0.0
  %2764 = vmatpush.msra.mxu0 0.0
  %2765 = vmatpush.msra.mxu0 0.0
  %2766 = vmatpush.msra.mxu0 0.0
  %2767 = vmatpush.msra.mxu0 %v1963
  %2768 = vmatpush.msra.mxu0 %v1962
  %2769 = vmatpush.msra.mxu0 %v1961
  %2770 = vmatpush.msra.mxu0 %v1960
  %2771 = vmatmul.f32.gmra.mxu0 %v2753
  %v2772 = vpop.f32.mrf.mxu0
  %v2773 = vadd.f32 0.0, %v2772
  %2774 = vdwg.mxu0
  %v2775 = vadd.f32 %v2751, %v2773
  %v2776 = vxor.u32 %v2775, 2147483648
  %v2777 = vmul.f32 %v2776, 1.442695
  %v2778 = vpow.pop %v2777
  %v2779 = vadd.f32 %v2778, 1.0
  %v2780 = vrcp.pop %v2779
  %v2781 = vmul.f32 %v2779, %v2780
  %v2782 = vsub.f32 1.0, %v2781
  %v2783 = vmul.f32 %v2780, %v2782
  %v2784 = vadd.f32 %v2780, %v2783
  %vm2785 = vweird.f32 %v2779
  %vm2786 = vweird.f32 %v2780
  %vm2787 = vmor %vm2785, %vm2786
  %v2788 = vsel %vm2787, %v2780, %v2784
  %v2789 = vand.u32 2147483647, %v2779
  %vm2790 = vcmp.eq.f32.partialorder %v2789, 8.507059e+37
  %v2791 = vand.u32 %v2779, 2147483648
  %v2792 = vor.u32 1.1754944e-38, %v2791
  %v2793 = vsel %vm2790, %v2792, %v2788
  %v2794 = vmul.f32 1.0, %v2793
  %v2795 = vld [vmem:[%s1207] sm:$0x3]
  %2796 = vmatpush.msra.mxu0 0.0
  %2797 = vmatpush.msra.mxu0 0.0
  %2798 = vmatpush.msra.mxu0 0.0
  %2799 = vmatpush.msra.mxu0 0.0
  %2800 = vmatpush.msra.mxu0 0.0
  %2801 = vmatpush.msra.mxu0 0.0
  %2802 = vmatpush.msra.mxu0 0.0
  %2803 = vmatpush.msra.mxu0 0.0
  %2804 = vmatpush.msra.mxu0 0.0
  %2805 = vmatpush.msra.mxu0 0.0
  %2806 = vmatpush.msra.mxu0 0.0
  %2807 = vmatpush.msra.mxu0 0.0
  %2808 = vmatpush.msra.mxu0 %v1968
  %2809 = vmatpush.msra.mxu0 %v1967
  %2810 = vmatpush.msra.mxu0 %v1966
  %2811 = vmatpush.msra.mxu0 %v1965
  %2812 = vmatmul.f32.gmra.mxu0 %v2753
  %v2813 = vpop.f32.mrf.mxu0
  %v2814 = vadd.f32 0.0, %v2813
  %2815 = vdwg.mxu0
  %v2816 = vadd.f32 %v2795, %v2814
  %v2817 = vxor.u32 %v2816, 2147483648
  %v2818 = vmul.f32 %v2817, 1.442695
  %v2819 = vpow.pop %v2818
  %v2820 = vadd.f32 %v2819, 1.0
  %v2821 = vrcp.pop %v2820
  %v2822 = vmul.f32 %v2820, %v2821
  %v2823 = vsub.f32 1.0, %v2822
  %v2824 = vmul.f32 %v2821, %v2823
  %v2825 = vadd.f32 %v2821, %v2824
  %vm2826 = vweird.f32 %v2820
  %vm2827 = vweird.f32 %v2821
  %vm2828 = vmor %vm2826, %vm2827
  %v2829 = vsel %vm2828, %v2821, %v2825
  %v2830 = vand.u32 2147483647, %v2820
  %vm2831 = vcmp.eq.f32.partialorder %v2830, 8.507059e+37
  %v2832 = vand.u32 %v2820, 2147483648
  %v2833 = vor.u32 1.1754944e-38, %v2832
  %v2834 = vsel %vm2831, %v2833, %v2829
  %v2835 = vmul.f32 1.0, %v2834
  %v2836 = vld [vmem:[%s1249] sm:$0x3]
  %2837 = vmatpush.msra.mxu0 0.0
  %2838 = vmatpush.msra.mxu0 0.0
  %2839 = vmatpush.msra.mxu0 0.0
  %2840 = vmatpush.msra.mxu0 0.0
  %2841 = vmatpush.msra.mxu0 0.0
  %2842 = vmatpush.msra.mxu0 0.0
  %2843 = vmatpush.msra.mxu0 0.0
  %2844 = vmatpush.msra.mxu0 0.0
  %2845 = vmatpush.msra.mxu0 0.0
  %2846 = vmatpush.msra.mxu0 0.0
  %2847 = vmatpush.msra.mxu0 0.0
  %2848 = vmatpush.msra.mxu0 0.0
  %2849 = vmatpush.msra.mxu0 %v1973
  %2850 = vmatpush.msra.mxu0 %v1972
  %2851 = vmatpush.msra.mxu0 %v1971
  %2852 = vmatpush.msra.mxu0 %v1970
  %2853 = vmatmul.f32.gmra.mxu0 %v2753
  %v2854 = vpop.f32.mrf.mxu0
  %v2855 = vadd.f32 0.0, %v2854
  %2856 = vdwg.mxu0
  %v2857 = vadd.f32 %v2836, %v2855
  %v2858 = vtanh.pop %v2857
  %v2859 = vld [vmem:[%s1273] sm:$0x3]
  %2860 = vmatpush.msra.mxu0 0.0
  %2861 = vmatpush.msra.mxu0 0.0
  %2862 = vmatpush.msra.mxu0 0.0
  %2863 = vmatpush.msra.mxu0 0.0
  %2864 = vmatpush.msra.mxu0 0.0
  %2865 = vmatpush.msra.mxu0 0.0
  %2866 = vmatpush.msra.mxu0 0.0
  %2867 = vmatpush.msra.mxu0 0.0
  %2868 = vmatpush.msra.mxu0 0.0
  %2869 = vmatpush.msra.mxu0 0.0
  %2870 = vmatpush.msra.mxu0 0.0
  %2871 = vmatpush.msra.mxu0 0.0
  %2872 = vmatpush.msra.mxu0 %v1978
  %2873 = vmatpush.msra.mxu0 %v1977
  %2874 = vmatpush.msra.mxu0 %v1976
  %2875 = vmatpush.msra.mxu0 %v1975
  %2876 = vmatmul.f32.gmra.mxu0 %v2753
  %v2877 = vpop.f32.mrf.mxu0
  %v2878 = vadd.f32 0.0, %v2877
  %2879 = vdwg.mxu0
  %v2880 = vadd.f32 %v2859, %v2878
  %v2881 = vxor.u32 %v2880, 2147483648
  %v2882 = vmul.f32 %v2881, 1.442695
  %v2883 = vpow.pop %v2882
  %v2884 = vadd.f32 %v2883, 1.0
  %v2885 = vrcp.pop %v2884
  %v2886 = vmul.f32 %v2884, %v2885
  %v2887 = vsub.f32 1.0, %v2886
  %v2888 = vmul.f32 %v2885, %v2887
  %v2889 = vadd.f32 %v2885, %v2888
  %vm2890 = vweird.f32 %v2884
  %vm2891 = vweird.f32 %v2885
  %vm2892 = vmor %vm2890, %vm2891
  %v2893 = vsel %vm2892, %v2885, %v2889
  %v2894 = vand.u32 2147483647, %v2884
  %vm2895 = vcmp.eq.f32.partialorder %v2894, 8.507059e+37
  %v2896 = vand.u32 %v2884, 2147483648
  %v2897 = vor.u32 1.1754944e-38, %v2896
  %v2898 = vsel %vm2895, %v2897, %v2893
  %v2899 = vmul.f32 1.0, %v2898
  %v2900 = vmul.f32 %v2835, %v2747
  %v2901 = vmul.f32 %v2794, %v2858
  %v2902 = vadd.f32 %v2900, %v2901
  %v2903 = vtanh.pop %v2902
  %v2904 = vmul.f32 %v2899, %v2903
  %2905 = vst.msk [vmem:[%s1320] sm:$0x3] %vm113, %v2904
  %v2906 = vld [vmem:[%s1322] sm:$0x3]
  %v2908 = vsel %vm367, %v2904, 0
  %2910 = vmatpush.msra.mxu0 0.0
  %2911 = vmatpush.msra.mxu0 0.0
  %2912 = vmatpush.msra.mxu0 0.0
  %2913 = vmatpush.msra.mxu0 0.0
  %2914 = vmatpush.msra.mxu0 0.0
  %2915 = vmatpush.msra.mxu0 0.0
  %2916 = vmatpush.msra.mxu0 0.0
  %2917 = vmatpush.msra.mxu0 0.0
  %2918 = vmatpush.msra.mxu0 0.0
  %2919 = vmatpush.msra.mxu0 0.0
  %2920 = vmatpush.msra.mxu0 0.0
  %2921 = vmatpush.msra.mxu0 0.0
  %2922 = vmatpush.msra.mxu0 %v1963
  %2923 = vmatpush.msra.mxu0 %v1962
  %2924 = vmatpush.msra.mxu0 %v1961
  %2925 = vmatpush.msra.mxu0 %v1960
  %2926 = vmatmul.f32.gmra.mxu0 %v2908
  %v2927 = vpop.f32.mrf.mxu0
  %v2928 = vadd.f32 0.0, %v2927
  %2929 = vdwg.mxu0
  %v2930 = vadd.f32 %v2906, %v2928
  %v2931 = vxor.u32 %v2930, 2147483648
  %v2932 = vmul.f32 %v2931, 1.442695
  %v2933 = vpow.pop %v2932
  %v2934 = vadd.f32 %v2933, 1.0
  %v2935 = vrcp.pop %v2934
  %v2936 = vmul.f32 %v2934, %v2935
  %v2937 = vsub.f32 1.0, %v2936
  %v2938 = vmul.f32 %v2935, %v2937
  %v2939 = vadd.f32 %v2935, %v2938
  %vm2940 = vweird.f32 %v2934
  %vm2941 = vweird.f32 %v2935
  %vm2942 = vmor %vm2940, %vm2941
  %v2943 = vsel %vm2942, %v2935, %v2939
  %v2944 = vand.u32 2147483647, %v2934
  %vm2945 = vcmp.eq.f32.partialorder %v2944, 8.507059e+37
  %v2946 = vand.u32 %v2934, 2147483648
  %v2947 = vor.u32 1.1754944e-38, %v2946
  %v2948 = vsel %vm2945, %v2947, %v2943
  %v2949 = vmul.f32 1.0, %v2948
  %v2950 = vld [vmem:[%s1367] sm:$0x3]
  %2951 = vmatpush.msra.mxu0 0.0
  %2952 = vmatpush.msra.mxu0 0.0
  %2953 = vmatpush.msra.mxu0 0.0
  %2954 = vmatpush.msra.mxu0 0.0
  %2955 = vmatpush.msra.mxu0 0.0
  %2956 = vmatpush.msra.mxu0 0.0
  %2957 = vmatpush.msra.mxu0 0.0
  %2958 = vmatpush.msra.mxu0 0.0
  %2959 = vmatpush.msra.mxu0 0.0
  %2960 = vmatpush.msra.mxu0 0.0
  %2961 = vmatpush.msra.mxu0 0.0
  %2962 = vmatpush.msra.mxu0 0.0
  %2963 = vmatpush.msra.mxu0 %v1968
  %2964 = vmatpush.msra.mxu0 %v1967
  %2965 = vmatpush.msra.mxu0 %v1966
  %2966 = vmatpush.msra.mxu0 %v1965
  %2967 = vmatmul.f32.gmra.mxu0 %v2908
  %v2968 = vpop.f32.mrf.mxu0
  %v2969 = vadd.f32 0.0, %v2968
  %2970 = vdwg.mxu0
  %v2971 = vadd.f32 %v2950, %v2969
  %v2972 = vxor.u32 %v2971, 2147483648
  %v2973 = vmul.f32 %v2972, 1.442695
  %v2974 = vpow.pop %v2973
  %v2975 = vadd.f32 %v2974, 1.0
  %v2976 = vrcp.pop %v2975
  %v2977 = vmul.f32 %v2975, %v2976
  %v2978 = vsub.f32 1.0, %v2977
  %v2979 = vmul.f32 %v2976, %v2978
  %v2980 = vadd.f32 %v2976, %v2979
  %vm2981 = vweird.f32 %v2975
  %vm2982 = vweird.f32 %v2976
  %vm2983 = vmor %vm2981, %vm2982
  %v2984 = vsel %vm2983, %v2976, %v2980
  %v2985 = vand.u32 2147483647, %v2975
  %vm2986 = vcmp.eq.f32.partialorder %v2985, 8.507059e+37
  %v2987 = vand.u32 %v2975, 2147483648
  %v2988 = vor.u32 1.1754944e-38, %v2987
  %v2989 = vsel %vm2986, %v2988, %v2984
  %v2990 = vmul.f32 1.0, %v2989
  %v2991 = vld [vmem:[%s1409] sm:$0x3]
  %2992 = vmatpush.msra.mxu0 0.0
  %2993 = vmatpush.msra.mxu0 0.0
  %2994 = vmatpush.msra.mxu0 0.0
  %2995 = vmatpush.msra.mxu0 0.0
  %2996 = vmatpush.msra.mxu0 0.0
  %2997 = vmatpush.msra.mxu0 0.0
  %2998 = vmatpush.msra.mxu0 0.0
  %2999 = vmatpush.msra.mxu0 0.0
  %3000 = vmatpush.msra.mxu0 0.0
  %3001 = vmatpush.msra.mxu0 0.0
  %3002 = vmatpush.msra.mxu0 0.0
  %3003 = vmatpush.msra.mxu0 0.0
  %3004 = vmatpush.msra.mxu0 %v1973
  %3005 = vmatpush.msra.mxu0 %v1972
  %3006 = vmatpush.msra.mxu0 %v1971
  %3007 = vmatpush.msra.mxu0 %v1970
  %3008 = vmatmul.f32.gmra.mxu0 %v2908
  %v3009 = vpop.f32.mrf.mxu0
  %v3010 = vadd.f32 0.0, %v3009
  %3011 = vdwg.mxu0
  %v3012 = vadd.f32 %v2991, %v3010
  %v3013 = vtanh.pop %v3012
  %v3014 = vld [vmem:[%s1433] sm:$0x3]
  %3015 = vmatpush.msra.mxu0 0.0
  %3016 = vmatpush.msra.mxu0 0.0
  %3017 = vmatpush.msra.mxu0 0.0
  %3018 = vmatpush.msra.mxu0 0.0
  %3019 = vmatpush.msra.mxu0 0.0
  %3020 = vmatpush.msra.mxu0 0.0
  %3021 = vmatpush.msra.mxu0 0.0
  %3022 = vmatpush.msra.mxu0 0.0
  %3023 = vmatpush.msra.mxu0 0.0
  %3024 = vmatpush.msra.mxu0 0.0
  %3025 = vmatpush.msra.mxu0 0.0
  %3026 = vmatpush.msra.mxu0 0.0
  %3027 = vmatpush.msra.mxu0 %v1978
  %3028 = vmatpush.msra.mxu0 %v1977
  %3029 = vmatpush.msra.mxu0 %v1976
  %3030 = vmatpush.msra.mxu0 %v1975
  %3031 = vmatmul.f32.gmra.mxu0 %v2908
  %v3032 = vpop.f32.mrf.mxu0
  %v3033 = vadd.f32 0.0, %v3032
  %3034 = vdwg.mxu0
  %v3035 = vadd.f32 %v3014, %v3033
  %v3036 = vxor.u32 %v3035, 2147483648
  %v3037 = vmul.f32 %v3036, 1.442695
  %v3038 = vpow.pop %v3037
  %v3039 = vadd.f32 %v3038, 1.0
  %v3040 = vrcp.pop %v3039
  %v3041 = vmul.f32 %v3039, %v3040
  %v3042 = vsub.f32 1.0, %v3041
  %v3043 = vmul.f32 %v3040, %v3042
  %v3044 = vadd.f32 %v3040, %v3043
  %vm3045 = vweird.f32 %v3039
  %vm3046 = vweird.f32 %v3040
  %vm3047 = vmor %vm3045, %vm3046
  %v3048 = vsel %vm3047, %v3040, %v3044
  %v3049 = vand.u32 2147483647, %v3039
  %vm3050 = vcmp.eq.f32.partialorder %v3049, 8.507059e+37
  %v3051 = vand.u32 %v3039, 2147483648
  %v3052 = vor.u32 1.1754944e-38, %v3051
  %v3053 = vsel %vm3050, %v3052, %v3048
  %v3054 = vmul.f32 1.0, %v3053
  %v3055 = vmul.f32 %v2990, %v2902
  %v3056 = vmul.f32 %v2949, %v3013
  %v3057 = vadd.f32 %v3055, %v3056
  %v3058 = vtanh.pop %v3057
  %v3059 = vmul.f32 %v3054, %v3058
  %3060 = vst.msk [vmem:[%s1480] sm:$0x3] %vm113, %v3059
  %v3061 = vld [vmem:[%s1482] sm:$0x3]
  %v3063 = vsel %vm367, %v3059, 0
  %3065 = vmatpush.msra.mxu0 0.0
  %3066 = vmatpush.msra.mxu0 0.0
  %3067 = vmatpush.msra.mxu0 0.0
  %3068 = vmatpush.msra.mxu0 0.0
  %3069 = vmatpush.msra.mxu0 0.0
  %3070 = vmatpush.msra.mxu0 0.0
  %3071 = vmatpush.msra.mxu0 0.0
  %3072 = vmatpush.msra.mxu0 0.0
  %3073 = vmatpush.msra.mxu0 0.0
  %3074 = vmatpush.msra.mxu0 0.0
  %3075 = vmatpush.msra.mxu0 0.0
  %3076 = vmatpush.msra.mxu0 0.0
  %3077 = vmatpush.msra.mxu0 %v1963
  %3078 = vmatpush.msra.mxu0 %v1962
  %3079 = vmatpush.msra.mxu0 %v1961
  %3080 = vmatpush.msra.mxu0 %v1960
  %3081 = vmatmul.f32.gmra.mxu0 %v3063
  %v3082 = vpop.f32.mrf.mxu0
  %v3083 = vadd.f32 0.0, %v3082
  %3084 = vdwg.mxu0
  %v3085 = vadd.f32 %v3061, %v3083
  %v3086 = vxor.u32 %v3085, 2147483648
  %v3087 = vmul.f32 %v3086, 1.442695
  %v3088 = vpow.pop %v3087
  %v3089 = vadd.f32 %v3088, 1.0
  %v3090 = vrcp.pop %v3089
  %v3091 = vmul.f32 %v3089, %v3090
  %v3092 = vsub.f32 1.0, %v3091
  %v3093 = vmul.f32 %v3090, %v3092
  %v3094 = vadd.f32 %v3090, %v3093
  %vm3095 = vweird.f32 %v3089
  %vm3096 = vweird.f32 %v3090
  %vm3097 = vmor %vm3095, %vm3096
  %v3098 = vsel %vm3097, %v3090, %v3094
  %v3099 = vand.u32 2147483647, %v3089
  %vm3100 = vcmp.eq.f32.partialorder %v3099, 8.507059e+37
  %v3101 = vand.u32 %v3089, 2147483648
  %v3102 = vor.u32 1.1754944e-38, %v3101
  %v3103 = vsel %vm3100, %v3102, %v3098
  %v3104 = vmul.f32 1.0, %v3103
  %v3105 = vld [vmem:[%s1527] sm:$0x3]
  %3106 = vmatpush.msra.mxu0 0.0
  %3107 = vmatpush.msra.mxu0 0.0
  %3108 = vmatpush.msra.mxu0 0.0
  %3109 = vmatpush.msra.mxu0 0.0
  %3110 = vmatpush.msra.mxu0 0.0
  %3111 = vmatpush.msra.mxu0 0.0
  %3112 = vmatpush.msra.mxu0 0.0
  %3113 = vmatpush.msra.mxu0 0.0
  %3114 = vmatpush.msra.mxu0 0.0
  %3115 = vmatpush.msra.mxu0 0.0
  %3116 = vmatpush.msra.mxu0 0.0
  %3117 = vmatpush.msra.mxu0 0.0
  %3118 = vmatpush.msra.mxu0 %v1968
  %3119 = vmatpush.msra.mxu0 %v1967
  %3120 = vmatpush.msra.mxu0 %v1966
  %3121 = vmatpush.msra.mxu0 %v1965
  %3122 = vmatmul.f32.gmra.mxu0 %v3063
  %v3123 = vpop.f32.mrf.mxu0
  %v3124 = vadd.f32 0.0, %v3123
  %3125 = vdwg.mxu0
  %v3126 = vadd.f32 %v3105, %v3124
  %v3127 = vxor.u32 %v3126, 2147483648
  %v3128 = vmul.f32 %v3127, 1.442695
  %v3129 = vpow.pop %v3128
  %v3130 = vadd.f32 %v3129, 1.0
  %v3131 = vrcp.pop %v3130
  %v3132 = vmul.f32 %v3130, %v3131
  %v3133 = vsub.f32 1.0, %v3132
  %v3134 = vmul.f32 %v3131, %v3133
  %v3135 = vadd.f32 %v3131, %v3134
  %vm3136 = vweird.f32 %v3130
  %vm3137 = vweird.f32 %v3131
  %vm3138 = vmor %vm3136, %vm3137
  %v3139 = vsel %vm3138, %v3131, %v3135
  %v3140 = vand.u32 2147483647, %v3130
  %vm3141 = vcmp.eq.f32.partialorder %v3140, 8.507059e+37
  %v3142 = vand.u32 %v3130, 2147483648
  %v3143 = vor.u32 1.1754944e-38, %v3142
  %v3144 = vsel %vm3141, %v3143, %v3139
  %v3145 = vmul.f32 1.0, %v3144
  %v3146 = vld [vmem:[%s1569] sm:$0x3]
  %3147 = vmatpush.msra.mxu0 0.0
  %3148 = vmatpush.msra.mxu0 0.0
  %3149 = vmatpush.msra.mxu0 0.0
  %3150 = vmatpush.msra.mxu0 0.0
  %3151 = vmatpush.msra.mxu0 0.0
  %3152 = vmatpush.msra.mxu0 0.0
  %3153 = vmatpush.msra.mxu0 0.0
  %3154 = vmatpush.msra.mxu0 0.0
  %3155 = vmatpush.msra.mxu0 0.0
  %3156 = vmatpush.msra.mxu0 0.0
  %3157 = vmatpush.msra.mxu0 0.0
  %3158 = vmatpush.msra.mxu0 0.0
  %3159 = vmatpush.msra.mxu0 %v1973
  %3160 = vmatpush.msra.mxu0 %v1972
  %3161 = vmatpush.msra.mxu0 %v1971
  %3162 = vmatpush.msra.mxu0 %v1970
  %3163 = vmatmul.f32.gmra.mxu0 %v3063
  %v3164 = vpop.f32.mrf.mxu0
  %v3165 = vadd.f32 0.0, %v3164
  %3166 = vdwg.mxu0
  %v3167 = vadd.f32 %v3146, %v3165
  %v3168 = vtanh.pop %v3167
  %v3169 = vld [vmem:[%s1593] sm:$0x3]
  %3170 = vmatpush.msra.mxu0 0.0
  %3171 = vmatpush.msra.mxu0 0.0
  %3172 = vmatpush.msra.mxu0 0.0
  %3173 = vmatpush.msra.mxu0 0.0
  %3174 = vmatpush.msra.mxu0 0.0
  %3175 = vmatpush.msra.mxu0 0.0
  %3176 = vmatpush.msra.mxu0 0.0
  %3177 = vmatpush.msra.mxu0 0.0
  %3178 = vmatpush.msra.mxu0 0.0
  %3179 = vmatpush.msra.mxu0 0.0
  %3180 = vmatpush.msra.mxu0 0.0
  %3181 = vmatpush.msra.mxu0 0.0
  %3182 = vmatpush.msra.mxu0 %v1978
  %3183 = vmatpush.msra.mxu0 %v1977
  %3184 = vmatpush.msra.mxu0 %v1976
  %3185 = vmatpush.msra.mxu0 %v1975
  %3186 = vmatmul.f32.gmra.mxu0 %v3063
  %v3187 = vpop.f32.mrf.mxu0
  %v3188 = vadd.f32 0.0, %v3187
  %3189 = vdwg.mxu0
  %v3190 = vadd.f32 %v3169, %v3188
  %v3191 = vxor.u32 %v3190, 2147483648
  %v3192 = vmul.f32 %v3191, 1.442695
  %v3193 = vpow.pop %v3192
  %v3194 = vadd.f32 %v3193, 1.0
  %v3195 = vrcp.pop %v3194
  %v3196 = vmul.f32 %v3194, %v3195
  %v3197 = vsub.f32 1.0, %v3196
  %v3198 = vmul.f32 %v3195, %v3197
  %v3199 = vadd.f32 %v3195, %v3198
  %vm3200 = vweird.f32 %v3194
  %vm3201 = vweird.f32 %v3195
  %vm3202 = vmor %vm3200, %vm3201
  %v3203 = vsel %vm3202, %v3195, %v3199
  %v3204 = vand.u32 2147483647, %v3194
  %vm3205 = vcmp.eq.f32.partialorder %v3204, 8.507059e+37
  %v3206 = vand.u32 %v3194, 2147483648
  %v3207 = vor.u32 1.1754944e-38, %v3206
  %v3208 = vsel %vm3205, %v3207, %v3203
  %v3209 = vmul.f32 1.0, %v3208
  %v3210 = vmul.f32 %v3145, %v3057
  %v3211 = vmul.f32 %v3104, %v3168
  %v3212 = vadd.f32 %v3210, %v3211
  %v3213 = vtanh.pop %v3212
  %v3214 = vmul.f32 %v3209, %v3213
  %3215 = vst.msk [vmem:[%s1640] sm:$0x3] %vm113, %v3214
  %v3216 = vld [vmem:[#allocation3] sm:$0x3]
  %v3217 = vld [vmem:[#allocation3 + $0x2] sm:$0x3]
  %v3218 = vld [vmem:[#allocation3 + $0x4] sm:$0x3]
  %v3219 = vld [vmem:[#allocation3 + $0x6] sm:$0x3]
  %v3220 = vld [vmem:[#allocation3 + $0x8] sm:$0x3]
  %v3221 = vld [vmem:[#allocation3 + $0xa] sm:$0x3]
  %v3222 = vld [vmem:[#allocation3 + $0xc] sm:$0x3]
  %v3223 = vld [vmem:[#allocation3 + $0xe] sm:$0x3]
  %v3224 = vld [vmem:[%s7] sm:$0xff]
  %v3225 = vld [vmem:[%s7 + $0x8] sm:$0xff]
  %v3226 = vld [vmem:[%s7 + $0x10] sm:$0xff]
  %v3227 = vld [vmem:[%s7 + $0x18] sm:$0xff]
  %v3228 = vld [vmem:[%s8] sm:$0x1]
  %v3230 = vperm.slane %v3228, 0
  %3240 = vst [vmem:[#allocation1] ss:$4 sm:$0xff] %v3216
  %s3241 = scalar_lea.vmem [#allocation1], 1
  %3242 = vst [vmem:[%s3241] ss:$4 sm:$0xff] %v3217
  %s3243 = scalar_lea.vmem [#allocation1], 2
  %3244 = vst [vmem:[%s3243] ss:$4 sm:$0xff] %v3218
  %s3245 = scalar_lea.vmem [#allocation1], 3
  %3246 = vst [vmem:[%s3245] ss:$4 sm:$0xff] %v3219
  %s3247 = scalar_lea.vmem [#allocation1], 32
  %3248 = vst [vmem:[%s3247] ss:$4 sm:$0xff] %v3220
  %s3249 = scalar_lea.vmem [#allocation1], 33
  %3250 = vst [vmem:[%s3249] ss:$4 sm:$0xff] %v3221
  %s3251 = scalar_lea.vmem [#allocation1], 34
  %3252 = vst [vmem:[%s3251] ss:$4 sm:$0xff] %v3222
  %s3253 = scalar_lea.vmem [#allocation1], 35
  %3254 = vst [vmem:[%s3253] ss:$4 sm:$0xff] %v3223
  %v3255 = vld.sshfl [vmem:[#allocation1] sm:$0xff pattern:$0x73625140]
  %v3256 = vld.sshfl [vmem:[#allocation1 + $0x20] sm:$0xff pattern:$0x73625140]
  %v3257 = vsel %vm367, %v3255, 0
  %v3259 = vsel %vm367, %v3256, 0
  %3261 = vmatpush.msra.mxu0 0.0
  %3262 = vmatpush.msra.mxu0 0.0
  %3263 = vmatpush.msra.mxu0 0.0
  %3264 = vmatpush.msra.mxu0 0.0
  %3265 = vmatpush.msra.mxu0 0.0
  %3266 = vmatpush.msra.mxu0 0.0
  %3267 = vmatpush.msra.mxu0 0.0
  %3268 = vmatpush.msra.mxu0 0.0
  %3269 = vmatpush.msra.mxu0 0.0
  %3270 = vmatpush.msra.mxu0 0.0
  %3271 = vmatpush.msra.mxu0 0.0
  %3272 = vmatpush.msra.mxu0 0.0
  %3273 = vmatpush.msra.mxu0 %v3227
  %3274 = vmatpush.msra.mxu0 %v3226
  %3275 = vmatpush.msra.mxu0 %v3225
  %3276 = vmatpush.msra.mxu0 %v3224
  %3277 = vmatmul.f32.gmra.mxu0 %v3257
  %v3278 = vpop.f32.mrf.mxu0
  %v3279 = vadd.f32 %v3230, %v3278
  %3280 = vmatmul.f32.gmra.mxu0 %v3259
  %v3281 = vpop.f32.mrf.mxu0
  %v3282 = vadd.f32 %v3230, %v3281
  %3283 = vdwg.mxu0
  %v3286 = vrot.slane %v3279, 2
  %v3287 = vrot.slane %v3279, 4
  %v3288 = vrot.slane %v3279, 6
  %v3289 = vrot.slane %v3282, 2
  %v3290 = vrot.slane %v3282, 4
  %v3291 = vrot.slane %v3282, 6
  %vm3298 = vcmask 25600
  %v3299 = vsel %vm3298, %v3279, -inf
  %v3300 = vsel %vm3298, %v3286, -inf
  %v3301 = vsel %vm3298, %v3287, -inf
  %v3302 = vsel %vm3298, %v3288, -inf
  %v3303 = vsel %vm3298, %v3282, -inf
  %v3304 = vmax.f32 %v3299, %v3303
  %v3305 = vsel %vm3298, %v3289, -inf
  %v3306 = vmax.f32 %v3300, %v3305
  %v3307 = vsel %vm3298, %v3290, -inf
  %v3308 = vmax.f32 %v3301, %v3307
  %v3309 = vsel %vm3298, %v3291, -inf
  %v3310 = vmax.f32 %v3302, %v3309
  %v3311 = vmax.f32 %v3304, %v3306
  %v3312 = vmax.f32 %v3308, %v3310
  %v3313 = vmax.f32 %v3311, %v3312
  %v3314 = vsub.f32 %v3279, %v3313
  %v3315 = vsub.f32 %v3286, %v3313
  %v3316 = vsub.f32 %v3287, %v3313
  %v3317 = vsub.f32 %v3288, %v3313
  %v3318 = vsub.f32 %v3282, %v3313
  %v3319 = vsub.f32 %v3289, %v3313
  %v3320 = vsub.f32 %v3290, %v3313
  %v3321 = vsub.f32 %v3291, %v3313
  %v3322 = vmul.f32 %v3314, 1.442695
  %v3323 = vpow.pop %v3322
  %v3324 = vmul.f32 %v3315, 1.442695
  %v3325 = vpow.pop %v3324
  %v3326 = vmul.f32 %v3316, 1.442695
  %v3327 = vpow.pop %v3326
  %v3328 = vmul.f32 %v3317, 1.442695
  %v3329 = vpow.pop %v3328
  %v3330 = vmul.f32 %v3318, 1.442695
  %v3331 = vpow.pop %v3330
  %v3332 = vmul.f32 %v3319, 1.442695
  %v3333 = vpow.pop %v3332
  %v3334 = vmul.f32 %v3320, 1.442695
  %v3335 = vpow.pop %v3334
  %v3336 = vmul.f32 %v3321, 1.442695
  %v3337 = vpow.pop %v3336
  %v3338 = vsel %vm3298, %v3323, 0.0
  %v3339 = vsel %vm3298, %v3325, 0.0
  %v3340 = vadd.f32 %v3338, %v3339
  %v3341 = vsel %vm3298, %v3327, 0.0
  %v3342 = vadd.f32 %v3340, %v3341
  %v3343 = vsel %vm3298, %v3329, 0.0
  %v3344 = vadd.f32 %v3342, %v3343
  %v3345 = vsel %vm3298, %v3331, 0.0
  %v3346 = vadd.f32 %v3344, %v3345
  %v3347 = vsel %vm3298, %v3333, 0.0
  %v3348 = vadd.f32 %v3346, %v3347
  %v3349 = vsel %vm3298, %v3335, 0.0
  %v3350 = vadd.f32 %v3348, %v3349
  %v3351 = vsel %vm3298, %v3337, 0.0
  %v3352 = vadd.f32 %v3350, %v3351
  %v3353 = vrcp.pop %v3352
  %v3354 = vmul.f32 %v3352, %v3353
  %v3355 = vsub.f32 1.0, %v3354
  %v3356 = vmul.f32 %v3353, %v3355
  %v3357 = vadd.f32 %v3353, %v3356
  %vm3358 = vweird.f32 %v3352
  %vm3359 = vweird.f32 %v3353
  %vm3360 = vmor %vm3358, %vm3359
  %v3361 = vsel %vm3360, %v3353, %v3357
  %v3362 = vand.u32 2147483647, %v3352
  %vm3363 = vcmp.eq.f32.partialorder %v3362, 8.507059e+37
  %v3364 = vand.u32 %v3352, 2147483648
  %v3365 = vor.u32 1.1754944e-38, %v3364
  %v3366 = vsel %vm3363, %v3365, %v3361
  %v3367 = vmul.f32 1.0, %v3366
  %v3368 = vmul.f32 %v3323, %v3367
  %v3369 = vmul.f32 %v3325, %v3367
  %v3370 = vmul.f32 %v3327, %v3367
  %v3371 = vmul.f32 %v3329, %v3367
  %v3372 = vmul.f32 %v3331, %v3367
  %v3373 = vmul.f32 %v3333, %v3367
  %v3374 = vmul.f32 %v3335, %v3367
  %v3375 = vmul.f32 %v3337, %v3367
  %3376 = vst.msk [vmem:[%s9] sm:$0x3] %vm3298, %v3368
  %3377 = vst.msk [vmem:[%s9 + $0x2] sm:$0x3] %vm3298, %v3369
  %3378 = vst.msk [vmem:[%s9 + $0x4] sm:$0x3] %vm3298, %v3370
  %3379 = vst.msk [vmem:[%s9 + $0x6] sm:$0x3] %vm3298, %v3371
  %3380 = vst.msk [vmem:[%s9 + $0x8] sm:$0x3] %vm3298, %v3372
  %3381 = vst.msk [vmem:[%s9 + $0xa] sm:$0x3] %vm3298, %v3373
  %3382 = vst.msk [vmem:[%s9 + $0xc] sm:$0x3] %vm3298, %v3374
  %3383 = vst.msk [vmem:[%s9 + $0xe] sm:$0x3] %vm3298, %v3375
  // Predicated region
  $region38: #{lstm_classifier_forward.1} parent=0 // pred_check
    _
  $region39: #{lstm_classifier_forward.1} parent=0 // pred_check_branch
    %3385 = sbr.rel (0) target = $region41
  $region40: #{lstm_classifier_forward.1} parent=0 // pred_region
    _
  $region41: #{lstm_classifier_forward.1} parent=0 // pred_fallthru
    _
  // Predicated region
  $region42: #{lstm_classifier_forward.1} parent=0 // pred_check
    _
  $region43: #{lstm_classifier_forward.1} parent=0 // pred_check_branch
    %3387 = sbr.rel (0) target = $region45
  $region44: #{lstm_classifier_forward.1} parent=0 // pred_region
    _
  $region45: #{lstm_classifier_forward.1} parent=0 // pred_fallthru
    _

</llo_original>
